<compile_context>
chip_gen: v7x
topology: tpu7x:2x2x1
jax: 0.10.0
libtpu: 0.0.40
codegen_flags: <defaults>
</compile_context>

<pallas_src>
import functools

import jax
import jax.numpy as jnp
from jax import lax
from jax.experimental import pallas as pl
from jax.experimental.pallas import tpu as pltpu


# ------------------------------------------------------------------
# Fused BasicBlock kernel (single grid step).
#   x_ref    : (C, B*HW)    input, channel-major, batch folded into the lane axis
#   mask_ref : (9, B*HW)    precomputed zero-padding validity mask per 3x3 tap
#   w1_ref   : (C, 9*C+1)   conv1 weights with BN1 scale folded in + bias column
#   w2_ref   : (C, 9*C+1)   conv2 weights with BN2 scale folded in + bias column
#   out_ref  : (C, B*HW)
# ------------------------------------------------------------------
def _basic_block_kernel(x_ref, mask_ref, w1_ref, w2_ref, out_ref, *, H, W, B):
    HW = H * W
    BHW = B * HW

    x = x_ref[...]            # (C, BHW)
    mask = mask_ref[...]      # (9, BHW), f32 {0,1}
    ones_row = jnp.ones((1, BHW), jnp.float32)   # hoisted: bias contraction row

    def conv_bn(inp, w_mat):
        # 9 spatially shifted, zero-padded copies of `inp` via XLU rolls + host masks,
        # stacked along the contraction axis together with a ones row (bias), then one
        # wide MXU matmul against the BN-folded weight matrix.
        taps = []
        for kh in range(3):
            for kw in range(3):
                dy, dx = kh - 1, kw - 1
                t = kh * 3 + kw
                if dy == 0 and dx == 0:                    # center tap == identity
                    taps.append(inp)
                    continue
                # result[l] = inp[l + dy*W + dx]; wrap-around / out-of-image killed by mask
                shift = (-(dy * W + dx)) % BHW
                shifted = pltpu.roll(inp, shift, 1)
                taps.append(shifted * mask[t:t + 1, :])
        taps.append(ones_row)                              # bias row (K = 9*C + 1)
        patches = jnp.concatenate(taps, axis=0)            # (9*C+1, BHW)
        # HIGHEST precision: MXU is nearly idle at these shapes, so the multi-pass bf16
        # dot is free and gives f32-level accuracy.
        return jnp.dot(w_mat, patches,
                       preferred_element_type=jnp.float32,
                       precision=lax.Precision.HIGHEST)

    out1 = jnp.maximum(conv_bn(x, w1_ref[...]), 0.0)       # conv1 + bn1 + relu
    out2 = conv_bn(out1, w2_ref[...])                      # conv2 + bn2
    out_ref[...] = jnp.maximum(out2 + x, 0.0)              # + identity, relu


# ------------------------------------------------------------------
# Host-side wrapper: fold BN into conv weights + bias column, build the tap
# validity masks, reshape to channel-major with batch on the lane axis, and
# launch a single fused kernel.
# ------------------------------------------------------------------
def _fold_bn(w, gamma, beta, mean, var, eps=1e-5):
    scale = gamma / jnp.sqrt(var + eps)                    # (C,)
    w_eff = w * scale[:, None, None, None]                 # (C, C, 3, 3)
    b_eff = beta - mean * scale                            # (C,)
    return w_eff, b_eff


def basic_block_forward(x, w1, bn1, w2, bn2):
    B, C, H, W = x.shape
    HW = H * W
    BHW = B * HW
    K = 9 * C + 1

    # Fold BN scale into weights, append folded bias as an extra weight column.
    # Contraction index order is (kh, kw, c_in) then the bias row — matches the
    # in-kernel tap stacking.
    def pack_weight(w, bn):
        w_eff, b_eff = _fold_bn(w, *bn)
        w_mat = jnp.transpose(w_eff, (0, 2, 3, 1)).reshape(C, 9 * C)
        return jnp.concatenate([w_mat, b_eff[:, None]], axis=1)   # (C, 9*C+1)

    w1_mat = pack_weight(w1, bn1)
    w2_mat = pack_weight(w2, bn2)

    # Precomputed per-tap validity masks (zero padding / wrap-around kill), (9, B*HW).
    lane = jnp.arange(BHW, dtype=jnp.int32)
    p = lane % HW
    r, c = p // W, p % W
    rows = []
    for kh in range(3):
        for kw in range(3):
            dy, dx = kh - 1, kw - 1
            rows.append(((r + dy >= 0) & (r + dy < H) &
                         (c + dx >= 0) & (c + dx < W)).astype(jnp.float32))
    mask = jnp.stack(rows, axis=0)                         # (9, BHW)

    # Channel-major layout, batch folded into the lane axis: lane = b*HW + row*W + col.
    x_cm = jnp.transpose(x, (1, 0, 2, 3)).reshape(C, BHW)

    kernel = functools.partial(_basic_block_kernel, H=H, W=W, B=B)
    out = pl.pallas_call(
        kernel,
        out_shape=jax.ShapeDtypeStruct((C, BHW), jnp.float32),
        grid=(1,),                                          # single pipeline step
        in_specs=[pl.BlockSpec((C, BHW), lambda i: (0, 0)),  # x (channel-major)
                  pl.BlockSpec((9, BHW), lambda i: (0, 0)),  # tap masks
                  pl.BlockSpec((C, K), lambda i: (0, 0)),    # folded conv1 weight+bias
                  pl.BlockSpec((C, K), lambda i: (0, 0))],   # folded conv2 weight+bias
        out_specs=pl.BlockSpec((C, BHW), lambda i: (0, 0)),
    )(x_cm, mask, w1_mat, w2_mat)

    return jnp.transpose(out.reshape(C, B, H, W), (1, 0, 2, 3))


# ------------------------------------------------------------------
# Pure-JAX reference (f32 HIGHEST precision) for the self-check.
# ------------------------------------------------------------------
def basic_block_reference(x, w1, bn1, w2, bn2, eps=1e-5):
    def conv(h, w):
        return lax.conv_general_dilated(
            h, w, window_strides=(1, 1), padding=[(1, 1), (1, 1)],
            dimension_numbers=('NCHW', 'OIHW', 'NCHW'),
            precision=lax.Precision.HIGHEST)

    def bn(h, params):
        g, b, m, v = params
        return ((h - m[None, :, None, None]) /
                jnp.sqrt(v[None, :, None, None] + eps) *
                g[None, :, None, None] + b[None, :, None, None])

    out = jax.nn.relu(bn(conv(x, w1), bn1))
    out = bn(conv(out, w2), bn2)
    return jax.nn.relu(out + x)


if __name__ == "__main__":
    key = jax.random.PRNGKey(0)
    ks = jax.random.split(key, 11)

    B, C, H, W = 2, 8, 16, 16           # inplanes == planes, stride=1, downsample=None
    x = jax.random.normal(ks[0], (B, C, H, W), jnp.float32)

    # Small deterministic random parameters so every term of the math is exercised
    # (fresh nn.BatchNorm2d defaults would make BN nearly an identity).
    w1 = 0.05 * jax.random.normal(ks[1], (C, C, 3, 3), jnp.float32)
    w2 = 0.05 * jax.random.normal(ks[2], (C, C, 3, 3), jnp.float32)
    bn1 = (1.0 + 0.1 * jax.random.normal(ks[3], (C,), jnp.float32),   # gamma
           0.1 * jax.random.normal(ks[4], (C,), jnp.float32),         # beta
           0.1 * jax.random.normal(ks[5], (C,), jnp.float32),         # running_mean
           0.5 + jax.random.uniform(ks[6], (C,), jnp.float32))        # running_var
    bn2 = (1.0 + 0.1 * jax.random.normal(ks[7], (C,), jnp.float32),
           0.1 * jax.random.normal(ks[8], (C,), jnp.float32),
           0.1 * jax.random.normal(ks[9], (C,), jnp.float32),
           0.5 + jax.random.uniform(ks[10], (C,), jnp.float32))

    out = basic_block_forward(x, w1, bn1, w2, bn2)
    out = jax.block_until_ready(out)
    assert out.shape == (B, C, H, W)

    ref = basic_block_reference(x, w1, bn1, w2, bn2)
    max_err = float(jnp.max(jnp.abs(out - ref)))
    # HIGHEST-precision MXU dots -> tolerance tightened 50x vs. the previous 5e-2.
    assert jnp.allclose(out, ref, atol=1e-3, rtol=1e-3), f"mismatch, max abs err {max_err}"

    print("KERNEL_OK")
</pallas_src>

<mosaic_0001>
module attributes {stable_mosaic.version = 11 : i64} {
  func.func @_basic_block_kernel(%arg0: i32, %arg1: memref<8x512xf32, #tpu.memory_space<vmem>>, %arg2: memref<9x512xf32, #tpu.memory_space<vmem>>, %arg3: memref<8x73xf32, #tpu.memory_space<vmem>>, %arg4: memref<8x73xf32, #tpu.memory_space<vmem>>, %arg5: memref<8x512xf32, #tpu.memory_space<vmem>>) attributes {dimension_semantics = [#tpu.dimension_semantics<arbitrary>], iteration_bounds = array<i64: 1>, scalar_prefetch = 0 : i64, scratch_operands = 0 : i64, tpu.core_type = #tpu.core_type<tc>, window_params = [{pipeline_mode = #tpu.pipeline_mode<synchronous>, transform_indices = @transform_0, window_bounds = array<i64: 8, 512>}, {pipeline_mode = #tpu.pipeline_mode<synchronous>, transform_indices = @transform_1, window_bounds = array<i64: 9, 512>}, {pipeline_mode = #tpu.pipeline_mode<synchronous>, transform_indices = @transform_2, window_bounds = array<i64: 8, 73>}, {pipeline_mode = #tpu.pipeline_mode<synchronous>, transform_indices = @transform_3, window_bounds = array<i64: 8, 73>}, {pipeline_mode = #tpu.pipeline_mode<synchronous>, transform_indices = @transform_4, window_bounds = array<i64: 8, 512>}]} {
    %c0 = arith.constant 0 : index
    %c0_0 = arith.constant 0 : index
    %0 = vector.load %arg1[%c0, %c0_0] : memref<8x512xf32, #tpu.memory_space<vmem>>, vector<8x512xf32>
    %c0_1 = arith.constant 0 : index
    %c0_2 = arith.constant 0 : index
    %1 = vector.load %arg2[%c0_1, %c0_2] : memref<9x512xf32, #tpu.memory_space<vmem>>, vector<9x512xf32>
    %cst = arith.constant 1.000000e+00 : f32
    %2 = vector.broadcast %cst : f32 to vector<1x512xf32>
    %c0_3 = arith.constant 0 : index
    %c0_4 = arith.constant 0 : index
    %3 = vector.load %arg3[%c0_3, %c0_4] : memref<8x73xf32, #tpu.memory_space<vmem>>, vector<8x73xf32>
    %c17_i32 = arith.constant 17 : i32
    %4 = tpu.dynamic_rotate %0 by %c17_i32 dim 1 : vector<8x512xf32>, i32 -> vector<8x512xf32>
    %5 = vector.extract_strided_slice %1 {offsets = [0, 0], sizes = [1, 512], strides = [1, 1]} : vector<9x512xf32> to vector<1x512xf32>
    %6 = vector.broadcast %5 : vector<1x512xf32> to vector<8x512xf32>
    %7 = arith.mulf %4, %6 : vector<8x512xf32>
    %c16_i32 = arith.constant 16 : i32
    %8 = tpu.dynamic_rotate %0 by %c16_i32 dim 1 : vector<8x512xf32>, i32 -> vector<8x512xf32>
    %9 = vector.extract_strided_slice %1 {offsets = [1, 0], sizes = [1, 512], strides = [1, 1]} : vector<9x512xf32> to vector<1x512xf32>
    %10 = vector.broadcast %9 : vector<1x512xf32> to vector<8x512xf32>
    %11 = arith.mulf %8, %10 : vector<8x512xf32>
    %c15_i32 = arith.constant 15 : i32
    %12 = tpu.dynamic_rotate %0 by %c15_i32 dim 1 : vector<8x512xf32>, i32 -> vector<8x512xf32>
    %13 = vector.extract_strided_slice %1 {offsets = [2, 0], sizes = [1, 512], strides = [1, 1]} : vector<9x512xf32> to vector<1x512xf32>
    %14 = vector.broadcast %13 : vector<1x512xf32> to vector<8x512xf32>
    %15 = arith.mulf %12, %14 : vector<8x512xf32>
    %c1_i32 = arith.constant 1 : i32
    %16 = tpu.dynamic_rotate %0 by %c1_i32 dim 1 : vector<8x512xf32>, i32 -> vector<8x512xf32>
    %17 = vector.extract_strided_slice %1 {offsets = [3, 0], sizes = [1, 512], strides = [1, 1]} : vector<9x512xf32> to vector<1x512xf32>
    %18 = vector.broadcast %17 : vector<1x512xf32> to vector<8x512xf32>
    %19 = arith.mulf %16, %18 : vector<8x512xf32>
    %c511_i32 = arith.constant 511 : i32
    %20 = tpu.dynamic_rotate %0 by %c511_i32 dim 1 : vector<8x512xf32>, i32 -> vector<8x512xf32>
    %21 = vector.extract_strided_slice %1 {offsets = [5, 0], sizes = [1, 512], strides = [1, 1]} : vector<9x512xf32> to vector<1x512xf32>
    %22 = vector.broadcast %21 : vector<1x512xf32> to vector<8x512xf32>
    %23 = arith.mulf %20, %22 : vector<8x512xf32>
    %c497_i32 = arith.constant 497 : i32
    %24 = tpu.dynamic_rotate %0 by %c497_i32 dim 1 : vector<8x512xf32>, i32 -> vector<8x512xf32>
    %25 = vector.extract_strided_slice %1 {offsets = [6, 0], sizes = [1, 512], strides = [1, 1]} : vector<9x512xf32> to vector<1x512xf32>
    %26 = vector.broadcast %25 : vector<1x512xf32> to vector<8x512xf32>
    %27 = arith.mulf %24, %26 : vector<8x512xf32>
    %c496_i32 = arith.constant 496 : i32
    %28 = tpu.dynamic_rotate %0 by %c496_i32 dim 1 : vector<8x512xf32>, i32 -> vector<8x512xf32>
    %29 = vector.extract_strided_slice %1 {offsets = [7, 0], sizes = [1, 512], strides = [1, 1]} : vector<9x512xf32> to vector<1x512xf32>
    %30 = vector.broadcast %29 : vector<1x512xf32> to vector<8x512xf32>
    %31 = arith.mulf %28, %30 : vector<8x512xf32>
    %c495_i32 = arith.constant 495 : i32
    %32 = tpu.dynamic_rotate %0 by %c495_i32 dim 1 : vector<8x512xf32>, i32 -> vector<8x512xf32>
    %33 = vector.extract_strided_slice %1 {offsets = [8, 0], sizes = [1, 512], strides = [1, 1]} : vector<9x512xf32> to vector<1x512xf32>
    %34 = vector.broadcast %33 : vector<1x512xf32> to vector<8x512xf32>
    %35 = arith.mulf %32, %34 : vector<8x512xf32>
    %36 = tpu.concatenate %7, %11, %15, %19, %0, %23, %27, %31, %35, %2 in 0 : vector<8x512xf32>, vector<8x512xf32>, vector<8x512xf32>, vector<8x512xf32>, vector<8x512xf32>, vector<8x512xf32>, vector<8x512xf32>, vector<8x512xf32>, vector<8x512xf32>, vector<1x512xf32> -> vector<73x512xf32>
    %cst_5 = arith.constant dense<0.000000e+00> : vector<8x512xf32>
    %37 = tpu.matmul %3, %36, %cst_5 {dimension_numbers = #tpu.dot_dimension_numbers<[1], [0], [0], [1], [0, 0, 1, 1], [], []>, precision = #tpu.contract_precision<fp32>} : vector<8x73xf32>, vector<73x512xf32>, vector<8x512xf32> -> vector<8x512xf32>
    %cst_6 = arith.constant 0.000000e+00 : f32
    %38 = vector.broadcast %cst_6 : f32 to vector<8x512xf32>
    %39 = arith.maximumf %37, %38 : vector<8x512xf32>
    %c0_7 = arith.constant 0 : index
    %c0_8 = arith.constant 0 : index
    %40 = vector.load %arg4[%c0_7, %c0_8] : memref<8x73xf32, #tpu.memory_space<vmem>>, vector<8x73xf32>
    %c17_i32_9 = arith.constant 17 : i32
    %41 = tpu.dynamic_rotate %39 by %c17_i32_9 dim 1 : vector<8x512xf32>, i32 -> vector<8x512xf32>
    %42 = vector.extract_strided_slice %1 {offsets = [0, 0], sizes = [1, 512], strides = [1, 1]} : vector<9x512xf32> to vector<1x512xf32>
    %43 = vector.broadcast %42 : vector<1x512xf32> to vector<8x512xf32>
    %44 = arith.mulf %41, %43 : vector<8x512xf32>
    %c16_i32_10 = arith.constant 16 : i32
    %45 = tpu.dynamic_rotate %39 by %c16_i32_10 dim 1 : vector<8x512xf32>, i32 -> vector<8x512xf32>
    %46 = vector.extract_strided_slice %1 {offsets = [1, 0], sizes = [1, 512], strides = [1, 1]} : vector<9x512xf32> to vector<1x512xf32>
    %47 = vector.broadcast %46 : vector<1x512xf32> to vector<8x512xf32>
    %48 = arith.mulf %45, %47 : vector<8x512xf32>
    %c15_i32_11 = arith.constant 15 : i32
    %49 = tpu.dynamic_rotate %39 by %c15_i32_11 dim 1 : vector<8x512xf32>, i32 -> vector<8x512xf32>
    %50 = vector.extract_strided_slice %1 {offsets = [2, 0], sizes = [1, 512], strides = [1, 1]} : vector<9x512xf32> to vector<1x512xf32>
    %51 = vector.broadcast %50 : vector<1x512xf32> to vector<8x512xf32>
    %52 = arith.mulf %49, %51 : vector<8x512xf32>
    %c1_i32_12 = arith.constant 1 : i32
    %53 = tpu.dynamic_rotate %39 by %c1_i32_12 dim 1 : vector<8x512xf32>, i32 -> vector<8x512xf32>
    %54 = vector.extract_strided_slice %1 {offsets = [3, 0], sizes = [1, 512], strides = [1, 1]} : vector<9x512xf32> to vector<1x512xf32>
    %55 = vector.broadcast %54 : vector<1x512xf32> to vector<8x512xf32>
    %56 = arith.mulf %53, %55 : vector<8x512xf32>
    %c511_i32_13 = arith.constant 511 : i32
    %57 = tpu.dynamic_rotate %39 by %c511_i32_13 dim 1 : vector<8x512xf32>, i32 -> vector<8x512xf32>
    %58 = vector.extract_strided_slice %1 {offsets = [5, 0], sizes = [1, 512], strides = [1, 1]} : vector<9x512xf32> to vector<1x512xf32>
    %59 = vector.broadcast %58 : vector<1x512xf32> to vector<8x512xf32>
    %60 = arith.mulf %57, %59 : vector<8x512xf32>
    %c497_i32_14 = arith.constant 497 : i32
    %61 = tpu.dynamic_rotate %39 by %c497_i32_14 dim 1 : vector<8x512xf32>, i32 -> vector<8x512xf32>
    %62 = vector.extract_strided_slice %1 {offsets = [6, 0], sizes = [1, 512], strides = [1, 1]} : vector<9x512xf32> to vector<1x512xf32>
    %63 = vector.broadcast %62 : vector<1x512xf32> to vector<8x512xf32>
    %64 = arith.mulf %61, %63 : vector<8x512xf32>
    %c496_i32_15 = arith.constant 496 : i32
    %65 = tpu.dynamic_rotate %39 by %c496_i32_15 dim 1 : vector<8x512xf32>, i32 -> vector<8x512xf32>
    %66 = vector.extract_strided_slice %1 {offsets = [7, 0], sizes = [1, 512], strides = [1, 1]} : vector<9x512xf32> to vector<1x512xf32>
    %67 = vector.broadcast %66 : vector<1x512xf32> to vector<8x512xf32>
    %68 = arith.mulf %65, %67 : vector<8x512xf32>
    %c495_i32_16 = arith.constant 495 : i32
    %69 = tpu.dynamic_rotate %39 by %c495_i32_16 dim 1 : vector<8x512xf32>, i32 -> vector<8x512xf32>
    %70 = vector.extract_strided_slice %1 {offsets = [8, 0], sizes = [1, 512], strides = [1, 1]} : vector<9x512xf32> to vector<1x512xf32>
    %71 = vector.broadcast %70 : vector<1x512xf32> to vector<8x512xf32>
    %72 = arith.mulf %69, %71 : vector<8x512xf32>
    %73 = tpu.concatenate %44, %48, %52, %56, %39, %60, %64, %68, %72, %2 in 0 : vector<8x512xf32>, vector<8x512xf32>, vector<8x512xf32>, vector<8x512xf32>, vector<8x512xf32>, vector<8x512xf32>, vector<8x512xf32>, vector<8x512xf32>, vector<8x512xf32>, vector<1x512xf32> -> vector<73x512xf32>
    %cst_17 = arith.constant dense<0.000000e+00> : vector<8x512xf32>
    %74 = tpu.matmul %40, %73, %cst_17 {dimension_numbers = #tpu.dot_dimension_numbers<[1], [0], [0], [1], [0, 0, 1, 1], [], []>, precision = #tpu.contract_precision<fp32>} : vector<8x73xf32>, vector<73x512xf32>, vector<8x512xf32> -> vector<8x512xf32>
    %75 = arith.addf %74, %0 : vector<8x512xf32>
    %cst_18 = arith.constant 0.000000e+00 : f32
    %76 = vector.broadcast %cst_18 : f32 to vector<8x512xf32>
    %77 = arith.maximumf %75, %76 : vector<8x512xf32>
    %c0_19 = arith.constant 0 : index
    %c0_20 = arith.constant 0 : index
    %78 = vector.load %arg5[%c0_19, %c0_20] : memref<8x512xf32, #tpu.memory_space<vmem>>, vector<8x512xf32>
    tpu.vector_store %arg5[%c0_19, %c0_20], %77 {strides = array<i32>} : memref<8x512xf32, #tpu.memory_space<vmem>>, vector<8x512xf32>,
    return
  }
  func.func @transform_0(%arg0: i32) -> (i32, i32) {
    %c0_i32 = arith.constant 0 : i32
    %c0_i32_0 = arith.constant 0 : i32
    %c0_i32_1 = arith.constant 0 : i32
    return %c0_i32, %c0_i32_0 : i32, i32
  }
  func.func @transform_1(%arg0: i32) -> (i32, i32) {
    %c0_i32 = arith.constant 0 : i32
    %c0_i32_0 = arith.constant 0 : i32
    %c0_i32_1 = arith.constant 0 : i32
    return %c0_i32, %c0_i32_0 : i32, i32
  }
  func.func @transform_2(%arg0: i32) -> (i32, i32) {
    %c0_i32 = arith.constant 0 : i32
    %c0_i32_0 = arith.constant 0 : i32
    %c0_i32_1 = arith.constant 0 : i32
    return %c0_i32, %c0_i32_0 : i32, i32
  }
  func.func @transform_3(%arg0: i32) -> (i32, i32) {
    %c0_i32 = arith.constant 0 : i32
    %c0_i32_0 = arith.constant 0 : i32
    %c0_i32_1 = arith.constant 0 : i32
    return %c0_i32, %c0_i32_0 : i32, i32
  }
  func.func @transform_4(%arg0: i32) -> (i32, i32) {
    %c0_i32 = arith.constant 0 : i32
    %c0_i32_0 = arith.constant 0 : i32
    %c0_i32_1 = arith.constant 0 : i32
    return %c0_i32, %c0_i32_0 : i32, i32
  }
}

</mosaic_0001>

<llo_original>
// kernel: tpu_custom_call.1
$region0: #{tpu_custom_call.1}
  #allocation0 [shape = 'u32[]', space=smem, size = 0x4, offset = 0x4, fixed_abs, tag = 'smem constant byte address 0x4 - core index']
  #allocation1 [shape = 'u32[144,128]{1,0:T(1,128)}', space=vmem, size = 0x12000, scoped, tag = 'internal scratch']
  %s0 = inlined_call_operand.hbm [shape: f32[8,512], index: 0, kind: input, shape index: {}]
  %s1 = inlined_call_operand.hbm [shape: f32[9,512], index: 1, kind: input, shape index: {}]
  %s2 = inlined_call_operand.hbm [shape: f32[8,73], index: 2, kind: input, shape index: {}]
  %s3 = inlined_call_operand.vmem [shape: f32[8,73], index: 3, kind: input, shape index: {}]
  %s4 = inlined_call_operand.hbm [shape: f32[8,512], index: 4, kind: output, shape index: {}]
  %s5 = sld [smem:[#allocation0]]
  $region38: #{tpu_custom_call.1} parent=0
    _
  %s7 = ssub.s32 1, %s5
  %s8 = scalar_select 0, %s7, %s5
  $region1: #{tpu_custom_call.1} parent=0
    #allocation2 [shape = 'u8[16384]{0}', space=vmem, size = 0x4000, scoped, tag = 'input window, operand 0, single buffered']
    #allocation3 [shape = 's32[1]{0}', space=sflag, size = 0x4, scoped, tag = 'scoped memory for tpu_custom_call.1']
    #allocation4 [shape = 's32[1]{0}', space=sflag, size = 0x4, scoped, tag = 'scoped memory for tpu_custom_call.1']
    #allocation5 [shape = 'u8[32768]{0}', space=vmem, size = 0x8000, scoped, tag = 'input window, operand 1, single buffered']
    #allocation6 [shape = 's32[1]{0}', space=sflag, size = 0x4, scoped, tag = 'scoped memory for tpu_custom_call.1']
    #allocation7 [shape = 'u8[4096]{0}', space=vmem, size = 0x1000, scoped, tag = 'input window, operand 2, single buffered']
    #allocation8 [shape = 'u8[16384]{0}', space=vmem, size = 0x4000, scoped, tag = 'output window, operand 0, single buffered']
    %9 = vsyncpa [#allocation3], 0
    %10 = vsyncpa [#allocation6], 0
    %11 = vsyncpa [#allocation4], 0
    // Predicated region
    $region2: #{tpu_custom_call.1} parent=1 // pred_check
      _
    $region3: #{tpu_custom_call.1} parent=1 // pred_check_branch
      %13 = sbr.rel (0) target = $region5
    $region4: #{tpu_custom_call.1} parent=1 // pred_region
      %s15 = ssub.s32 512, 512
      %16 = vsyncadd [#allocation3], %s15
      %s18 = sshll.u32 [#allocation2], 4
      %s19 = int_to_ptr.vmem [resolvable:$true] %s18
      %21 = dma.hbm_to_vmem [thread:$0]  %s0, 512, %s19, [#allocation3]
    $region5: #{tpu_custom_call.1} parent=1 // pred_fallthru
      _
    // Predicated region
    $region6: #{tpu_custom_call.1} parent=1 // pred_check
      _
    $region7: #{tpu_custom_call.1} parent=1 // pred_check_branch
      %23 = sbr.rel (0) target = $region9
    $region8: #{tpu_custom_call.1} parent=1 // pred_region
      %s25 = ssub.s32 1024, 1024
      %26 = vsyncadd [#allocation6], %s25
      %s27 = sshll.u32 [#allocation5], 4
      %s28 = int_to_ptr.vmem [resolvable:$true] %s27
      %33 = dma.hbm_to_vmem [thread:$0]  %s1, 1024, %s28, [#allocation6], 512, 512, 32
    $region9: #{tpu_custom_call.1} parent=1 // pred_fallthru
      _
    // Predicated region
    $region10: #{tpu_custom_call.1} parent=1 // pred_check
      _
    $region11: #{tpu_custom_call.1} parent=1 // pred_check_branch
      %35 = sbr.rel (0) target = $region13
    $region12: #{tpu_custom_call.1} parent=1 // pred_region
      %s37 = ssub.s32 128, 128
      %38 = vsyncadd [#allocation6], %s37
      %s40 = sshll.u32 [#allocation7], 4
      %s41 = int_to_ptr.vmem [resolvable:$true] %s40
      %43 = dma.hbm_to_vmem [thread:$0]  %s2, 128, %s41, [#allocation6]
    $region13: #{tpu_custom_call.1} parent=1 // pred_fallthru
      _
    // Predicated region
    $region14: #{tpu_custom_call.1} parent=1 // pred_check
      _
    $region15: #{tpu_custom_call.1} parent=1 // pred_check_branch
      %45 = sbr.rel (0) target = $region17
    $region16: #{tpu_custom_call.1} parent=1 // pred_region
      _
    $region17: #{tpu_custom_call.1} parent=1 // pred_fallthru
      _
    // Predicated region
    $region18: #{tpu_custom_call.1} parent=1 // pred_check
      _
    $region19: #{tpu_custom_call.1} parent=1 // pred_check_branch
      %47 = sbr.rel (0) target = $region21
    $region20: #{tpu_custom_call.1} parent=1 // pred_region
      %48 = dma.done [#allocation3], 512
    $region21: #{tpu_custom_call.1} parent=1 // pred_fallthru
      _
    // Predicated region
    $region22: #{tpu_custom_call.1} parent=1 // pred_check
      _
    $region23: #{tpu_custom_call.1} parent=1 // pred_check_branch
      %50 = sbr.rel (0) target = $region25
    $region24: #{tpu_custom_call.1} parent=1 // pred_region
      %51 = dma.done [#allocation6], 1024
    $region25: #{tpu_custom_call.1} parent=1 // pred_fallthru
      _
    // Predicated region
    $region26: #{tpu_custom_call.1} parent=1 // pred_check
      _
    $region27: #{tpu_custom_call.1} parent=1 // pred_check_branch
      %53 = sbr.rel (0) target = $region29
    $region28: #{tpu_custom_call.1} parent=1 // pred_region
      %54 = dma.done [#allocation6], 128
    $region29: #{tpu_custom_call.1} parent=1 // pred_fallthru
      _
    %v55 = vld [vmem:[#allocation2] sm:$0xff]
    %v56 = vld [vmem:[#allocation2 + $0x8] sm:$0xff]
    %v57 = vld [vmem:[#allocation2 + $0x10] sm:$0xff]
    %v58 = vld [vmem:[#allocation2 + $0x18] sm:$0xff]
    %v59 = vld [vmem:[#allocation5] sm:$0xff]
    %v60 = vld [vmem:[#allocation5 + $0x8] sm:$0xff]
    %v61 = vld [vmem:[#allocation5 + $0x10] sm:$0xff]
    %v62 = vld [vmem:[#allocation5 + $0x18] sm:$0xff]
    %v63 = vld [vmem:[#allocation5 + $0x20] sm:$0x1]
    %v64 = vld [vmem:[#allocation5 + $0x28] sm:$0x1]
    %v65 = vld [vmem:[#allocation5 + $0x30] sm:$0x1]
    %v66 = vld [vmem:[#allocation5 + $0x38] sm:$0x1]
    %v67 = vld [vmem:[#allocation7] sm:$0xff]
    %68 = vrot.lane.b32.xlu0 %v55, 17
    %v69 = vpop.permute.xlu0 %68
    %70 = vrot.lane.b32.xlu0 %v56, 17
    %v71 = vpop.permute.xlu0 %70
    %72 = vrot.lane.b32.xlu0 %v57, 17
    %v73 = vpop.permute.xlu0 %72
    %74 = vrot.lane.b32.xlu0 %v58, 17
    %v75 = vpop.permute.xlu0 %74
    %v76 = vlaneseq
    %v77 = vand.u32 %v76, 127
    %vm78 = vcmp.lt.s32.totalorder %v77, 17
    %v79 = vsel %vm78, %v73, %v75
    %v80 = vsel %vm78, %v71, %v73
    %v81 = vsel %vm78, %v69, %v71
    %v82 = vsel %vm78, %v75, %v69
    %v83 = vlaneseq
    %v84 = vshrl.u32 %v83, 7
    %v85 = vsub.s32 0, %v84
    %v86 = vrot.slane %v59, %v85
    %v87 = vlaneseq
    %v88 = vshrl.u32 %v87, 7
    %v89 = vsub.s32 0, %v88
    %v90 = vrot.slane %v60, %v89
    %v91 = vlaneseq
    %v92 = vshrl.u32 %v91, 7
    %v93 = vsub.s32 0, %v92
    %v94 = vrot.slane %v61, %v93
    %v95 = vlaneseq
    %v96 = vshrl.u32 %v95, 7
    %v97 = vsub.s32 0, %v96
    %v98 = vrot.slane %v62, %v97
    %v99 = vmul.f32 %v82, %v86
    %v100 = vmul.f32 %v81, %v90
    %v101 = vmul.f32 %v80, %v94
    %v102 = vmul.f32 %v79, %v98
    %103 = vrot.lane.b32.xlu0 %v55, 16
    %v104 = vpop.permute.xlu0 %103
    %105 = vrot.lane.b32.xlu0 %v56, 16
    %v106 = vpop.permute.xlu0 %105
    %107 = vrot.lane.b32.xlu0 %v57, 16
    %v108 = vpop.permute.xlu0 %107
    %109 = vrot.lane.b32.xlu0 %v58, 16
    %v110 = vpop.permute.xlu0 %109
    %vm111 = vcmp.lt.s32.totalorder %v77, 16
    %v112 = vsel %vm111, %v108, %v110
    %v113 = vsel %vm111, %v106, %v108
    %v114 = vsel %vm111, %v104, %v106
    %v115 = vsel %vm111, %v110, %v104
    %v116 = vlaneseq
    %v117 = vshrl.u32 %v116, 7
    %v118 = vsub.s32 1, %v117
    %v119 = vrot.slane %v59, %v118
    %v120 = vlaneseq
    %v121 = vshrl.u32 %v120, 7
    %v122 = vsub.s32 1, %v121
    %v123 = vrot.slane %v60, %v122
    %v124 = vlaneseq
    %v125 = vshrl.u32 %v124, 7
    %v126 = vsub.s32 1, %v125
    %v127 = vrot.slane %v61, %v126
    %v128 = vlaneseq
    %v129 = vshrl.u32 %v128, 7
    %v130 = vsub.s32 1, %v129
    %v131 = vrot.slane %v62, %v130
    %v132 = vmul.f32 %v115, %v119
    %v133 = vmul.f32 %v114, %v123
    %v134 = vmul.f32 %v113, %v127
    %v135 = vmul.f32 %v112, %v131
    %136 = vrot.lane.b32.xlu0 %v55, 15
    %v137 = vpop.permute.xlu0 %136
    %138 = vrot.lane.b32.xlu0 %v56, 15
    %v139 = vpop.permute.xlu0 %138
    %140 = vrot.lane.b32.xlu0 %v57, 15
    %v141 = vpop.permute.xlu0 %140
    %142 = vrot.lane.b32.xlu0 %v58, 15
    %v143 = vpop.permute.xlu0 %142
    %vm144 = vcmp.lt.s32.totalorder %v77, 15
    %v145 = vsel %vm144, %v141, %v143
    %v146 = vsel %vm144, %v139, %v141
    %v147 = vsel %vm144, %v137, %v139
    %v148 = vsel %vm144, %v143, %v137
    %v149 = vlaneseq
    %v150 = vshrl.u32 %v149, 7
    %v151 = vsub.s32 2, %v150
    %v152 = vrot.slane %v59, %v151
    %v153 = vlaneseq
    %v154 = vshrl.u32 %v153, 7
    %v155 = vsub.s32 2, %v154
    %v156 = vrot.slane %v60, %v155
    %v157 = vlaneseq
    %v158 = vshrl.u32 %v157, 7
    %v159 = vsub.s32 2, %v158
    %v160 = vrot.slane %v61, %v159
    %v161 = vlaneseq
    %v162 = vshrl.u32 %v161, 7
    %v163 = vsub.s32 2, %v162
    %v164 = vrot.slane %v62, %v163
    %v165 = vmul.f32 %v148, %v152
    %v166 = vmul.f32 %v147, %v156
    %v167 = vmul.f32 %v146, %v160
    %v168 = vmul.f32 %v145, %v164
    %169 = vrot.lane.b32.xlu0 %v55, 1
    %v170 = vpop.permute.xlu0 %169
    %171 = vrot.lane.b32.xlu0 %v56, 1
    %v172 = vpop.permute.xlu0 %171
    %173 = vrot.lane.b32.xlu0 %v57, 1
    %v174 = vpop.permute.xlu0 %173
    %175 = vrot.lane.b32.xlu0 %v58, 1
    %v176 = vpop.permute.xlu0 %175
    %vm177 = vcmp.lt.s32.totalorder %v77, 1
    %v178 = vsel %vm177, %v174, %v176
    %v179 = vsel %vm177, %v172, %v174
    %v180 = vsel %vm177, %v170, %v172
    %v181 = vsel %vm177, %v176, %v170
    %v182 = vlaneseq
    %v183 = vshrl.u32 %v182, 7
    %v184 = vsub.s32 3, %v183
    %v185 = vrot.slane %v59, %v184
    %v186 = vlaneseq
    %v187 = vshrl.u32 %v186, 7
    %v188 = vsub.s32 3, %v187
    %v189 = vrot.slane %v60, %v188
    %v190 = vlaneseq
    %v191 = vshrl.u32 %v190, 7
    %v192 = vsub.s32 3, %v191
    %v193 = vrot.slane %v61, %v192
    %v194 = vlaneseq
    %v195 = vshrl.u32 %v194, 7
    %v196 = vsub.s32 3, %v195
    %v197 = vrot.slane %v62, %v196
    %v198 = vmul.f32 %v181, %v185
    %v199 = vmul.f32 %v180, %v189
    %v200 = vmul.f32 %v179, %v193
    %v201 = vmul.f32 %v178, %v197
    %202 = vrot.lane.b32.xlu0 %v55, 127
    %v203 = vpop.permute.xlu0 %202
    %204 = vrot.lane.b32.xlu0 %v56, 127
    %v205 = vpop.permute.xlu0 %204
    %206 = vrot.lane.b32.xlu0 %v57, 127
    %v207 = vpop.permute.xlu0 %206
    %208 = vrot.lane.b32.xlu0 %v58, 127
    %v209 = vpop.permute.xlu0 %208
    %vm210 = vcmp.lt.s32.totalorder %v77, 127
    %v211 = vsel %vm210, %v207, %v209
    %v212 = vsel %vm210, %v205, %v207
    %v213 = vsel %vm210, %v203, %v205
    %v214 = vsel %vm210, %v209, %v203
    %v215 = vlaneseq
    %v216 = vshrl.u32 %v215, 7
    %v217 = vsub.s32 5, %v216
    %v218 = vrot.slane %v59, %v217
    %v219 = vlaneseq
    %v220 = vshrl.u32 %v219, 7
    %v221 = vsub.s32 5, %v220
    %v222 = vrot.slane %v60, %v221
    %v223 = vlaneseq
    %v224 = vshrl.u32 %v223, 7
    %v225 = vsub.s32 5, %v224
    %v226 = vrot.slane %v61, %v225
    %v227 = vlaneseq
    %v228 = vshrl.u32 %v227, 7
    %v229 = vsub.s32 5, %v228
    %v230 = vrot.slane %v62, %v229
    %v231 = vmul.f32 %v213, %v218
    %v232 = vmul.f32 %v212, %v222
    %v233 = vmul.f32 %v211, %v226
    %v234 = vmul.f32 %v214, %v230
    %235 = vrot.lane.b32.xlu0 %v55, 113
    %v236 = vpop.permute.xlu0 %235
    %237 = vrot.lane.b32.xlu0 %v56, 113
    %v238 = vpop.permute.xlu0 %237
    %239 = vrot.lane.b32.xlu0 %v57, 113
    %v240 = vpop.permute.xlu0 %239
    %241 = vrot.lane.b32.xlu0 %v58, 113
    %v242 = vpop.permute.xlu0 %241
    %vm243 = vcmp.lt.s32.totalorder %v77, 113
    %v244 = vsel %vm243, %v240, %v242
    %v245 = vsel %vm243, %v238, %v240
    %v246 = vsel %vm243, %v236, %v238
    %v247 = vsel %vm243, %v242, %v236
    %v248 = vlaneseq
    %v249 = vshrl.u32 %v248, 7
    %v250 = vsub.s32 6, %v249
    %v251 = vrot.slane %v59, %v250
    %v252 = vlaneseq
    %v253 = vshrl.u32 %v252, 7
    %v254 = vsub.s32 6, %v253
    %v255 = vrot.slane %v60, %v254
    %v256 = vlaneseq
    %v257 = vshrl.u32 %v256, 7
    %v258 = vsub.s32 6, %v257
    %v259 = vrot.slane %v61, %v258
    %v260 = vlaneseq
    %v261 = vshrl.u32 %v260, 7
    %v262 = vsub.s32 6, %v261
    %v263 = vrot.slane %v62, %v262
    %v264 = vmul.f32 %v246, %v251
    %v265 = vmul.f32 %v245, %v255
    %v266 = vmul.f32 %v244, %v259
    %v267 = vmul.f32 %v247, %v263
    %268 = vrot.lane.b32.xlu0 %v55, 112
    %v269 = vpop.permute.xlu0 %268
    %270 = vrot.lane.b32.xlu0 %v56, 112
    %v271 = vpop.permute.xlu0 %270
    %272 = vrot.lane.b32.xlu0 %v57, 112
    %v273 = vpop.permute.xlu0 %272
    %274 = vrot.lane.b32.xlu0 %v58, 112
    %v275 = vpop.permute.xlu0 %274
    %vm276 = vcmp.lt.s32.totalorder %v77, 112
    %v277 = vsel %vm276, %v273, %v275
    %v278 = vsel %vm276, %v271, %v273
    %v279 = vsel %vm276, %v269, %v271
    %v280 = vsel %vm276, %v275, %v269
    %v281 = vlaneseq
    %v282 = vshrl.u32 %v281, 7
    %v283 = vsub.s32 7, %v282
    %v284 = vrot.slane %v59, %v283
    %v285 = vlaneseq
    %v286 = vshrl.u32 %v285, 7
    %v287 = vsub.s32 7, %v286
    %v288 = vrot.slane %v60, %v287
    %v289 = vlaneseq
    %v290 = vshrl.u32 %v289, 7
    %v291 = vsub.s32 7, %v290
    %v292 = vrot.slane %v61, %v291
    %v293 = vlaneseq
    %v294 = vshrl.u32 %v293, 7
    %v295 = vsub.s32 7, %v294
    %v296 = vrot.slane %v62, %v295
    %v297 = vmul.f32 %v279, %v284
    %v298 = vmul.f32 %v278, %v288
    %v299 = vmul.f32 %v277, %v292
    %v300 = vmul.f32 %v280, %v296
    %301 = vrot.lane.b32.xlu0 %v55, 111
    %v302 = vpop.permute.xlu0 %301
    %303 = vrot.lane.b32.xlu0 %v56, 111
    %v304 = vpop.permute.xlu0 %303
    %305 = vrot.lane.b32.xlu0 %v57, 111
    %v306 = vpop.permute.xlu0 %305
    %307 = vrot.lane.b32.xlu0 %v58, 111
    %v308 = vpop.permute.xlu0 %307
    %vm309 = vcmp.lt.s32.totalorder %v77, 111
    %v310 = vsel %vm309, %v306, %v308
    %v311 = vsel %vm309, %v304, %v306
    %v312 = vsel %vm309, %v302, %v304
    %v313 = vsel %vm309, %v308, %v302
    %v314 = vlaneseq
    %v315 = vshrl.u32 %v314, 7
    %v316 = vsub.s32 0, %v315
    %v317 = vrot.slane %v63, %v316
    %v318 = vlaneseq
    %v319 = vshrl.u32 %v318, 7
    %v320 = vsub.s32 0, %v319
    %v321 = vrot.slane %v64, %v320
    %v322 = vlaneseq
    %v323 = vshrl.u32 %v322, 7
    %v324 = vsub.s32 0, %v323
    %v325 = vrot.slane %v65, %v324
    %v326 = vlaneseq
    %v327 = vshrl.u32 %v326, 7
    %v328 = vsub.s32 0, %v327
    %v329 = vrot.slane %v66, %v328
    %v330 = vmul.f32 %v312, %v317
    %v331 = vmul.f32 %v311, %v321
    %v332 = vmul.f32 %v310, %v325
    %v333 = vmul.f32 %v313, %v329
    %vm334 = vcmask 596992
    %v336 = vsel %vm334, %v67, 0
    %vm338 = vcmask 1040384
    %v340 = vsel %vm338, 1.0, 0
    %v342 = vand.u32 %v100, 4294901760
    %343 = vmatprep.subr.mxu0 %v342
    %v344 = vand.u32 %v99, 4294901760
    %345 = vmatpush1.msra.mxu0 %v344
    %v346 = vand.u32 %v133, 4294901760
    %347 = vmatprep.subr.mxu0 %v346
    %v348 = vand.u32 %v132, 4294901760
    %349 = vmatpush1.msra.mxu0 %v348
    %v350 = vand.u32 %v166, 4294901760
    %351 = vmatprep.subr.mxu0 %v350
    %v352 = vand.u32 %v165, 4294901760
    %353 = vmatpush1.msra.mxu0 %v352
    %v354 = vand.u32 %v199, 4294901760
    %355 = vmatprep.subr.mxu0 %v354
    %v356 = vand.u32 %v198, 4294901760
    %357 = vmatpush1.msra.mxu0 %v356
    %v358 = vand.u32 %v56, 4294901760
    %359 = vmatprep.subr.mxu0 %v358
    %v360 = vand.u32 %v55, 4294901760
    %361 = vmatpush1.msra.mxu0 %v360
    %v362 = vand.u32 %v232, 4294901760
    %363 = vmatprep.subr.mxu0 %v362
    %v364 = vand.u32 %v231, 4294901760
    %365 = vmatpush1.msra.mxu0 %v364
    %v366 = vand.u32 %v265, 4294901760
    %367 = vmatprep.subr.mxu0 %v366
    %v368 = vand.u32 %v264, 4294901760
    %369 = vmatpush1.msra.mxu0 %v368
    %v370 = vand.u32 %v298, 4294901760
    %371 = vmatprep.subr.mxu0 %v370
    %v372 = vand.u32 %v297, 4294901760
    %373 = vmatpush1.msra.mxu0 %v372
    %v374 = vand.u32 %v331, 4294901760
    %375 = vmatprep.subr.mxu0 %v374
    %v376 = vand.u32 %v330, 4294901760
    %377 = vmatpush1.msra.mxu0 %v376
    %v378 = vand.u32 %v340, 4294901760
    %379 = vmatprep.subr.mxu0 %v378
    %v380 = vand.u32 %v340, 4294901760
    %381 = vmatpush1.msra.mxu0 %v380
    %382 = vmatprep.subr.mxu0 0.0
    %383 = vmatpush1.msra.mxu0 0.0
    %384 = vmatprep.subr.mxu0 0.0
    %385 = vmatpush1.msra.mxu0 0.0
    %386 = vmatprep.subr.mxu0 0.0
    %387 = vmatpush1.msra.mxu0 0.0
    %388 = vmatprep.subr.mxu0 0.0
    %389 = vmatpush1.msra.mxu0 0.0
    %390 = vmatprep.subr.mxu0 0.0
    %391 = vmatpush1.msra.mxu0 0.0
    %392 = vmatprep.subr.mxu0 0.0
    %393 = vmatpush1.msra.mxu0 0.0
    %394 = vmatprep.subr.mxu0 0.0
    %395 = vmatpush1.msra.mxu0 0.0
    %396 = vmatprep.subr.mxu0 0.0
    %397 = vmatpush1.msra.mxu0 0.0
    %398 = vmatprep.subr.mxu0 0.0
    %399 = vmatpush1.msra.mxu0 0.0
    %400 = vmatprep.subr.mxu0 0.0
    %401 = vmatpush1.msra.mxu0 0.0
    %402 = vmatprep.subr.mxu0 0.0
    %403 = vmatpush1.msra.mxu0 0.0
    %404 = vmatprep.subr.mxu0 0.0
    %405 = vmatpush1.msra.mxu0 0.0
    %406 = vmatprep.subr.mxu0 0.0
    %407 = vmatpush1.msra.mxu0 0.0
    %408 = vmatprep.subr.mxu0 0.0
    %409 = vmatpush1.msra.mxu0 0.0
    %410 = vmatprep.subr.mxu0 0.0
    %411 = vmatpush1.msra.mxu0 0.0
    %412 = vmatprep.subr.mxu0 0.0
    %413 = vmatpush1.msra.mxu0 0.0
    %414 = vmatprep.subr.mxu0 0.0
    %415 = vmatpush1.msra.mxu0 0.0
    %416 = vmatprep.subr.mxu0 0.0
    %417 = vmatpush1.msra.mxu0 0.0
    %418 = vmatprep.subr.mxu0 0.0
    %419 = vmatpush1.msra.mxu0 0.0
    %420 = vmatprep.subr.mxu0 0.0
    %421 = vmatpush1.msra.mxu0 0.0
    %422 = vmatprep.subr.mxu0 0.0
    %423 = vmatpush1.msra.mxu0 0.0
    %424 = vmatprep.subr.mxu0 0.0
    %425 = vmatpush1.msra.mxu0 0.0
    %426 = vmatprep.mubr.f32.mxu0 0.0
    %v427 = vand.u32 %v336, 4294901760
    %v428 = vsub.f32 %v336, %v427
    %v429 = vand.u32 %v428, 4294901760
    %v430 = vsub.f32 %v428, %v429
    %v431 = vand.u32 %v430, 4294901760
    %432 = vmatmul.mubr.f32.gmra.mrb[0].mxu0 %v431
    %v433 = vpop.f32.mrb[0].mxu0
    %v434 = vadd.f32 0.0, %v433
    %v435 = vpop.f32.mrb[0].mxu0
    %v436 = vadd.f32 0.0, %v435
    %437 = vdwg.mxu0
    %v438 = vand.u32 %v100, 4294901760
    %v439 = vsub.f32 %v100, %v438
    %v440 = vand.u32 %v439, 4294901760
    %v441 = vsub.f32 %v439, %v440
    %v442 = vand.u32 %v441, 4294901760
    %443 = vmatprep.subr.mxu0 %v442
    %v444 = vand.u32 %v99, 4294901760
    %v445 = vsub.f32 %v99, %v444
    %v446 = vand.u32 %v445, 4294901760
    %v447 = vsub.f32 %v445, %v446
    %v448 = vand.u32 %v447, 4294901760
    %449 = vmatpush1.msra.mxu0 %v448
    %v450 = vand.u32 %v133, 4294901760
    %v451 = vsub.f32 %v133, %v450
    %v452 = vand.u32 %v451, 4294901760
    %v453 = vsub.f32 %v451, %v452
    %v454 = vand.u32 %v453, 4294901760
    %455 = vmatprep.subr.mxu0 %v454
    %v456 = vand.u32 %v132, 4294901760
    %v457 = vsub.f32 %v132, %v456
    %v458 = vand.u32 %v457, 4294901760
    %v459 = vsub.f32 %v457, %v458
    %v460 = vand.u32 %v459, 4294901760
    %461 = vmatpush1.msra.mxu0 %v460
    %v462 = vand.u32 %v166, 4294901760
    %v463 = vsub.f32 %v166, %v462
    %v464 = vand.u32 %v463, 4294901760
    %v465 = vsub.f32 %v463, %v464
    %v466 = vand.u32 %v465, 4294901760
    %467 = vmatprep.subr.mxu0 %v466
    %v468 = vand.u32 %v165, 4294901760
    %v469 = vsub.f32 %v165, %v468
    %v470 = vand.u32 %v469, 4294901760
    %v471 = vsub.f32 %v469, %v470
    %v472 = vand.u32 %v471, 4294901760
    %473 = vmatpush1.msra.mxu0 %v472
    %v474 = vand.u32 %v199, 4294901760
    %v475 = vsub.f32 %v199, %v474
    %v476 = vand.u32 %v475, 4294901760
    %v477 = vsub.f32 %v475, %v476
    %v478 = vand.u32 %v477, 4294901760
    %479 = vmatprep.subr.mxu0 %v478
    %v480 = vand.u32 %v198, 4294901760
    %v481 = vsub.f32 %v198, %v480
    %v482 = vand.u32 %v481, 4294901760
    %v483 = vsub.f32 %v481, %v482
    %v484 = vand.u32 %v483, 4294901760
    %485 = vmatpush1.msra.mxu0 %v484
    %v486 = vand.u32 %v56, 4294901760
    %v487 = vsub.f32 %v56, %v486
    %v488 = vand.u32 %v487, 4294901760
    %v489 = vsub.f32 %v487, %v488
    %v490 = vand.u32 %v489, 4294901760
    %491 = vmatprep.subr.mxu0 %v490
    %v492 = vand.u32 %v55, 4294901760
    %v493 = vsub.f32 %v55, %v492
    %v494 = vand.u32 %v493, 4294901760
    %v495 = vsub.f32 %v493, %v494
    %v496 = vand.u32 %v495, 4294901760
    %497 = vmatpush1.msra.mxu0 %v496
    %v498 = vand.u32 %v232, 4294901760
    %v499 = vsub.f32 %v232, %v498
    %v500 = vand.u32 %v499, 4294901760
    %v501 = vsub.f32 %v499, %v500
    %v502 = vand.u32 %v501, 4294901760
    %503 = vmatprep.subr.mxu0 %v502
    %v504 = vand.u32 %v231, 4294901760
    %v505 = vsub.f32 %v231, %v504
    %v506 = vand.u32 %v505, 4294901760
    %v507 = vsub.f32 %v505, %v506
    %v508 = vand.u32 %v507, 4294901760
    %509 = vmatpush1.msra.mxu0 %v508
    %v510 = vand.u32 %v265, 4294901760
    %v511 = vsub.f32 %v265, %v510
    %v512 = vand.u32 %v511, 4294901760
    %v513 = vsub.f32 %v511, %v512
    %v514 = vand.u32 %v513, 4294901760
    %515 = vmatprep.subr.mxu0 %v514
    %v516 = vand.u32 %v264, 4294901760
    %v517 = vsub.f32 %v264, %v516
    %v518 = vand.u32 %v517, 4294901760
    %v519 = vsub.f32 %v517, %v518
    %v520 = vand.u32 %v519, 4294901760
    %521 = vmatpush1.msra.mxu0 %v520
    %v522 = vand.u32 %v298, 4294901760
    %v523 = vsub.f32 %v298, %v522
    %v524 = vand.u32 %v523, 4294901760
    %v525 = vsub.f32 %v523, %v524
    %v526 = vand.u32 %v525, 4294901760
    %527 = vmatprep.subr.mxu0 %v526
    %v528 = vand.u32 %v297, 4294901760
    %v529 = vsub.f32 %v297, %v528
    %v530 = vand.u32 %v529, 4294901760
    %v531 = vsub.f32 %v529, %v530
    %v532 = vand.u32 %v531, 4294901760
    %533 = vmatpush1.msra.mxu0 %v532
    %v534 = vand.u32 %v331, 4294901760
    %v535 = vsub.f32 %v331, %v534
    %v536 = vand.u32 %v535, 4294901760
    %v537 = vsub.f32 %v535, %v536
    %v538 = vand.u32 %v537, 4294901760
    %539 = vmatprep.subr.mxu0 %v538
    %v540 = vand.u32 %v330, 4294901760
    %v541 = vsub.f32 %v330, %v540
    %v542 = vand.u32 %v541, 4294901760
    %v543 = vsub.f32 %v541, %v542
    %v544 = vand.u32 %v543, 4294901760
    %545 = vmatpush1.msra.mxu0 %v544
    %v546 = vand.u32 %v340, 4294901760
    %v547 = vsub.f32 %v340, %v546
    %v548 = vand.u32 %v547, 4294901760
    %v549 = vsub.f32 %v547, %v548
    %v550 = vand.u32 %v549, 4294901760
    %551 = vmatprep.subr.mxu0 %v550
    %v552 = vand.u32 %v340, 4294901760
    %v553 = vsub.f32 %v340, %v552
    %v554 = vand.u32 %v553, 4294901760
    %v555 = vsub.f32 %v553, %v554
    %v556 = vand.u32 %v555, 4294901760
    %557 = vmatpush1.msra.mxu0 %v556
    %558 = vmatprep.subr.mxu0 0.0
    %559 = vmatpush1.msra.mxu0 0.0
    %560 = vmatprep.subr.mxu0 0.0
    %561 = vmatpush1.msra.mxu0 0.0
    %562 = vmatprep.subr.mxu0 0.0
    %563 = vmatpush1.msra.mxu0 0.0
    %564 = vmatprep.subr.mxu0 0.0
    %565 = vmatpush1.msra.mxu0 0.0
    %566 = vmatprep.subr.mxu0 0.0
    %567 = vmatpush1.msra.mxu0 0.0
    %568 = vmatprep.subr.mxu0 0.0
    %569 = vmatpush1.msra.mxu0 0.0
    %570 = vmatprep.subr.mxu0 0.0
    %571 = vmatpush1.msra.mxu0 0.0
    %572 = vmatprep.subr.mxu0 0.0
    %573 = vmatpush1.msra.mxu0 0.0
    %574 = vmatprep.subr.mxu0 0.0
    %575 = vmatpush1.msra.mxu0 0.0
    %576 = vmatprep.subr.mxu0 0.0
    %577 = vmatpush1.msra.mxu0 0.0
    %578 = vmatprep.subr.mxu0 0.0
    %579 = vmatpush1.msra.mxu0 0.0
    %580 = vmatprep.subr.mxu0 0.0
    %581 = vmatpush1.msra.mxu0 0.0
    %582 = vmatprep.subr.mxu0 0.0
    %583 = vmatpush1.msra.mxu0 0.0
    %584 = vmatprep.subr.mxu0 0.0
    %585 = vmatpush1.msra.mxu0 0.0
    %586 = vmatprep.subr.mxu0 0.0
    %587 = vmatpush1.msra.mxu0 0.0
    %588 = vmatprep.subr.mxu0 0.0
    %589 = vmatpush1.msra.mxu0 0.0
    %590 = vmatprep.subr.mxu0 0.0
    %591 = vmatpush1.msra.mxu0 0.0
    %592 = vmatprep.subr.mxu0 0.0
    %593 = vmatpush1.msra.mxu0 0.0
    %594 = vmatprep.subr.mxu0 0.0
    %595 = vmatpush1.msra.mxu0 0.0
    %596 = vmatprep.subr.mxu0 0.0
    %597 = vmatpush1.msra.mxu0 0.0
    %598 = vmatprep.subr.mxu0 0.0
    %599 = vmatpush1.msra.mxu0 0.0
    %600 = vmatprep.subr.mxu0 0.0
    %601 = vmatpush1.msra.mxu0 0.0
    %602 = vmatprep.mubr.f32.mxu0 0.0
    %v603 = vand.u32 %v336, 4294901760
    %604 = vmatmul.mubr.f32.gmra.mrb[0].mxu0 %v603
    %v605 = vpop.f32.mrb[0].mxu0
    %v606 = vadd.f32 %v434, %v605
    %v607 = vpop.f32.mrb[0].mxu0
    %v608 = vadd.f32 %v436, %v607
    %609 = vdwg.mxu0
    %v610 = vand.u32 %v100, 4294901760
    %v611 = vsub.f32 %v100, %v610
    %612 = vmatprep.subr.mxu0 %v611
    %v613 = vand.u32 %v99, 4294901760
    %v614 = vsub.f32 %v99, %v613
    %615 = vmatpush1.msra.mxu0 %v614
    %v616 = vand.u32 %v133, 4294901760
    %v617 = vsub.f32 %v133, %v616
    %618 = vmatprep.subr.mxu0 %v617
    %v619 = vand.u32 %v132, 4294901760
    %v620 = vsub.f32 %v132, %v619
    %621 = vmatpush1.msra.mxu0 %v620
    %v622 = vand.u32 %v166, 4294901760
    %v623 = vsub.f32 %v166, %v622
    %624 = vmatprep.subr.mxu0 %v623
    %v625 = vand.u32 %v165, 4294901760
    %v626 = vsub.f32 %v165, %v625
    %627 = vmatpush1.msra.mxu0 %v626
    %v628 = vand.u32 %v199, 4294901760
    %v629 = vsub.f32 %v199, %v628
    %630 = vmatprep.subr.mxu0 %v629
    %v631 = vand.u32 %v198, 4294901760
    %v632 = vsub.f32 %v198, %v631
    %633 = vmatpush1.msra.mxu0 %v632
    %v634 = vand.u32 %v56, 4294901760
    %v635 = vsub.f32 %v56, %v634
    %636 = vmatprep.subr.mxu0 %v635
    %v637 = vand.u32 %v55, 4294901760
    %v638 = vsub.f32 %v55, %v637
    %639 = vmatpush1.msra.mxu0 %v638
    %v640 = vand.u32 %v232, 4294901760
    %v641 = vsub.f32 %v232, %v640
    %642 = vmatprep.subr.mxu0 %v641
    %v643 = vand.u32 %v231, 4294901760
    %v644 = vsub.f32 %v231, %v643
    %645 = vmatpush1.msra.mxu0 %v644
    %v646 = vand.u32 %v265, 4294901760
    %v647 = vsub.f32 %v265, %v646
    %648 = vmatprep.subr.mxu0 %v647
    %v649 = vand.u32 %v264, 4294901760
    %v650 = vsub.f32 %v264, %v649
    %651 = vmatpush1.msra.mxu0 %v650
    %v652 = vand.u32 %v298, 4294901760
    %v653 = vsub.f32 %v298, %v652
    %654 = vmatprep.subr.mxu0 %v653
    %v655 = vand.u32 %v297, 4294901760
    %v656 = vsub.f32 %v297, %v655
    %657 = vmatpush1.msra.mxu0 %v656
    %v658 = vand.u32 %v331, 4294901760
    %v659 = vsub.f32 %v331, %v658
    %660 = vmatprep.subr.mxu0 %v659
    %v661 = vand.u32 %v330, 4294901760
    %v662 = vsub.f32 %v330, %v661
    %663 = vmatpush1.msra.mxu0 %v662
    %v664 = vand.u32 %v340, 4294901760
    %v665 = vsub.f32 %v340, %v664
    %666 = vmatprep.subr.mxu0 %v665
    %v667 = vand.u32 %v340, 4294901760
    %v668 = vsub.f32 %v340, %v667
    %669 = vmatpush1.msra.mxu0 %v668
    %670 = vmatprep.subr.mxu0 0.0
    %671 = vmatpush1.msra.mxu0 0.0
    %672 = vmatprep.subr.mxu0 0.0
    %673 = vmatpush1.msra.mxu0 0.0
    %674 = vmatprep.subr.mxu0 0.0
    %675 = vmatpush1.msra.mxu0 0.0
    %676 = vmatprep.subr.mxu0 0.0
    %677 = vmatpush1.msra.mxu0 0.0
    %678 = vmatprep.subr.mxu0 0.0
    %679 = vmatpush1.msra.mxu0 0.0
    %680 = vmatprep.subr.mxu0 0.0
    %681 = vmatpush1.msra.mxu0 0.0
    %682 = vmatprep.subr.mxu0 0.0
    %683 = vmatpush1.msra.mxu0 0.0
    %684 = vmatprep.subr.mxu0 0.0
    %685 = vmatpush1.msra.mxu0 0.0
    %686 = vmatprep.subr.mxu0 0.0
    %687 = vmatpush1.msra.mxu0 0.0
    %688 = vmatprep.subr.mxu0 0.0
    %689 = vmatpush1.msra.mxu0 0.0
    %690 = vmatprep.subr.mxu0 0.0
    %691 = vmatpush1.msra.mxu0 0.0
    %692 = vmatprep.subr.mxu0 0.0
    %693 = vmatpush1.msra.mxu0 0.0
    %694 = vmatprep.subr.mxu0 0.0
    %695 = vmatpush1.msra.mxu0 0.0
    %696 = vmatprep.subr.mxu0 0.0
    %697 = vmatpush1.msra.mxu0 0.0
    %698 = vmatprep.subr.mxu0 0.0
    %699 = vmatpush1.msra.mxu0 0.0
    %700 = vmatprep.subr.mxu0 0.0
    %701 = vmatpush1.msra.mxu0 0.0
    %702 = vmatprep.subr.mxu0 0.0
    %703 = vmatpush1.msra.mxu0 0.0
    %704 = vmatprep.subr.mxu0 0.0
    %705 = vmatpush1.msra.mxu0 0.0
    %706 = vmatprep.subr.mxu0 0.0
    %707 = vmatpush1.msra.mxu0 0.0
    %708 = vmatprep.subr.mxu0 0.0
    %709 = vmatpush1.msra.mxu0 0.0
    %710 = vmatprep.subr.mxu0 0.0
    %711 = vmatpush1.msra.mxu0 0.0
    %712 = vmatprep.subr.mxu0 0.0
    %713 = vmatpush1.msra.mxu0 0.0
    %714 = vmatprep.mubr.f32.mxu0 0.0
    %v715 = vand.u32 %v336, 4294901760
    %v716 = vsub.f32 %v336, %v715
    %717 = vmatmul.mubr.f32.gmra.mrb[0].mxu0 %v716
    %v718 = vpop.f32.mrb[0].mxu0
    %v719 = vadd.f32 %v606, %v718
    %v720 = vpop.f32.mrb[0].mxu0
    %v721 = vadd.f32 %v608, %v720
    %722 = vdwg.mxu0
    %v723 = vand.u32 %v100, 4294901760
    %724 = vmatprep.subr.mxu0 %v723
    %v725 = vand.u32 %v99, 4294901760
    %726 = vmatpush1.msra.mxu0 %v725
    %v727 = vand.u32 %v133, 4294901760
    %728 = vmatprep.subr.mxu0 %v727
    %v729 = vand.u32 %v132, 4294901760
    %730 = vmatpush1.msra.mxu0 %v729
    %v731 = vand.u32 %v166, 4294901760
    %732 = vmatprep.subr.mxu0 %v731
    %v733 = vand.u32 %v165, 4294901760
    %734 = vmatpush1.msra.mxu0 %v733
    %v735 = vand.u32 %v199, 4294901760
    %736 = vmatprep.subr.mxu0 %v735
    %v737 = vand.u32 %v198, 4294901760
    %738 = vmatpush1.msra.mxu0 %v737
    %v739 = vand.u32 %v56, 4294901760
    %740 = vmatprep.subr.mxu0 %v739
    %v741 = vand.u32 %v55, 4294901760
    %742 = vmatpush1.msra.mxu0 %v741
    %v743 = vand.u32 %v232, 4294901760
    %744 = vmatprep.subr.mxu0 %v743
    %v745 = vand.u32 %v231, 4294901760
    %746 = vmatpush1.msra.mxu0 %v745
    %v747 = vand.u32 %v265, 4294901760
    %748 = vmatprep.subr.mxu0 %v747
    %v749 = vand.u32 %v264, 4294901760
    %750 = vmatpush1.msra.mxu0 %v749
    %v751 = vand.u32 %v298, 4294901760
    %752 = vmatprep.subr.mxu0 %v751
    %v753 = vand.u32 %v297, 4294901760
    %754 = vmatpush1.msra.mxu0 %v753
    %v755 = vand.u32 %v331, 4294901760
    %756 = vmatprep.subr.mxu0 %v755
    %v757 = vand.u32 %v330, 4294901760
    %758 = vmatpush1.msra.mxu0 %v757
    %v759 = vand.u32 %v340, 4294901760
    %760 = vmatprep.subr.mxu0 %v759
    %v761 = vand.u32 %v340, 4294901760
    %762 = vmatpush1.msra.mxu0 %v761
    %763 = vmatprep.subr.mxu0 0.0
    %764 = vmatpush1.msra.mxu0 0.0
    %765 = vmatprep.subr.mxu0 0.0
    %766 = vmatpush1.msra.mxu0 0.0
    %767 = vmatprep.subr.mxu0 0.0
    %768 = vmatpush1.msra.mxu0 0.0
    %769 = vmatprep.subr.mxu0 0.0
    %770 = vmatpush1.msra.mxu0 0.0
    %771 = vmatprep.subr.mxu0 0.0
    %772 = vmatpush1.msra.mxu0 0.0
    %773 = vmatprep.subr.mxu0 0.0
    %774 = vmatpush1.msra.mxu0 0.0
    %775 = vmatprep.subr.mxu0 0.0
    %776 = vmatpush1.msra.mxu0 0.0
    %777 = vmatprep.subr.mxu0 0.0
    %778 = vmatpush1.msra.mxu0 0.0
    %779 = vmatprep.subr.mxu0 0.0
    %780 = vmatpush1.msra.mxu0 0.0
    %781 = vmatprep.subr.mxu0 0.0
    %782 = vmatpush1.msra.mxu0 0.0
    %783 = vmatprep.subr.mxu0 0.0
    %784 = vmatpush1.msra.mxu0 0.0
    %785 = vmatprep.subr.mxu0 0.0
    %786 = vmatpush1.msra.mxu0 0.0
    %787 = vmatprep.subr.mxu0 0.0
    %788 = vmatpush1.msra.mxu0 0.0
    %789 = vmatprep.subr.mxu0 0.0
    %790 = vmatpush1.msra.mxu0 0.0
    %791 = vmatprep.subr.mxu0 0.0
    %792 = vmatpush1.msra.mxu0 0.0
    %793 = vmatprep.subr.mxu0 0.0
    %794 = vmatpush1.msra.mxu0 0.0
    %795 = vmatprep.subr.mxu0 0.0
    %796 = vmatpush1.msra.mxu0 0.0
    %797 = vmatprep.subr.mxu0 0.0
    %798 = vmatpush1.msra.mxu0 0.0
    %799 = vmatprep.subr.mxu0 0.0
    %800 = vmatpush1.msra.mxu0 0.0
    %801 = vmatprep.subr.mxu0 0.0
    %802 = vmatpush1.msra.mxu0 0.0
    %803 = vmatprep.subr.mxu0 0.0
    %804 = vmatpush1.msra.mxu0 0.0
    %805 = vmatprep.subr.mxu0 0.0
    %806 = vmatpush1.msra.mxu0 0.0
    %807 = vmatprep.mubr.f32.mxu0 0.0
    %v808 = vand.u32 %v336, 4294901760
    %v809 = vsub.f32 %v336, %v808
    %v810 = vand.u32 %v809, 4294901760
    %811 = vmatmul.mubr.f32.gmra.mrb[0].mxu0 %v810
    %v812 = vpop.f32.mrb[0].mxu0
    %v813 = vadd.f32 %v719, %v812
    %v814 = vpop.f32.mrb[0].mxu0
    %v815 = vadd.f32 %v721, %v814
    %816 = vdwg.mxu0
    %v817 = vand.u32 %v100, 4294901760
    %v818 = vsub.f32 %v100, %v817
    %v819 = vand.u32 %v818, 4294901760
    %820 = vmatprep.subr.mxu0 %v819
    %v821 = vand.u32 %v99, 4294901760
    %v822 = vsub.f32 %v99, %v821
    %v823 = vand.u32 %v822, 4294901760
    %824 = vmatpush1.msra.mxu0 %v823
    %v825 = vand.u32 %v133, 4294901760
    %v826 = vsub.f32 %v133, %v825
    %v827 = vand.u32 %v826, 4294901760
    %828 = vmatprep.subr.mxu0 %v827
    %v829 = vand.u32 %v132, 4294901760
    %v830 = vsub.f32 %v132, %v829
    %v831 = vand.u32 %v830, 4294901760
    %832 = vmatpush1.msra.mxu0 %v831
    %v833 = vand.u32 %v166, 4294901760
    %v834 = vsub.f32 %v166, %v833
    %v835 = vand.u32 %v834, 4294901760
    %836 = vmatprep.subr.mxu0 %v835
    %v837 = vand.u32 %v165, 4294901760
    %v838 = vsub.f32 %v165, %v837
    %v839 = vand.u32 %v838, 4294901760
    %840 = vmatpush1.msra.mxu0 %v839
    %v841 = vand.u32 %v199, 4294901760
    %v842 = vsub.f32 %v199, %v841
    %v843 = vand.u32 %v842, 4294901760
    %844 = vmatprep.subr.mxu0 %v843
    %v845 = vand.u32 %v198, 4294901760
    %v846 = vsub.f32 %v198, %v845
    %v847 = vand.u32 %v846, 4294901760
    %848 = vmatpush1.msra.mxu0 %v847
    %v849 = vand.u32 %v56, 4294901760
    %v850 = vsub.f32 %v56, %v849
    %v851 = vand.u32 %v850, 4294901760
    %852 = vmatprep.subr.mxu0 %v851
    %v853 = vand.u32 %v55, 4294901760
    %v854 = vsub.f32 %v55, %v853
    %v855 = vand.u32 %v854, 4294901760
    %856 = vmatpush1.msra.mxu0 %v855
    %v857 = vand.u32 %v232, 4294901760
    %v858 = vsub.f32 %v232, %v857
    %v859 = vand.u32 %v858, 4294901760
    %860 = vmatprep.subr.mxu0 %v859
    %v861 = vand.u32 %v231, 4294901760
    %v862 = vsub.f32 %v231, %v861
    %v863 = vand.u32 %v862, 4294901760
    %864 = vmatpush1.msra.mxu0 %v863
    %v865 = vand.u32 %v265, 4294901760
    %v866 = vsub.f32 %v265, %v865
    %v867 = vand.u32 %v866, 4294901760
    %868 = vmatprep.subr.mxu0 %v867
    %v869 = vand.u32 %v264, 4294901760
    %v870 = vsub.f32 %v264, %v869
    %v871 = vand.u32 %v870, 4294901760
    %872 = vmatpush1.msra.mxu0 %v871
    %v873 = vand.u32 %v298, 4294901760
    %v874 = vsub.f32 %v298, %v873
    %v875 = vand.u32 %v874, 4294901760
    %876 = vmatprep.subr.mxu0 %v875
    %v877 = vand.u32 %v297, 4294901760
    %v878 = vsub.f32 %v297, %v877
    %v879 = vand.u32 %v878, 4294901760
    %880 = vmatpush1.msra.mxu0 %v879
    %v881 = vand.u32 %v331, 4294901760
    %v882 = vsub.f32 %v331, %v881
    %v883 = vand.u32 %v882, 4294901760
    %884 = vmatprep.subr.mxu0 %v883
    %v885 = vand.u32 %v330, 4294901760
    %v886 = vsub.f32 %v330, %v885
    %v887 = vand.u32 %v886, 4294901760
    %888 = vmatpush1.msra.mxu0 %v887
    %v889 = vand.u32 %v340, 4294901760
    %v890 = vsub.f32 %v340, %v889
    %v891 = vand.u32 %v890, 4294901760
    %892 = vmatprep.subr.mxu0 %v891
    %v893 = vand.u32 %v340, 4294901760
    %v894 = vsub.f32 %v340, %v893
    %v895 = vand.u32 %v894, 4294901760
    %896 = vmatpush1.msra.mxu0 %v895
    %897 = vmatprep.subr.mxu0 0.0
    %898 = vmatpush1.msra.mxu0 0.0
    %899 = vmatprep.subr.mxu0 0.0
    %900 = vmatpush1.msra.mxu0 0.0
    %901 = vmatprep.subr.mxu0 0.0
    %902 = vmatpush1.msra.mxu0 0.0
    %903 = vmatprep.subr.mxu0 0.0
    %904 = vmatpush1.msra.mxu0 0.0
    %905 = vmatprep.subr.mxu0 0.0
    %906 = vmatpush1.msra.mxu0 0.0
    %907 = vmatprep.subr.mxu0 0.0
    %908 = vmatpush1.msra.mxu0 0.0
    %909 = vmatprep.subr.mxu0 0.0
    %910 = vmatpush1.msra.mxu0 0.0
    %911 = vmatprep.subr.mxu0 0.0
    %912 = vmatpush1.msra.mxu0 0.0
    %913 = vmatprep.subr.mxu0 0.0
    %914 = vmatpush1.msra.mxu0 0.0
    %915 = vmatprep.subr.mxu0 0.0
    %916 = vmatpush1.msra.mxu0 0.0
    %917 = vmatprep.subr.mxu0 0.0
    %918 = vmatpush1.msra.mxu0 0.0
    %919 = vmatprep.subr.mxu0 0.0
    %920 = vmatpush1.msra.mxu0 0.0
    %921 = vmatprep.subr.mxu0 0.0
    %922 = vmatpush1.msra.mxu0 0.0
    %923 = vmatprep.subr.mxu0 0.0
    %924 = vmatpush1.msra.mxu0 0.0
    %925 = vmatprep.subr.mxu0 0.0
    %926 = vmatpush1.msra.mxu0 0.0
    %927 = vmatprep.subr.mxu0 0.0
    %928 = vmatpush1.msra.mxu0 0.0
    %929 = vmatprep.subr.mxu0 0.0
    %930 = vmatpush1.msra.mxu0 0.0
    %931 = vmatprep.subr.mxu0 0.0
    %932 = vmatpush1.msra.mxu0 0.0
    %933 = vmatprep.subr.mxu0 0.0
    %934 = vmatpush1.msra.mxu0 0.0
    %935 = vmatprep.subr.mxu0 0.0
    %936 = vmatpush1.msra.mxu0 0.0
    %937 = vmatprep.subr.mxu0 0.0
    %938 = vmatpush1.msra.mxu0 0.0
    %939 = vmatprep.subr.mxu0 0.0
    %940 = vmatpush1.msra.mxu0 0.0
    %941 = vmatprep.mubr.f32.mxu0 0.0
    %v942 = vand.u32 %v336, 4294901760
    %943 = vmatmul.mubr.f32.gmra.mrb[0].mxu0 %v942
    %v944 = vpop.f32.mrb[0].mxu0
    %v945 = vadd.f32 %v813, %v944
    %v946 = vpop.f32.mrb[0].mxu0
    %v947 = vadd.f32 %v815, %v946
    %948 = vdwg.mxu0
    %v949 = vand.u32 %v100, 4294901760
    %950 = vmatprep.subr.mxu0 %v949
    %v951 = vand.u32 %v99, 4294901760
    %952 = vmatpush1.msra.mxu0 %v951
    %v953 = vand.u32 %v133, 4294901760
    %954 = vmatprep.subr.mxu0 %v953
    %v955 = vand.u32 %v132, 4294901760
    %956 = vmatpush1.msra.mxu0 %v955
    %v957 = vand.u32 %v166, 4294901760
    %958 = vmatprep.subr.mxu0 %v957
    %v959 = vand.u32 %v165, 4294901760
    %960 = vmatpush1.msra.mxu0 %v959
    %v961 = vand.u32 %v199, 4294901760
    %962 = vmatprep.subr.mxu0 %v961
    %v963 = vand.u32 %v198, 4294901760
    %964 = vmatpush1.msra.mxu0 %v963
    %v965 = vand.u32 %v56, 4294901760
    %966 = vmatprep.subr.mxu0 %v965
    %v967 = vand.u32 %v55, 4294901760
    %968 = vmatpush1.msra.mxu0 %v967
    %v969 = vand.u32 %v232, 4294901760
    %970 = vmatprep.subr.mxu0 %v969
    %v971 = vand.u32 %v231, 4294901760
    %972 = vmatpush1.msra.mxu0 %v971
    %v973 = vand.u32 %v265, 4294901760
    %974 = vmatprep.subr.mxu0 %v973
    %v975 = vand.u32 %v264, 4294901760
    %976 = vmatpush1.msra.mxu0 %v975
    %v977 = vand.u32 %v298, 4294901760
    %978 = vmatprep.subr.mxu0 %v977
    %v979 = vand.u32 %v297, 4294901760
    %980 = vmatpush1.msra.mxu0 %v979
    %v981 = vand.u32 %v331, 4294901760
    %982 = vmatprep.subr.mxu0 %v981
    %v983 = vand.u32 %v330, 4294901760
    %984 = vmatpush1.msra.mxu0 %v983
    %v985 = vand.u32 %v340, 4294901760
    %986 = vmatprep.subr.mxu0 %v985
    %v987 = vand.u32 %v340, 4294901760
    %988 = vmatpush1.msra.mxu0 %v987
    %989 = vmatprep.subr.mxu0 0.0
    %990 = vmatpush1.msra.mxu0 0.0
    %991 = vmatprep.subr.mxu0 0.0
    %992 = vmatpush1.msra.mxu0 0.0
    %993 = vmatprep.subr.mxu0 0.0
    %994 = vmatpush1.msra.mxu0 0.0
    %995 = vmatprep.subr.mxu0 0.0
    %996 = vmatpush1.msra.mxu0 0.0
    %997 = vmatprep.subr.mxu0 0.0
    %998 = vmatpush1.msra.mxu0 0.0
    %999 = vmatprep.subr.mxu0 0.0
    %1000 = vmatpush1.msra.mxu0 0.0
    %1001 = vmatprep.subr.mxu0 0.0
    %1002 = vmatpush1.msra.mxu0 0.0
    %1003 = vmatprep.subr.mxu0 0.0
    %1004 = vmatpush1.msra.mxu0 0.0
    %1005 = vmatprep.subr.mxu0 0.0
    %1006 = vmatpush1.msra.mxu0 0.0
    %1007 = vmatprep.subr.mxu0 0.0
    %1008 = vmatpush1.msra.mxu0 0.0
    %1009 = vmatprep.subr.mxu0 0.0
    %1010 = vmatpush1.msra.mxu0 0.0
    %1011 = vmatprep.subr.mxu0 0.0
    %1012 = vmatpush1.msra.mxu0 0.0
    %1013 = vmatprep.subr.mxu0 0.0
    %1014 = vmatpush1.msra.mxu0 0.0
    %1015 = vmatprep.subr.mxu0 0.0
    %1016 = vmatpush1.msra.mxu0 0.0
    %1017 = vmatprep.subr.mxu0 0.0
    %1018 = vmatpush1.msra.mxu0 0.0
    %1019 = vmatprep.subr.mxu0 0.0
    %1020 = vmatpush1.msra.mxu0 0.0
    %1021 = vmatprep.subr.mxu0 0.0
    %1022 = vmatpush1.msra.mxu0 0.0
    %1023 = vmatprep.subr.mxu0 0.0
    %1024 = vmatpush1.msra.mxu0 0.0
    %1025 = vmatprep.subr.mxu0 0.0
    %1026 = vmatpush1.msra.mxu0 0.0
    %1027 = vmatprep.subr.mxu0 0.0
    %1028 = vmatpush1.msra.mxu0 0.0
    %1029 = vmatprep.subr.mxu0 0.0
    %1030 = vmatpush1.msra.mxu0 0.0
    %1031 = vmatprep.subr.mxu0 0.0
    %1032 = vmatpush1.msra.mxu0 0.0
    %1033 = vmatprep.mubr.f32.mxu0 0.0
    %v1034 = vand.u32 %v336, 4294901760
    %1035 = vmatmul.mubr.f32.gmra.mrb[0].mxu0 %v1034
    %v1036 = vpop.f32.mrb[0].mxu0
    %v1037 = vadd.f32 %v945, %v1036
    %v1038 = vpop.f32.mrb[0].mxu0
    %v1039 = vadd.f32 %v947, %v1038
    %1040 = vdwg.mxu0
    %v1041 = vand.u32 %v102, 4294901760
    %1042 = vmatprep.subr.mxu0 %v1041
    %v1043 = vand.u32 %v101, 4294901760
    %1044 = vmatpush1.msra.mxu0 %v1043
    %v1045 = vand.u32 %v135, 4294901760
    %1046 = vmatprep.subr.mxu0 %v1045
    %v1047 = vand.u32 %v134, 4294901760
    %1048 = vmatpush1.msra.mxu0 %v1047
    %v1049 = vand.u32 %v168, 4294901760
    %1050 = vmatprep.subr.mxu0 %v1049
    %v1051 = vand.u32 %v167, 4294901760
    %1052 = vmatpush1.msra.mxu0 %v1051
    %v1053 = vand.u32 %v201, 4294901760
    %1054 = vmatprep.subr.mxu0 %v1053
    %v1055 = vand.u32 %v200, 4294901760
    %1056 = vmatpush1.msra.mxu0 %v1055
    %v1057 = vand.u32 %v58, 4294901760
    %1058 = vmatprep.subr.mxu0 %v1057
    %v1059 = vand.u32 %v57, 4294901760
    %1060 = vmatpush1.msra.mxu0 %v1059
    %v1061 = vand.u32 %v234, 4294901760
    %1062 = vmatprep.subr.mxu0 %v1061
    %v1063 = vand.u32 %v233, 4294901760
    %1064 = vmatpush1.msra.mxu0 %v1063
    %v1065 = vand.u32 %v267, 4294901760
    %1066 = vmatprep.subr.mxu0 %v1065
    %v1067 = vand.u32 %v266, 4294901760
    %1068 = vmatpush1.msra.mxu0 %v1067
    %v1069 = vand.u32 %v300, 4294901760
    %1070 = vmatprep.subr.mxu0 %v1069
    %v1071 = vand.u32 %v299, 4294901760
    %1072 = vmatpush1.msra.mxu0 %v1071
    %v1073 = vand.u32 %v333, 4294901760
    %1074 = vmatprep.subr.mxu0 %v1073
    %v1075 = vand.u32 %v332, 4294901760
    %1076 = vmatpush1.msra.mxu0 %v1075
    %v1077 = vand.u32 %v340, 4294901760
    %1078 = vmatprep.subr.mxu0 %v1077
    %v1079 = vand.u32 %v340, 4294901760
    %1080 = vmatpush1.msra.mxu0 %v1079
    %1081 = vmatprep.subr.mxu0 0.0
    %1082 = vmatpush1.msra.mxu0 0.0
    %1083 = vmatprep.subr.mxu0 0.0
    %1084 = vmatpush1.msra.mxu0 0.0
    %1085 = vmatprep.subr.mxu0 0.0
    %1086 = vmatpush1.msra.mxu0 0.0
    %1087 = vmatprep.subr.mxu0 0.0
    %1088 = vmatpush1.msra.mxu0 0.0
    %1089 = vmatprep.subr.mxu0 0.0
    %1090 = vmatpush1.msra.mxu0 0.0
    %1091 = vmatprep.subr.mxu0 0.0
    %1092 = vmatpush1.msra.mxu0 0.0
    %1093 = vmatprep.subr.mxu0 0.0
    %1094 = vmatpush1.msra.mxu0 0.0
    %1095 = vmatprep.subr.mxu0 0.0
    %1096 = vmatpush1.msra.mxu0 0.0
    %1097 = vmatprep.subr.mxu0 0.0
    %1098 = vmatpush1.msra.mxu0 0.0
    %1099 = vmatprep.subr.mxu0 0.0
    %1100 = vmatpush1.msra.mxu0 0.0
    %1101 = vmatprep.subr.mxu0 0.0
    %1102 = vmatpush1.msra.mxu0 0.0
    %1103 = vmatprep.subr.mxu0 0.0
    %1104 = vmatpush1.msra.mxu0 0.0
    %1105 = vmatprep.subr.mxu0 0.0
    %1106 = vmatpush1.msra.mxu0 0.0
    %1107 = vmatprep.subr.mxu0 0.0
    %1108 = vmatpush1.msra.mxu0 0.0
    %1109 = vmatprep.subr.mxu0 0.0
    %1110 = vmatpush1.msra.mxu0 0.0
    %1111 = vmatprep.subr.mxu0 0.0
    %1112 = vmatpush1.msra.mxu0 0.0
    %1113 = vmatprep.subr.mxu0 0.0
    %1114 = vmatpush1.msra.mxu0 0.0
    %1115 = vmatprep.subr.mxu0 0.0
    %1116 = vmatpush1.msra.mxu0 0.0
    %1117 = vmatprep.subr.mxu0 0.0
    %1118 = vmatpush1.msra.mxu0 0.0
    %1119 = vmatprep.subr.mxu0 0.0
    %1120 = vmatpush1.msra.mxu0 0.0
    %1121 = vmatprep.subr.mxu0 0.0
    %1122 = vmatpush1.msra.mxu0 0.0
    %1123 = vmatprep.subr.mxu0 0.0
    %1124 = vmatpush1.msra.mxu0 0.0
    %1125 = vmatprep.mubr.f32.mxu0 0.0
    %v1126 = vand.u32 %v336, 4294901760
    %v1127 = vsub.f32 %v336, %v1126
    %v1128 = vand.u32 %v1127, 4294901760
    %v1129 = vsub.f32 %v1127, %v1128
    %v1130 = vand.u32 %v1129, 4294901760
    %1131 = vmatmul.mubr.f32.gmra.mrb[0].mxu0 %v1130
    %v1132 = vpop.f32.mrb[0].mxu0
    %v1133 = vadd.f32 0.0, %v1132
    %v1134 = vpop.f32.mrb[0].mxu0
    %v1135 = vadd.f32 0.0, %v1134
    %1136 = vdwg.mxu0
    %v1137 = vand.u32 %v102, 4294901760
    %v1138 = vsub.f32 %v102, %v1137
    %v1139 = vand.u32 %v1138, 4294901760
    %v1140 = vsub.f32 %v1138, %v1139
    %v1141 = vand.u32 %v1140, 4294901760
    %1142 = vmatprep.subr.mxu0 %v1141
    %v1143 = vand.u32 %v101, 4294901760
    %v1144 = vsub.f32 %v101, %v1143
    %v1145 = vand.u32 %v1144, 4294901760
    %v1146 = vsub.f32 %v1144, %v1145
    %v1147 = vand.u32 %v1146, 4294901760
    %1148 = vmatpush1.msra.mxu0 %v1147
    %v1149 = vand.u32 %v135, 4294901760
    %v1150 = vsub.f32 %v135, %v1149
    %v1151 = vand.u32 %v1150, 4294901760
    %v1152 = vsub.f32 %v1150, %v1151
    %v1153 = vand.u32 %v1152, 4294901760
    %1154 = vmatprep.subr.mxu0 %v1153
    %v1155 = vand.u32 %v134, 4294901760
    %v1156 = vsub.f32 %v134, %v1155
    %v1157 = vand.u32 %v1156, 4294901760
    %v1158 = vsub.f32 %v1156, %v1157
    %v1159 = vand.u32 %v1158, 4294901760
    %1160 = vmatpush1.msra.mxu0 %v1159
    %v1161 = vand.u32 %v168, 4294901760
    %v1162 = vsub.f32 %v168, %v1161
    %v1163 = vand.u32 %v1162, 4294901760
    %v1164 = vsub.f32 %v1162, %v1163
    %v1165 = vand.u32 %v1164, 4294901760
    %1166 = vmatprep.subr.mxu0 %v1165
    %v1167 = vand.u32 %v167, 4294901760
    %v1168 = vsub.f32 %v167, %v1167
    %v1169 = vand.u32 %v1168, 4294901760
    %v1170 = vsub.f32 %v1168, %v1169
    %v1171 = vand.u32 %v1170, 4294901760
    %1172 = vmatpush1.msra.mxu0 %v1171
    %v1173 = vand.u32 %v201, 4294901760
    %v1174 = vsub.f32 %v201, %v1173
    %v1175 = vand.u32 %v1174, 4294901760
    %v1176 = vsub.f32 %v1174, %v1175
    %v1177 = vand.u32 %v1176, 4294901760
    %1178 = vmatprep.subr.mxu0 %v1177
    %v1179 = vand.u32 %v200, 4294901760
    %v1180 = vsub.f32 %v200, %v1179
    %v1181 = vand.u32 %v1180, 4294901760
    %v1182 = vsub.f32 %v1180, %v1181
    %v1183 = vand.u32 %v1182, 4294901760
    %1184 = vmatpush1.msra.mxu0 %v1183
    %v1185 = vand.u32 %v58, 4294901760
    %v1186 = vsub.f32 %v58, %v1185
    %v1187 = vand.u32 %v1186, 4294901760
    %v1188 = vsub.f32 %v1186, %v1187
    %v1189 = vand.u32 %v1188, 4294901760
    %1190 = vmatprep.subr.mxu0 %v1189
    %v1191 = vand.u32 %v57, 4294901760
    %v1192 = vsub.f32 %v57, %v1191
    %v1193 = vand.u32 %v1192, 4294901760
    %v1194 = vsub.f32 %v1192, %v1193
    %v1195 = vand.u32 %v1194, 4294901760
    %1196 = vmatpush1.msra.mxu0 %v1195
    %v1197 = vand.u32 %v234, 4294901760
    %v1198 = vsub.f32 %v234, %v1197
    %v1199 = vand.u32 %v1198, 4294901760
    %v1200 = vsub.f32 %v1198, %v1199
    %v1201 = vand.u32 %v1200, 4294901760
    %1202 = vmatprep.subr.mxu0 %v1201
    %v1203 = vand.u32 %v233, 4294901760
    %v1204 = vsub.f32 %v233, %v1203
    %v1205 = vand.u32 %v1204, 4294901760
    %v1206 = vsub.f32 %v1204, %v1205
    %v1207 = vand.u32 %v1206, 4294901760
    %1208 = vmatpush1.msra.mxu0 %v1207
    %v1209 = vand.u32 %v267, 4294901760
    %v1210 = vsub.f32 %v267, %v1209
    %v1211 = vand.u32 %v1210, 4294901760
    %v1212 = vsub.f32 %v1210, %v1211
    %v1213 = vand.u32 %v1212, 4294901760
    %1214 = vmatprep.subr.mxu0 %v1213
    %v1215 = vand.u32 %v266, 4294901760
    %v1216 = vsub.f32 %v266, %v1215
    %v1217 = vand.u32 %v1216, 4294901760
    %v1218 = vsub.f32 %v1216, %v1217
    %v1219 = vand.u32 %v1218, 4294901760
    %1220 = vmatpush1.msra.mxu0 %v1219
    %v1221 = vand.u32 %v300, 4294901760
    %v1222 = vsub.f32 %v300, %v1221
    %v1223 = vand.u32 %v1222, 4294901760
    %v1224 = vsub.f32 %v1222, %v1223
    %v1225 = vand.u32 %v1224, 4294901760
    %1226 = vmatprep.subr.mxu0 %v1225
    %v1227 = vand.u32 %v299, 4294901760
    %v1228 = vsub.f32 %v299, %v1227
    %v1229 = vand.u32 %v1228, 4294901760
    %v1230 = vsub.f32 %v1228, %v1229
    %v1231 = vand.u32 %v1230, 4294901760
    %1232 = vmatpush1.msra.mxu0 %v1231
    %v1233 = vand.u32 %v333, 4294901760
    %v1234 = vsub.f32 %v333, %v1233
    %v1235 = vand.u32 %v1234, 4294901760
    %v1236 = vsub.f32 %v1234, %v1235
    %v1237 = vand.u32 %v1236, 4294901760
    %1238 = vmatprep.subr.mxu0 %v1237
    %v1239 = vand.u32 %v332, 4294901760
    %v1240 = vsub.f32 %v332, %v1239
    %v1241 = vand.u32 %v1240, 4294901760
    %v1242 = vsub.f32 %v1240, %v1241
    %v1243 = vand.u32 %v1242, 4294901760
    %1244 = vmatpush1.msra.mxu0 %v1243
    %v1245 = vand.u32 %v340, 4294901760
    %v1246 = vsub.f32 %v340, %v1245
    %v1247 = vand.u32 %v1246, 4294901760
    %v1248 = vsub.f32 %v1246, %v1247
    %v1249 = vand.u32 %v1248, 4294901760
    %1250 = vmatprep.subr.mxu0 %v1249
    %v1251 = vand.u32 %v340, 4294901760
    %v1252 = vsub.f32 %v340, %v1251
    %v1253 = vand.u32 %v1252, 4294901760
    %v1254 = vsub.f32 %v1252, %v1253
    %v1255 = vand.u32 %v1254, 4294901760
    %1256 = vmatpush1.msra.mxu0 %v1255
    %1257 = vmatprep.subr.mxu0 0.0
    %1258 = vmatpush1.msra.mxu0 0.0
    %1259 = vmatprep.subr.mxu0 0.0
    %1260 = vmatpush1.msra.mxu0 0.0
    %1261 = vmatprep.subr.mxu0 0.0
    %1262 = vmatpush1.msra.mxu0 0.0
    %1263 = vmatprep.subr.mxu0 0.0
    %1264 = vmatpush1.msra.mxu0 0.0
    %1265 = vmatprep.subr.mxu0 0.0
    %1266 = vmatpush1.msra.mxu0 0.0
    %1267 = vmatprep.subr.mxu0 0.0
    %1268 = vmatpush1.msra.mxu0 0.0
    %1269 = vmatprep.subr.mxu0 0.0
    %1270 = vmatpush1.msra.mxu0 0.0
    %1271 = vmatprep.subr.mxu0 0.0
    %1272 = vmatpush1.msra.mxu0 0.0
    %1273 = vmatprep.subr.mxu0 0.0
    %1274 = vmatpush1.msra.mxu0 0.0
    %1275 = vmatprep.subr.mxu0 0.0
    %1276 = vmatpush1.msra.mxu0 0.0
    %1277 = vmatprep.subr.mxu0 0.0
    %1278 = vmatpush1.msra.mxu0 0.0
    %1279 = vmatprep.subr.mxu0 0.0
    %1280 = vmatpush1.msra.mxu0 0.0
    %1281 = vmatprep.subr.mxu0 0.0
    %1282 = vmatpush1.msra.mxu0 0.0
    %1283 = vmatprep.subr.mxu0 0.0
    %1284 = vmatpush1.msra.mxu0 0.0
    %1285 = vmatprep.subr.mxu0 0.0
    %1286 = vmatpush1.msra.mxu0 0.0
    %1287 = vmatprep.subr.mxu0 0.0
    %1288 = vmatpush1.msra.mxu0 0.0
    %1289 = vmatprep.subr.mxu0 0.0
    %1290 = vmatpush1.msra.mxu0 0.0
    %1291 = vmatprep.subr.mxu0 0.0
    %1292 = vmatpush1.msra.mxu0 0.0
    %1293 = vmatprep.subr.mxu0 0.0
    %1294 = vmatpush1.msra.mxu0 0.0
    %1295 = vmatprep.subr.mxu0 0.0
    %1296 = vmatpush1.msra.mxu0 0.0
    %1297 = vmatprep.subr.mxu0 0.0
    %1298 = vmatpush1.msra.mxu0 0.0
    %1299 = vmatprep.subr.mxu0 0.0
    %1300 = vmatpush1.msra.mxu0 0.0
    %1301 = vmatprep.mubr.f32.mxu0 0.0
    %v1302 = vand.u32 %v336, 4294901760
    %1303 = vmatmul.mubr.f32.gmra.mrb[0].mxu0 %v1302
    %v1304 = vpop.f32.mrb[0].mxu0
    %v1305 = vadd.f32 %v1133, %v1304
    %v1306 = vpop.f32.mrb[0].mxu0
    %v1307 = vadd.f32 %v1135, %v1306
    %1308 = vdwg.mxu0
    %v1309 = vand.u32 %v102, 4294901760
    %v1310 = vsub.f32 %v102, %v1309
    %1311 = vmatprep.subr.mxu0 %v1310
    %v1312 = vand.u32 %v101, 4294901760
    %v1313 = vsub.f32 %v101, %v1312
    %1314 = vmatpush1.msra.mxu0 %v1313
    %v1315 = vand.u32 %v135, 4294901760
    %v1316 = vsub.f32 %v135, %v1315
    %1317 = vmatprep.subr.mxu0 %v1316
    %v1318 = vand.u32 %v134, 4294901760
    %v1319 = vsub.f32 %v134, %v1318
    %1320 = vmatpush1.msra.mxu0 %v1319
    %v1321 = vand.u32 %v168, 4294901760
    %v1322 = vsub.f32 %v168, %v1321
    %1323 = vmatprep.subr.mxu0 %v1322
    %v1324 = vand.u32 %v167, 4294901760
    %v1325 = vsub.f32 %v167, %v1324
    %1326 = vmatpush1.msra.mxu0 %v1325
    %v1327 = vand.u32 %v201, 4294901760
    %v1328 = vsub.f32 %v201, %v1327
    %1329 = vmatprep.subr.mxu0 %v1328
    %v1330 = vand.u32 %v200, 4294901760
    %v1331 = vsub.f32 %v200, %v1330
    %1332 = vmatpush1.msra.mxu0 %v1331
    %v1333 = vand.u32 %v58, 4294901760
    %v1334 = vsub.f32 %v58, %v1333
    %1335 = vmatprep.subr.mxu0 %v1334
    %v1336 = vand.u32 %v57, 4294901760
    %v1337 = vsub.f32 %v57, %v1336
    %1338 = vmatpush1.msra.mxu0 %v1337
    %v1339 = vand.u32 %v234, 4294901760
    %v1340 = vsub.f32 %v234, %v1339
    %1341 = vmatprep.subr.mxu0 %v1340
    %v1342 = vand.u32 %v233, 4294901760
    %v1343 = vsub.f32 %v233, %v1342
    %1344 = vmatpush1.msra.mxu0 %v1343
    %v1345 = vand.u32 %v267, 4294901760
    %v1346 = vsub.f32 %v267, %v1345
    %1347 = vmatprep.subr.mxu0 %v1346
    %v1348 = vand.u32 %v266, 4294901760
    %v1349 = vsub.f32 %v266, %v1348
    %1350 = vmatpush1.msra.mxu0 %v1349
    %v1351 = vand.u32 %v300, 4294901760
    %v1352 = vsub.f32 %v300, %v1351
    %1353 = vmatprep.subr.mxu0 %v1352
    %v1354 = vand.u32 %v299, 4294901760
    %v1355 = vsub.f32 %v299, %v1354
    %1356 = vmatpush1.msra.mxu0 %v1355
    %v1357 = vand.u32 %v333, 4294901760
    %v1358 = vsub.f32 %v333, %v1357
    %1359 = vmatprep.subr.mxu0 %v1358
    %v1360 = vand.u32 %v332, 4294901760
    %v1361 = vsub.f32 %v332, %v1360
    %1362 = vmatpush1.msra.mxu0 %v1361
    %v1363 = vand.u32 %v340, 4294901760
    %v1364 = vsub.f32 %v340, %v1363
    %1365 = vmatprep.subr.mxu0 %v1364
    %v1366 = vand.u32 %v340, 4294901760
    %v1367 = vsub.f32 %v340, %v1366
    %1368 = vmatpush1.msra.mxu0 %v1367
    %1369 = vmatprep.subr.mxu0 0.0
    %1370 = vmatpush1.msra.mxu0 0.0
    %1371 = vmatprep.subr.mxu0 0.0
    %1372 = vmatpush1.msra.mxu0 0.0
    %1373 = vmatprep.subr.mxu0 0.0
    %1374 = vmatpush1.msra.mxu0 0.0
    %1375 = vmatprep.subr.mxu0 0.0
    %1376 = vmatpush1.msra.mxu0 0.0
    %1377 = vmatprep.subr.mxu0 0.0
    %1378 = vmatpush1.msra.mxu0 0.0
    %1379 = vmatprep.subr.mxu0 0.0
    %1380 = vmatpush1.msra.mxu0 0.0
    %1381 = vmatprep.subr.mxu0 0.0
    %1382 = vmatpush1.msra.mxu0 0.0
    %1383 = vmatprep.subr.mxu0 0.0
    %1384 = vmatpush1.msra.mxu0 0.0
    %1385 = vmatprep.subr.mxu0 0.0
    %1386 = vmatpush1.msra.mxu0 0.0
    %1387 = vmatprep.subr.mxu0 0.0
    %1388 = vmatpush1.msra.mxu0 0.0
    %1389 = vmatprep.subr.mxu0 0.0
    %1390 = vmatpush1.msra.mxu0 0.0
    %1391 = vmatprep.subr.mxu0 0.0
    %1392 = vmatpush1.msra.mxu0 0.0
    %1393 = vmatprep.subr.mxu0 0.0
    %1394 = vmatpush1.msra.mxu0 0.0
    %1395 = vmatprep.subr.mxu0 0.0
    %1396 = vmatpush1.msra.mxu0 0.0
    %1397 = vmatprep.subr.mxu0 0.0
    %1398 = vmatpush1.msra.mxu0 0.0
    %1399 = vmatprep.subr.mxu0 0.0
    %1400 = vmatpush1.msra.mxu0 0.0
    %1401 = vmatprep.subr.mxu0 0.0
    %1402 = vmatpush1.msra.mxu0 0.0
    %1403 = vmatprep.subr.mxu0 0.0
    %1404 = vmatpush1.msra.mxu0 0.0
    %1405 = vmatprep.subr.mxu0 0.0
    %1406 = vmatpush1.msra.mxu0 0.0
    %1407 = vmatprep.subr.mxu0 0.0
    %1408 = vmatpush1.msra.mxu0 0.0
    %1409 = vmatprep.subr.mxu0 0.0
    %1410 = vmatpush1.msra.mxu0 0.0
    %1411 = vmatprep.subr.mxu0 0.0
    %1412 = vmatpush1.msra.mxu0 0.0
    %1413 = vmatprep.mubr.f32.mxu0 0.0
    %v1414 = vand.u32 %v336, 4294901760
    %v1415 = vsub.f32 %v336, %v1414
    %1416 = vmatmul.mubr.f32.gmra.mrb[0].mxu0 %v1415
    %v1417 = vpop.f32.mrb[0].mxu0
    %v1418 = vadd.f32 %v1305, %v1417
    %v1419 = vpop.f32.mrb[0].mxu0
    %v1420 = vadd.f32 %v1307, %v1419
    %1421 = vdwg.mxu0
    %v1422 = vand.u32 %v102, 4294901760
    %1423 = vmatprep.subr.mxu0 %v1422
    %v1424 = vand.u32 %v101, 4294901760
    %1425 = vmatpush1.msra.mxu0 %v1424
    %v1426 = vand.u32 %v135, 4294901760
    %1427 = vmatprep.subr.mxu0 %v1426
    %v1428 = vand.u32 %v134, 4294901760
    %1429 = vmatpush1.msra.mxu0 %v1428
    %v1430 = vand.u32 %v168, 4294901760
    %1431 = vmatprep.subr.mxu0 %v1430
    %v1432 = vand.u32 %v167, 4294901760
    %1433 = vmatpush1.msra.mxu0 %v1432
    %v1434 = vand.u32 %v201, 4294901760
    %1435 = vmatprep.subr.mxu0 %v1434
    %v1436 = vand.u32 %v200, 4294901760
    %1437 = vmatpush1.msra.mxu0 %v1436
    %v1438 = vand.u32 %v58, 4294901760
    %1439 = vmatprep.subr.mxu0 %v1438
    %v1440 = vand.u32 %v57, 4294901760
    %1441 = vmatpush1.msra.mxu0 %v1440
    %v1442 = vand.u32 %v234, 4294901760
    %1443 = vmatprep.subr.mxu0 %v1442
    %v1444 = vand.u32 %v233, 4294901760
    %1445 = vmatpush1.msra.mxu0 %v1444
    %v1446 = vand.u32 %v267, 4294901760
    %1447 = vmatprep.subr.mxu0 %v1446
    %v1448 = vand.u32 %v266, 4294901760
    %1449 = vmatpush1.msra.mxu0 %v1448
    %v1450 = vand.u32 %v300, 4294901760
    %1451 = vmatprep.subr.mxu0 %v1450
    %v1452 = vand.u32 %v299, 4294901760
    %1453 = vmatpush1.msra.mxu0 %v1452
    %v1454 = vand.u32 %v333, 4294901760
    %1455 = vmatprep.subr.mxu0 %v1454
    %v1456 = vand.u32 %v332, 4294901760
    %1457 = vmatpush1.msra.mxu0 %v1456
    %v1458 = vand.u32 %v340, 4294901760
    %1459 = vmatprep.subr.mxu0 %v1458
    %v1460 = vand.u32 %v340, 4294901760
    %1461 = vmatpush1.msra.mxu0 %v1460
    %1462 = vmatprep.subr.mxu0 0.0
    %1463 = vmatpush1.msra.mxu0 0.0
    %1464 = vmatprep.subr.mxu0 0.0
    %1465 = vmatpush1.msra.mxu0 0.0
    %1466 = vmatprep.subr.mxu0 0.0
    %1467 = vmatpush1.msra.mxu0 0.0
    %1468 = vmatprep.subr.mxu0 0.0
    %1469 = vmatpush1.msra.mxu0 0.0
    %1470 = vmatprep.subr.mxu0 0.0
    %1471 = vmatpush1.msra.mxu0 0.0
    %1472 = vmatprep.subr.mxu0 0.0
    %1473 = vmatpush1.msra.mxu0 0.0
    %1474 = vmatprep.subr.mxu0 0.0
    %1475 = vmatpush1.msra.mxu0 0.0
    %1476 = vmatprep.subr.mxu0 0.0
    %1477 = vmatpush1.msra.mxu0 0.0
    %1478 = vmatprep.subr.mxu0 0.0
    %1479 = vmatpush1.msra.mxu0 0.0
    %1480 = vmatprep.subr.mxu0 0.0
    %1481 = vmatpush1.msra.mxu0 0.0
    %1482 = vmatprep.subr.mxu0 0.0
    %1483 = vmatpush1.msra.mxu0 0.0
    %1484 = vmatprep.subr.mxu0 0.0
    %1485 = vmatpush1.msra.mxu0 0.0
    %1486 = vmatprep.subr.mxu0 0.0
    %1487 = vmatpush1.msra.mxu0 0.0
    %1488 = vmatprep.subr.mxu0 0.0
    %1489 = vmatpush1.msra.mxu0 0.0
    %1490 = vmatprep.subr.mxu0 0.0
    %1491 = vmatpush1.msra.mxu0 0.0
    %1492 = vmatprep.subr.mxu0 0.0
    %1493 = vmatpush1.msra.mxu0 0.0
    %1494 = vmatprep.subr.mxu0 0.0
    %1495 = vmatpush1.msra.mxu0 0.0
    %1496 = vmatprep.subr.mxu0 0.0
    %1497 = vmatpush1.msra.mxu0 0.0
    %1498 = vmatprep.subr.mxu0 0.0
    %1499 = vmatpush1.msra.mxu0 0.0
    %1500 = vmatprep.subr.mxu0 0.0
    %1501 = vmatpush1.msra.mxu0 0.0
    %1502 = vmatprep.subr.mxu0 0.0
    %1503 = vmatpush1.msra.mxu0 0.0
    %1504 = vmatprep.subr.mxu0 0.0
    %1505 = vmatpush1.msra.mxu0 0.0
    %1506 = vmatprep.mubr.f32.mxu0 0.0
    %v1507 = vand.u32 %v336, 4294901760
    %v1508 = vsub.f32 %v336, %v1507
    %v1509 = vand.u32 %v1508, 4294901760
    %1510 = vmatmul.mubr.f32.gmra.mrb[0].mxu0 %v1509
    %v1511 = vpop.f32.mrb[0].mxu0
    %v1512 = vadd.f32 %v1418, %v1511
    %v1513 = vpop.f32.mrb[0].mxu0
    %v1514 = vadd.f32 %v1420, %v1513
    %1515 = vdwg.mxu0
    %v1516 = vand.u32 %v102, 4294901760
    %v1517 = vsub.f32 %v102, %v1516
    %v1518 = vand.u32 %v1517, 4294901760
    %1519 = vmatprep.subr.mxu0 %v1518
    %v1520 = vand.u32 %v101, 4294901760
    %v1521 = vsub.f32 %v101, %v1520
    %v1522 = vand.u32 %v1521, 4294901760
    %1523 = vmatpush1.msra.mxu0 %v1522
    %v1524 = vand.u32 %v135, 4294901760
    %v1525 = vsub.f32 %v135, %v1524
    %v1526 = vand.u32 %v1525, 4294901760
    %1527 = vmatprep.subr.mxu0 %v1526
    %v1528 = vand.u32 %v134, 4294901760
    %v1529 = vsub.f32 %v134, %v1528
    %v1530 = vand.u32 %v1529, 4294901760
    %1531 = vmatpush1.msra.mxu0 %v1530
    %v1532 = vand.u32 %v168, 4294901760
    %v1533 = vsub.f32 %v168, %v1532
    %v1534 = vand.u32 %v1533, 4294901760
    %1535 = vmatprep.subr.mxu0 %v1534
    %v1536 = vand.u32 %v167, 4294901760
    %v1537 = vsub.f32 %v167, %v1536
    %v1538 = vand.u32 %v1537, 4294901760
    %1539 = vmatpush1.msra.mxu0 %v1538
    %v1540 = vand.u32 %v201, 4294901760
    %v1541 = vsub.f32 %v201, %v1540
    %v1542 = vand.u32 %v1541, 4294901760
    %1543 = vmatprep.subr.mxu0 %v1542
    %v1544 = vand.u32 %v200, 4294901760
    %v1545 = vsub.f32 %v200, %v1544
    %v1546 = vand.u32 %v1545, 4294901760
    %1547 = vmatpush1.msra.mxu0 %v1546
    %v1548 = vand.u32 %v58, 4294901760
    %v1549 = vsub.f32 %v58, %v1548
    %v1550 = vand.u32 %v1549, 4294901760
    %1551 = vmatprep.subr.mxu0 %v1550
    %v1552 = vand.u32 %v57, 4294901760
    %v1553 = vsub.f32 %v57, %v1552
    %v1554 = vand.u32 %v1553, 4294901760
    %1555 = vmatpush1.msra.mxu0 %v1554
    %v1556 = vand.u32 %v234, 4294901760
    %v1557 = vsub.f32 %v234, %v1556
    %v1558 = vand.u32 %v1557, 4294901760
    %1559 = vmatprep.subr.mxu0 %v1558
    %v1560 = vand.u32 %v233, 4294901760
    %v1561 = vsub.f32 %v233, %v1560
    %v1562 = vand.u32 %v1561, 4294901760
    %1563 = vmatpush1.msra.mxu0 %v1562
    %v1564 = vand.u32 %v267, 4294901760
    %v1565 = vsub.f32 %v267, %v1564
    %v1566 = vand.u32 %v1565, 4294901760
    %1567 = vmatprep.subr.mxu0 %v1566
    %v1568 = vand.u32 %v266, 4294901760
    %v1569 = vsub.f32 %v266, %v1568
    %v1570 = vand.u32 %v1569, 4294901760
    %1571 = vmatpush1.msra.mxu0 %v1570
    %v1572 = vand.u32 %v300, 4294901760
    %v1573 = vsub.f32 %v300, %v1572
    %v1574 = vand.u32 %v1573, 4294901760
    %1575 = vmatprep.subr.mxu0 %v1574
    %v1576 = vand.u32 %v299, 4294901760
    %v1577 = vsub.f32 %v299, %v1576
    %v1578 = vand.u32 %v1577, 4294901760
    %1579 = vmatpush1.msra.mxu0 %v1578
    %v1580 = vand.u32 %v333, 4294901760
    %v1581 = vsub.f32 %v333, %v1580
    %v1582 = vand.u32 %v1581, 4294901760
    %1583 = vmatprep.subr.mxu0 %v1582
    %v1584 = vand.u32 %v332, 4294901760
    %v1585 = vsub.f32 %v332, %v1584
    %v1586 = vand.u32 %v1585, 4294901760
    %1587 = vmatpush1.msra.mxu0 %v1586
    %v1588 = vand.u32 %v340, 4294901760
    %v1589 = vsub.f32 %v340, %v1588
    %v1590 = vand.u32 %v1589, 4294901760
    %1591 = vmatprep.subr.mxu0 %v1590
    %v1592 = vand.u32 %v340, 4294901760
    %v1593 = vsub.f32 %v340, %v1592
    %v1594 = vand.u32 %v1593, 4294901760
    %1595 = vmatpush1.msra.mxu0 %v1594
    %1596 = vmatprep.subr.mxu0 0.0
    %1597 = vmatpush1.msra.mxu0 0.0
    %1598 = vmatprep.subr.mxu0 0.0
    %1599 = vmatpush1.msra.mxu0 0.0
    %1600 = vmatprep.subr.mxu0 0.0
    %1601 = vmatpush1.msra.mxu0 0.0
    %1602 = vmatprep.subr.mxu0 0.0
    %1603 = vmatpush1.msra.mxu0 0.0
    %1604 = vmatprep.subr.mxu0 0.0
    %1605 = vmatpush1.msra.mxu0 0.0
    %1606 = vmatprep.subr.mxu0 0.0
    %1607 = vmatpush1.msra.mxu0 0.0
    %1608 = vmatprep.subr.mxu0 0.0
    %1609 = vmatpush1.msra.mxu0 0.0
    %1610 = vmatprep.subr.mxu0 0.0
    %1611 = vmatpush1.msra.mxu0 0.0
    %1612 = vmatprep.subr.mxu0 0.0
    %1613 = vmatpush1.msra.mxu0 0.0
    %1614 = vmatprep.subr.mxu0 0.0
    %1615 = vmatpush1.msra.mxu0 0.0
    %1616 = vmatprep.subr.mxu0 0.0
    %1617 = vmatpush1.msra.mxu0 0.0
    %1618 = vmatprep.subr.mxu0 0.0
    %1619 = vmatpush1.msra.mxu0 0.0
    %1620 = vmatprep.subr.mxu0 0.0
    %1621 = vmatpush1.msra.mxu0 0.0
    %1622 = vmatprep.subr.mxu0 0.0
    %1623 = vmatpush1.msra.mxu0 0.0
    %1624 = vmatprep.subr.mxu0 0.0
    %1625 = vmatpush1.msra.mxu0 0.0
    %1626 = vmatprep.subr.mxu0 0.0
    %1627 = vmatpush1.msra.mxu0 0.0
    %1628 = vmatprep.subr.mxu0 0.0
    %1629 = vmatpush1.msra.mxu0 0.0
    %1630 = vmatprep.subr.mxu0 0.0
    %1631 = vmatpush1.msra.mxu0 0.0
    %1632 = vmatprep.subr.mxu0 0.0
    %1633 = vmatpush1.msra.mxu0 0.0
    %1634 = vmatprep.subr.mxu0 0.0
    %1635 = vmatpush1.msra.mxu0 0.0
    %1636 = vmatprep.subr.mxu0 0.0
    %1637 = vmatpush1.msra.mxu0 0.0
    %1638 = vmatprep.subr.mxu0 0.0
    %1639 = vmatpush1.msra.mxu0 0.0
    %1640 = vmatprep.mubr.f32.mxu0 0.0
    %v1641 = vand.u32 %v336, 4294901760
    %1642 = vmatmul.mubr.f32.gmra.mrb[0].mxu0 %v1641
    %v1643 = vpop.f32.mrb[0].mxu0
    %v1644 = vadd.f32 %v1512, %v1643
    %v1645 = vpop.f32.mrb[0].mxu0
    %v1646 = vadd.f32 %v1514, %v1645
    %1647 = vdwg.mxu0
    %v1648 = vand.u32 %v102, 4294901760
    %1649 = vmatprep.subr.mxu0 %v1648
    %v1650 = vand.u32 %v101, 4294901760
    %1651 = vmatpush1.msra.mxu0 %v1650
    %v1652 = vand.u32 %v135, 4294901760
    %1653 = vmatprep.subr.mxu0 %v1652
    %v1654 = vand.u32 %v134, 4294901760
    %1655 = vmatpush1.msra.mxu0 %v1654
    %v1656 = vand.u32 %v168, 4294901760
    %1657 = vmatprep.subr.mxu0 %v1656
    %v1658 = vand.u32 %v167, 4294901760
    %1659 = vmatpush1.msra.mxu0 %v1658
    %v1660 = vand.u32 %v201, 4294901760
    %1661 = vmatprep.subr.mxu0 %v1660
    %v1662 = vand.u32 %v200, 4294901760
    %1663 = vmatpush1.msra.mxu0 %v1662
    %v1664 = vand.u32 %v58, 4294901760
    %1665 = vmatprep.subr.mxu0 %v1664
    %v1666 = vand.u32 %v57, 4294901760
    %1667 = vmatpush1.msra.mxu0 %v1666
    %v1668 = vand.u32 %v234, 4294901760
    %1669 = vmatprep.subr.mxu0 %v1668
    %v1670 = vand.u32 %v233, 4294901760
    %1671 = vmatpush1.msra.mxu0 %v1670
    %v1672 = vand.u32 %v267, 4294901760
    %1673 = vmatprep.subr.mxu0 %v1672
    %v1674 = vand.u32 %v266, 4294901760
    %1675 = vmatpush1.msra.mxu0 %v1674
    %v1676 = vand.u32 %v300, 4294901760
    %1677 = vmatprep.subr.mxu0 %v1676
    %v1678 = vand.u32 %v299, 4294901760
    %1679 = vmatpush1.msra.mxu0 %v1678
    %v1680 = vand.u32 %v333, 4294901760
    %1681 = vmatprep.subr.mxu0 %v1680
    %v1682 = vand.u32 %v332, 4294901760
    %1683 = vmatpush1.msra.mxu0 %v1682
    %v1684 = vand.u32 %v340, 4294901760
    %1685 = vmatprep.subr.mxu0 %v1684
    %v1686 = vand.u32 %v340, 4294901760
    %1687 = vmatpush1.msra.mxu0 %v1686
    %1688 = vmatprep.subr.mxu0 0.0
    %1689 = vmatpush1.msra.mxu0 0.0
    %1690 = vmatprep.subr.mxu0 0.0
    %1691 = vmatpush1.msra.mxu0 0.0
    %1692 = vmatprep.subr.mxu0 0.0
    %1693 = vmatpush1.msra.mxu0 0.0
    %1694 = vmatprep.subr.mxu0 0.0
    %1695 = vmatpush1.msra.mxu0 0.0
    %1696 = vmatprep.subr.mxu0 0.0
    %1697 = vmatpush1.msra.mxu0 0.0
    %1698 = vmatprep.subr.mxu0 0.0
    %1699 = vmatpush1.msra.mxu0 0.0
    %1700 = vmatprep.subr.mxu0 0.0
    %1701 = vmatpush1.msra.mxu0 0.0
    %1702 = vmatprep.subr.mxu0 0.0
    %1703 = vmatpush1.msra.mxu0 0.0
    %1704 = vmatprep.subr.mxu0 0.0
    %1705 = vmatpush1.msra.mxu0 0.0
    %1706 = vmatprep.subr.mxu0 0.0
    %1707 = vmatpush1.msra.mxu0 0.0
    %1708 = vmatprep.subr.mxu0 0.0
    %1709 = vmatpush1.msra.mxu0 0.0
    %1710 = vmatprep.subr.mxu0 0.0
    %1711 = vmatpush1.msra.mxu0 0.0
    %1712 = vmatprep.subr.mxu0 0.0
    %1713 = vmatpush1.msra.mxu0 0.0
    %1714 = vmatprep.subr.mxu0 0.0
    %1715 = vmatpush1.msra.mxu0 0.0
    %1716 = vmatprep.subr.mxu0 0.0
    %1717 = vmatpush1.msra.mxu0 0.0
    %1718 = vmatprep.subr.mxu0 0.0
    %1719 = vmatpush1.msra.mxu0 0.0
    %1720 = vmatprep.subr.mxu0 0.0
    %1721 = vmatpush1.msra.mxu0 0.0
    %1722 = vmatprep.subr.mxu0 0.0
    %1723 = vmatpush1.msra.mxu0 0.0
    %1724 = vmatprep.subr.mxu0 0.0
    %1725 = vmatpush1.msra.mxu0 0.0
    %1726 = vmatprep.subr.mxu0 0.0
    %1727 = vmatpush1.msra.mxu0 0.0
    %1728 = vmatprep.subr.mxu0 0.0
    %1729 = vmatpush1.msra.mxu0 0.0
    %1730 = vmatprep.subr.mxu0 0.0
    %1731 = vmatpush1.msra.mxu0 0.0
    %1732 = vmatprep.mubr.f32.mxu0 0.0
    %v1733 = vand.u32 %v336, 4294901760
    %1734 = vmatmul.mubr.f32.gmra.mrb[0].mxu0 %v1733
    %v1735 = vpop.f32.mrb[0].mxu0
    %v1736 = vadd.f32 %v1644, %v1735
    %v1737 = vpop.f32.mrb[0].mxu0
    %v1738 = vadd.f32 %v1646, %v1737
    %1739 = vdwg.mxu0
    %v1740 = vmax.f32 %v1037, 0.0
    %v1741 = vmax.f32 %v1039, 0.0
    %v1742 = vmax.f32 %v1736, 0.0
    %v1743 = vmax.f32 %v1738, 0.0
    %v1744 = vld [vmem:[%s3] sm:$0xff]
    %1745 = vrot.lane.b32.xlu0 %v1740, 17
    %v1746 = vpop.permute.xlu0 %1745
    %1747 = vrot.lane.b32.xlu0 %v1741, 17
    %v1748 = vpop.permute.xlu0 %1747
    %1749 = vrot.lane.b32.xlu0 %v1742, 17
    %v1750 = vpop.permute.xlu0 %1749
    %1751 = vrot.lane.b32.xlu0 %v1743, 17
    %v1752 = vpop.permute.xlu0 %1751
    %v1753 = vsel %vm78, %v1750, %v1752
    %v1754 = vsel %vm78, %v1748, %v1750
    %v1755 = vsel %vm78, %v1746, %v1748
    %v1756 = vsel %vm78, %v1752, %v1746
    %v1757 = vmul.f32 %v1756, %v86
    %v1758 = vmul.f32 %v1755, %v90
    %v1759 = vmul.f32 %v1754, %v94
    %v1760 = vmul.f32 %v1753, %v98
    %1761 = vrot.lane.b32.xlu0 %v1740, 16
    %v1762 = vpop.permute.xlu0 %1761
    %1763 = vrot.lane.b32.xlu0 %v1741, 16
    %v1764 = vpop.permute.xlu0 %1763
    %1765 = vrot.lane.b32.xlu0 %v1742, 16
    %v1766 = vpop.permute.xlu0 %1765
    %1767 = vrot.lane.b32.xlu0 %v1743, 16
    %v1768 = vpop.permute.xlu0 %1767
    %v1769 = vsel %vm111, %v1766, %v1768
    %v1770 = vsel %vm111, %v1764, %v1766
    %v1771 = vsel %vm111, %v1762, %v1764
    %v1772 = vsel %vm111, %v1768, %v1762
    %v1773 = vmul.f32 %v1772, %v119
    %v1774 = vmul.f32 %v1771, %v123
    %v1775 = vmul.f32 %v1770, %v127
    %v1776 = vmul.f32 %v1769, %v131
    %1777 = vrot.lane.b32.xlu0 %v1740, 15
    %v1778 = vpop.permute.xlu0 %1777
    %1779 = vrot.lane.b32.xlu0 %v1741, 15
    %v1780 = vpop.permute.xlu0 %1779
    %1781 = vrot.lane.b32.xlu0 %v1742, 15
    %v1782 = vpop.permute.xlu0 %1781
    %1783 = vrot.lane.b32.xlu0 %v1743, 15
    %v1784 = vpop.permute.xlu0 %1783
    %v1785 = vsel %vm144, %v1782, %v1784
    %v1786 = vsel %vm144, %v1780, %v1782
    %v1787 = vsel %vm144, %v1778, %v1780
    %v1788 = vsel %vm144, %v1784, %v1778
    %v1789 = vmul.f32 %v1788, %v152
    %v1790 = vmul.f32 %v1787, %v156
    %v1791 = vmul.f32 %v1786, %v160
    %v1792 = vmul.f32 %v1785, %v164
    %1793 = vrot.lane.b32.xlu0 %v1740, 1
    %v1794 = vpop.permute.xlu0 %1793
    %1795 = vrot.lane.b32.xlu0 %v1741, 1
    %v1796 = vpop.permute.xlu0 %1795
    %1797 = vrot.lane.b32.xlu0 %v1742, 1
    %v1798 = vpop.permute.xlu0 %1797
    %1799 = vrot.lane.b32.xlu0 %v1743, 1
    %v1800 = vpop.permute.xlu0 %1799
    %v1801 = vsel %vm177, %v1798, %v1800
    %v1802 = vsel %vm177, %v1796, %v1798
    %v1803 = vsel %vm177, %v1794, %v1796
    %v1804 = vsel %vm177, %v1800, %v1794
    %v1805 = vmul.f32 %v1804, %v185
    %v1806 = vmul.f32 %v1803, %v189
    %v1807 = vmul.f32 %v1802, %v193
    %v1808 = vmul.f32 %v1801, %v197
    %1809 = vrot.lane.b32.xlu0 %v1740, 127
    %v1810 = vpop.permute.xlu0 %1809
    %1811 = vrot.lane.b32.xlu0 %v1741, 127
    %v1812 = vpop.permute.xlu0 %1811
    %1813 = vrot.lane.b32.xlu0 %v1742, 127
    %v1814 = vpop.permute.xlu0 %1813
    %1815 = vrot.lane.b32.xlu0 %v1743, 127
    %v1816 = vpop.permute.xlu0 %1815
    %v1817 = vsel %vm210, %v1814, %v1816
    %v1818 = vsel %vm210, %v1812, %v1814
    %v1819 = vsel %vm210, %v1810, %v1812
    %v1820 = vsel %vm210, %v1816, %v1810
    %v1821 = vmul.f32 %v1819, %v218
    %v1822 = vmul.f32 %v1818, %v222
    %v1823 = vmul.f32 %v1817, %v226
    %v1824 = vmul.f32 %v1820, %v230
    %1825 = vrot.lane.b32.xlu0 %v1740, 113
    %v1826 = vpop.permute.xlu0 %1825
    %1827 = vrot.lane.b32.xlu0 %v1741, 113
    %v1828 = vpop.permute.xlu0 %1827
    %1829 = vrot.lane.b32.xlu0 %v1742, 113
    %v1830 = vpop.permute.xlu0 %1829
    %1831 = vrot.lane.b32.xlu0 %v1743, 113
    %v1832 = vpop.permute.xlu0 %1831
    %v1833 = vsel %vm243, %v1830, %v1832
    %v1834 = vsel %vm243, %v1828, %v1830
    %v1835 = vsel %vm243, %v1826, %v1828
    %v1836 = vsel %vm243, %v1832, %v1826
    %v1837 = vmul.f32 %v1835, %v251
    %v1838 = vmul.f32 %v1834, %v255
    %v1839 = vmul.f32 %v1833, %v259
    %v1840 = vmul.f32 %v1836, %v263
    %1841 = vrot.lane.b32.xlu0 %v1740, 112
    %v1842 = vpop.permute.xlu0 %1841
    %1843 = vrot.lane.b32.xlu0 %v1741, 112
    %v1844 = vpop.permute.xlu0 %1843
    %1845 = vrot.lane.b32.xlu0 %v1742, 112
    %v1846 = vpop.permute.xlu0 %1845
    %1847 = vrot.lane.b32.xlu0 %v1743, 112
    %v1848 = vpop.permute.xlu0 %1847
    %v1849 = vsel %vm276, %v1846, %v1848
    %v1850 = vsel %vm276, %v1844, %v1846
    %v1851 = vsel %vm276, %v1842, %v1844
    %v1852 = vsel %vm276, %v1848, %v1842
    %v1853 = vmul.f32 %v1851, %v284
    %v1854 = vmul.f32 %v1850, %v288
    %v1855 = vmul.f32 %v1849, %v292
    %v1856 = vmul.f32 %v1852, %v296
    %1857 = vrot.lane.b32.xlu0 %v1740, 111
    %v1858 = vpop.permute.xlu0 %1857
    %1859 = vrot.lane.b32.xlu0 %v1741, 111
    %v1860 = vpop.permute.xlu0 %1859
    %1861 = vrot.lane.b32.xlu0 %v1742, 111
    %v1862 = vpop.permute.xlu0 %1861
    %1863 = vrot.lane.b32.xlu0 %v1743, 111
    %v1864 = vpop.permute.xlu0 %1863
    %v1865 = vsel %vm309, %v1862, %v1864
    %v1866 = vsel %vm309, %v1860, %v1862
    %v1867 = vsel %vm309, %v1858, %v1860
    %v1868 = vsel %vm309, %v1864, %v1858
    %v1869 = vmul.f32 %v1867, %v317
    %v1870 = vmul.f32 %v1866, %v321
    %v1871 = vmul.f32 %v1865, %v325
    %v1872 = vmul.f32 %v1868, %v329
    %v1874 = vsel %vm334, %v1744, 0
    %v1876 = vand.u32 %v1758, 4294901760
    %1877 = vmatprep.subr.mxu0 %v1876
    %v1878 = vand.u32 %v1757, 4294901760
    %1879 = vmatpush1.msra.mxu0 %v1878
    %v1880 = vand.u32 %v1774, 4294901760
    %1881 = vmatprep.subr.mxu0 %v1880
    %v1882 = vand.u32 %v1773, 4294901760
    %1883 = vmatpush1.msra.mxu0 %v1882
    %v1884 = vand.u32 %v1790, 4294901760
    %1885 = vmatprep.subr.mxu0 %v1884
    %v1886 = vand.u32 %v1789, 4294901760
    %1887 = vmatpush1.msra.mxu0 %v1886
    %v1888 = vand.u32 %v1806, 4294901760
    %1889 = vmatprep.subr.mxu0 %v1888
    %v1890 = vand.u32 %v1805, 4294901760
    %1891 = vmatpush1.msra.mxu0 %v1890
    %v1892 = vand.u32 %v1741, 4294901760
    %1893 = vmatprep.subr.mxu0 %v1892
    %v1894 = vand.u32 %v1740, 4294901760
    %1895 = vmatpush1.msra.mxu0 %v1894
    %v1896 = vand.u32 %v1822, 4294901760
    %1897 = vmatprep.subr.mxu0 %v1896
    %v1898 = vand.u32 %v1821, 4294901760
    %1899 = vmatpush1.msra.mxu0 %v1898
    %v1900 = vand.u32 %v1838, 4294901760
    %1901 = vmatprep.subr.mxu0 %v1900
    %v1902 = vand.u32 %v1837, 4294901760
    %1903 = vmatpush1.msra.mxu0 %v1902
    %v1904 = vand.u32 %v1854, 4294901760
    %1905 = vmatprep.subr.mxu0 %v1904
    %v1906 = vand.u32 %v1853, 4294901760
    %1907 = vmatpush1.msra.mxu0 %v1906
    %v1908 = vand.u32 %v1870, 4294901760
    %1909 = vmatprep.subr.mxu0 %v1908
    %v1910 = vand.u32 %v1869, 4294901760
    %1911 = vmatpush1.msra.mxu0 %v1910
    %v1912 = vand.u32 %v340, 4294901760
    %1913 = vmatprep.subr.mxu0 %v1912
    %v1914 = vand.u32 %v340, 4294901760
    %1915 = vmatpush1.msra.mxu0 %v1914
    %1916 = vmatprep.subr.mxu0 0.0
    %1917 = vmatpush1.msra.mxu0 0.0
    %1918 = vmatprep.subr.mxu0 0.0
    %1919 = vmatpush1.msra.mxu0 0.0
    %1920 = vmatprep.subr.mxu0 0.0
    %1921 = vmatpush1.msra.mxu0 0.0
    %1922 = vmatprep.subr.mxu0 0.0
    %1923 = vmatpush1.msra.mxu0 0.0
    %1924 = vmatprep.subr.mxu0 0.0
    %1925 = vmatpush1.msra.mxu0 0.0
    %1926 = vmatprep.subr.mxu0 0.0
    %1927 = vmatpush1.msra.mxu0 0.0
    %1928 = vmatprep.subr.mxu0 0.0
    %1929 = vmatpush1.msra.mxu0 0.0
    %1930 = vmatprep.subr.mxu0 0.0
    %1931 = vmatpush1.msra.mxu0 0.0
    %1932 = vmatprep.subr.mxu0 0.0
    %1933 = vmatpush1.msra.mxu0 0.0
    %1934 = vmatprep.subr.mxu0 0.0
    %1935 = vmatpush1.msra.mxu0 0.0
    %1936 = vmatprep.subr.mxu0 0.0
    %1937 = vmatpush1.msra.mxu0 0.0
    %1938 = vmatprep.subr.mxu0 0.0
    %1939 = vmatpush1.msra.mxu0 0.0
    %1940 = vmatprep.subr.mxu0 0.0
    %1941 = vmatpush1.msra.mxu0 0.0
    %1942 = vmatprep.subr.mxu0 0.0
    %1943 = vmatpush1.msra.mxu0 0.0
    %1944 = vmatprep.subr.mxu0 0.0
    %1945 = vmatpush1.msra.mxu0 0.0
    %1946 = vmatprep.subr.mxu0 0.0
    %1947 = vmatpush1.msra.mxu0 0.0
    %1948 = vmatprep.subr.mxu0 0.0
    %1949 = vmatpush1.msra.mxu0 0.0
    %1950 = vmatprep.subr.mxu0 0.0
    %1951 = vmatpush1.msra.mxu0 0.0
    %1952 = vmatprep.subr.mxu0 0.0
    %1953 = vmatpush1.msra.mxu0 0.0
    %1954 = vmatprep.subr.mxu0 0.0
    %1955 = vmatpush1.msra.mxu0 0.0
    %1956 = vmatprep.subr.mxu0 0.0
    %1957 = vmatpush1.msra.mxu0 0.0
    %1958 = vmatprep.subr.mxu0 0.0
    %1959 = vmatpush1.msra.mxu0 0.0
    %1960 = vmatprep.mubr.f32.mxu0 0.0
    %v1961 = vand.u32 %v1874, 4294901760
    %v1962 = vsub.f32 %v1874, %v1961
    %v1963 = vand.u32 %v1962, 4294901760
    %v1964 = vsub.f32 %v1962, %v1963
    %v1965 = vand.u32 %v1964, 4294901760
    %1966 = vmatmul.mubr.f32.gmra.mrb[0].mxu0 %v1965
    %v1967 = vpop.f32.mrb[0].mxu0
    %v1968 = vadd.f32 %v55, %v1967
    %v1969 = vpop.f32.mrb[0].mxu0
    %v1970 = vadd.f32 %v56, %v1969
    %1971 = vdwg.mxu0
    %v1972 = vand.u32 %v1758, 4294901760
    %v1973 = vsub.f32 %v1758, %v1972
    %v1974 = vand.u32 %v1973, 4294901760
    %v1975 = vsub.f32 %v1973, %v1974
    %v1976 = vand.u32 %v1975, 4294901760
    %1977 = vmatprep.subr.mxu0 %v1976
    %v1978 = vand.u32 %v1757, 4294901760
    %v1979 = vsub.f32 %v1757, %v1978
    %v1980 = vand.u32 %v1979, 4294901760
    %v1981 = vsub.f32 %v1979, %v1980
    %v1982 = vand.u32 %v1981, 4294901760
    %1983 = vmatpush1.msra.mxu0 %v1982
    %v1984 = vand.u32 %v1774, 4294901760
    %v1985 = vsub.f32 %v1774, %v1984
    %v1986 = vand.u32 %v1985, 4294901760
    %v1987 = vsub.f32 %v1985, %v1986
    %v1988 = vand.u32 %v1987, 4294901760
    %1989 = vmatprep.subr.mxu0 %v1988
    %v1990 = vand.u32 %v1773, 4294901760
    %v1991 = vsub.f32 %v1773, %v1990
    %v1992 = vand.u32 %v1991, 4294901760
    %v1993 = vsub.f32 %v1991, %v1992
    %v1994 = vand.u32 %v1993, 4294901760
    %1995 = vmatpush1.msra.mxu0 %v1994
    %v1996 = vand.u32 %v1790, 4294901760
    %v1997 = vsub.f32 %v1790, %v1996
    %v1998 = vand.u32 %v1997, 4294901760
    %v1999 = vsub.f32 %v1997, %v1998
    %v2000 = vand.u32 %v1999, 4294901760
    %2001 = vmatprep.subr.mxu0 %v2000
    %v2002 = vand.u32 %v1789, 4294901760
    %v2003 = vsub.f32 %v1789, %v2002
    %v2004 = vand.u32 %v2003, 4294901760
    %v2005 = vsub.f32 %v2003, %v2004
    %v2006 = vand.u32 %v2005, 4294901760
    %2007 = vmatpush1.msra.mxu0 %v2006
    %v2008 = vand.u32 %v1806, 4294901760
    %v2009 = vsub.f32 %v1806, %v2008
    %v2010 = vand.u32 %v2009, 4294901760
    %v2011 = vsub.f32 %v2009, %v2010
    %v2012 = vand.u32 %v2011, 4294901760
    %2013 = vmatprep.subr.mxu0 %v2012
    %v2014 = vand.u32 %v1805, 4294901760
    %v2015 = vsub.f32 %v1805, %v2014
    %v2016 = vand.u32 %v2015, 4294901760
    %v2017 = vsub.f32 %v2015, %v2016
    %v2018 = vand.u32 %v2017, 4294901760
    %2019 = vmatpush1.msra.mxu0 %v2018
    %v2020 = vand.u32 %v1741, 4294901760
    %v2021 = vsub.f32 %v1741, %v2020
    %v2022 = vand.u32 %v2021, 4294901760
    %v2023 = vsub.f32 %v2021, %v2022
    %v2024 = vand.u32 %v2023, 4294901760
    %2025 = vmatprep.subr.mxu0 %v2024
    %v2026 = vand.u32 %v1740, 4294901760
    %v2027 = vsub.f32 %v1740, %v2026
    %v2028 = vand.u32 %v2027, 4294901760
    %v2029 = vsub.f32 %v2027, %v2028
    %v2030 = vand.u32 %v2029, 4294901760
    %2031 = vmatpush1.msra.mxu0 %v2030
    %v2032 = vand.u32 %v1822, 4294901760
    %v2033 = vsub.f32 %v1822, %v2032
    %v2034 = vand.u32 %v2033, 4294901760
    %v2035 = vsub.f32 %v2033, %v2034
    %v2036 = vand.u32 %v2035, 4294901760
    %2037 = vmatprep.subr.mxu0 %v2036
    %v2038 = vand.u32 %v1821, 4294901760
    %v2039 = vsub.f32 %v1821, %v2038
    %v2040 = vand.u32 %v2039, 4294901760
    %v2041 = vsub.f32 %v2039, %v2040
    %v2042 = vand.u32 %v2041, 4294901760
    %2043 = vmatpush1.msra.mxu0 %v2042
    %v2044 = vand.u32 %v1838, 4294901760
    %v2045 = vsub.f32 %v1838, %v2044
    %v2046 = vand.u32 %v2045, 4294901760
    %v2047 = vsub.f32 %v2045, %v2046
    %v2048 = vand.u32 %v2047, 4294901760
    %2049 = vmatprep.subr.mxu0 %v2048
    %v2050 = vand.u32 %v1837, 4294901760
    %v2051 = vsub.f32 %v1837, %v2050
    %v2052 = vand.u32 %v2051, 4294901760
    %v2053 = vsub.f32 %v2051, %v2052
    %v2054 = vand.u32 %v2053, 4294901760
    %2055 = vmatpush1.msra.mxu0 %v2054
    %v2056 = vand.u32 %v1854, 4294901760
    %v2057 = vsub.f32 %v1854, %v2056
    %v2058 = vand.u32 %v2057, 4294901760
    %v2059 = vsub.f32 %v2057, %v2058
    %v2060 = vand.u32 %v2059, 4294901760
    %2061 = vmatprep.subr.mxu0 %v2060
    %v2062 = vand.u32 %v1853, 4294901760
    %v2063 = vsub.f32 %v1853, %v2062
    %v2064 = vand.u32 %v2063, 4294901760
    %v2065 = vsub.f32 %v2063, %v2064
    %v2066 = vand.u32 %v2065, 4294901760
    %2067 = vmatpush1.msra.mxu0 %v2066
    %v2068 = vand.u32 %v1870, 4294901760
    %v2069 = vsub.f32 %v1870, %v2068
    %v2070 = vand.u32 %v2069, 4294901760
    %v2071 = vsub.f32 %v2069, %v2070
    %v2072 = vand.u32 %v2071, 4294901760
    %2073 = vmatprep.subr.mxu0 %v2072
    %v2074 = vand.u32 %v1869, 4294901760
    %v2075 = vsub.f32 %v1869, %v2074
    %v2076 = vand.u32 %v2075, 4294901760
    %v2077 = vsub.f32 %v2075, %v2076
    %v2078 = vand.u32 %v2077, 4294901760
    %2079 = vmatpush1.msra.mxu0 %v2078
    %v2080 = vand.u32 %v340, 4294901760
    %v2081 = vsub.f32 %v340, %v2080
    %v2082 = vand.u32 %v2081, 4294901760
    %v2083 = vsub.f32 %v2081, %v2082
    %v2084 = vand.u32 %v2083, 4294901760
    %2085 = vmatprep.subr.mxu0 %v2084
    %v2086 = vand.u32 %v340, 4294901760
    %v2087 = vsub.f32 %v340, %v2086
    %v2088 = vand.u32 %v2087, 4294901760
    %v2089 = vsub.f32 %v2087, %v2088
    %v2090 = vand.u32 %v2089, 4294901760
    %2091 = vmatpush1.msra.mxu0 %v2090
    %2092 = vmatprep.subr.mxu0 0.0
    %2093 = vmatpush1.msra.mxu0 0.0
    %2094 = vmatprep.subr.mxu0 0.0
    %2095 = vmatpush1.msra.mxu0 0.0
    %2096 = vmatprep.subr.mxu0 0.0
    %2097 = vmatpush1.msra.mxu0 0.0
    %2098 = vmatprep.subr.mxu0 0.0
    %2099 = vmatpush1.msra.mxu0 0.0
    %2100 = vmatprep.subr.mxu0 0.0
    %2101 = vmatpush1.msra.mxu0 0.0
    %2102 = vmatprep.subr.mxu0 0.0
    %2103 = vmatpush1.msra.mxu0 0.0
    %2104 = vmatprep.subr.mxu0 0.0
    %2105 = vmatpush1.msra.mxu0 0.0
    %2106 = vmatprep.subr.mxu0 0.0
    %2107 = vmatpush1.msra.mxu0 0.0
    %2108 = vmatprep.subr.mxu0 0.0
    %2109 = vmatpush1.msra.mxu0 0.0
    %2110 = vmatprep.subr.mxu0 0.0
    %2111 = vmatpush1.msra.mxu0 0.0
    %2112 = vmatprep.subr.mxu0 0.0
    %2113 = vmatpush1.msra.mxu0 0.0
    %2114 = vmatprep.subr.mxu0 0.0
    %2115 = vmatpush1.msra.mxu0 0.0
    %2116 = vmatprep.subr.mxu0 0.0
    %2117 = vmatpush1.msra.mxu0 0.0
    %2118 = vmatprep.subr.mxu0 0.0
    %2119 = vmatpush1.msra.mxu0 0.0
    %2120 = vmatprep.subr.mxu0 0.0
    %2121 = vmatpush1.msra.mxu0 0.0
    %2122 = vmatprep.subr.mxu0 0.0
    %2123 = vmatpush1.msra.mxu0 0.0
    %2124 = vmatprep.subr.mxu0 0.0
    %2125 = vmatpush1.msra.mxu0 0.0
    %2126 = vmatprep.subr.mxu0 0.0
    %2127 = vmatpush1.msra.mxu0 0.0
    %2128 = vmatprep.subr.mxu0 0.0
    %2129 = vmatpush1.msra.mxu0 0.0
    %2130 = vmatprep.subr.mxu0 0.0
    %2131 = vmatpush1.msra.mxu0 0.0
    %2132 = vmatprep.subr.mxu0 0.0
    %2133 = vmatpush1.msra.mxu0 0.0
    %2134 = vmatprep.subr.mxu0 0.0
    %2135 = vmatpush1.msra.mxu0 0.0
    %2136 = vmatprep.mubr.f32.mxu0 0.0
    %v2137 = vand.u32 %v1874, 4294901760
    %2138 = vmatmul.mubr.f32.gmra.mrb[0].mxu0 %v2137
    %v2139 = vpop.f32.mrb[0].mxu0
    %v2140 = vadd.f32 %v1968, %v2139
    %v2141 = vpop.f32.mrb[0].mxu0
    %v2142 = vadd.f32 %v1970, %v2141
    %2143 = vdwg.mxu0
    %v2144 = vand.u32 %v1758, 4294901760
    %v2145 = vsub.f32 %v1758, %v2144
    %2146 = vmatprep.subr.mxu0 %v2145
    %v2147 = vand.u32 %v1757, 4294901760
    %v2148 = vsub.f32 %v1757, %v2147
    %2149 = vmatpush1.msra.mxu0 %v2148
    %v2150 = vand.u32 %v1774, 4294901760
    %v2151 = vsub.f32 %v1774, %v2150
    %2152 = vmatprep.subr.mxu0 %v2151
    %v2153 = vand.u32 %v1773, 4294901760
    %v2154 = vsub.f32 %v1773, %v2153
    %2155 = vmatpush1.msra.mxu0 %v2154
    %v2156 = vand.u32 %v1790, 4294901760
    %v2157 = vsub.f32 %v1790, %v2156
    %2158 = vmatprep.subr.mxu0 %v2157
    %v2159 = vand.u32 %v1789, 4294901760
    %v2160 = vsub.f32 %v1789, %v2159
    %2161 = vmatpush1.msra.mxu0 %v2160
    %v2162 = vand.u32 %v1806, 4294901760
    %v2163 = vsub.f32 %v1806, %v2162
    %2164 = vmatprep.subr.mxu0 %v2163
    %v2165 = vand.u32 %v1805, 4294901760
    %v2166 = vsub.f32 %v1805, %v2165
    %2167 = vmatpush1.msra.mxu0 %v2166
    %v2168 = vand.u32 %v1741, 4294901760
    %v2169 = vsub.f32 %v1741, %v2168
    %2170 = vmatprep.subr.mxu0 %v2169
    %v2171 = vand.u32 %v1740, 4294901760
    %v2172 = vsub.f32 %v1740, %v2171
    %2173 = vmatpush1.msra.mxu0 %v2172
    %v2174 = vand.u32 %v1822, 4294901760
    %v2175 = vsub.f32 %v1822, %v2174
    %2176 = vmatprep.subr.mxu0 %v2175
    %v2177 = vand.u32 %v1821, 4294901760
    %v2178 = vsub.f32 %v1821, %v2177
    %2179 = vmatpush1.msra.mxu0 %v2178
    %v2180 = vand.u32 %v1838, 4294901760
    %v2181 = vsub.f32 %v1838, %v2180
    %2182 = vmatprep.subr.mxu0 %v2181
    %v2183 = vand.u32 %v1837, 4294901760
    %v2184 = vsub.f32 %v1837, %v2183
    %2185 = vmatpush1.msra.mxu0 %v2184
    %v2186 = vand.u32 %v1854, 4294901760
    %v2187 = vsub.f32 %v1854, %v2186
    %2188 = vmatprep.subr.mxu0 %v2187
    %v2189 = vand.u32 %v1853, 4294901760
    %v2190 = vsub.f32 %v1853, %v2189
    %2191 = vmatpush1.msra.mxu0 %v2190
    %v2192 = vand.u32 %v1870, 4294901760
    %v2193 = vsub.f32 %v1870, %v2192
    %2194 = vmatprep.subr.mxu0 %v2193
    %v2195 = vand.u32 %v1869, 4294901760
    %v2196 = vsub.f32 %v1869, %v2195
    %2197 = vmatpush1.msra.mxu0 %v2196
    %v2198 = vand.u32 %v340, 4294901760
    %v2199 = vsub.f32 %v340, %v2198
    %2200 = vmatprep.subr.mxu0 %v2199
    %v2201 = vand.u32 %v340, 4294901760
    %v2202 = vsub.f32 %v340, %v2201
    %2203 = vmatpush1.msra.mxu0 %v2202
    %2204 = vmatprep.subr.mxu0 0.0
    %2205 = vmatpush1.msra.mxu0 0.0
    %2206 = vmatprep.subr.mxu0 0.0
    %2207 = vmatpush1.msra.mxu0 0.0
    %2208 = vmatprep.subr.mxu0 0.0
    %2209 = vmatpush1.msra.mxu0 0.0
    %2210 = vmatprep.subr.mxu0 0.0
    %2211 = vmatpush1.msra.mxu0 0.0
    %2212 = vmatprep.subr.mxu0 0.0
    %2213 = vmatpush1.msra.mxu0 0.0
    %2214 = vmatprep.subr.mxu0 0.0
    %2215 = vmatpush1.msra.mxu0 0.0
    %2216 = vmatprep.subr.mxu0 0.0
    %2217 = vmatpush1.msra.mxu0 0.0
    %2218 = vmatprep.subr.mxu0 0.0
    %2219 = vmatpush1.msra.mxu0 0.0
    %2220 = vmatprep.subr.mxu0 0.0
    %2221 = vmatpush1.msra.mxu0 0.0
    %2222 = vmatprep.subr.mxu0 0.0
    %2223 = vmatpush1.msra.mxu0 0.0
    %2224 = vmatprep.subr.mxu0 0.0
    %2225 = vmatpush1.msra.mxu0 0.0
    %2226 = vmatprep.subr.mxu0 0.0
    %2227 = vmatpush1.msra.mxu0 0.0
    %2228 = vmatprep.subr.mxu0 0.0
    %2229 = vmatpush1.msra.mxu0 0.0
    %2230 = vmatprep.subr.mxu0 0.0
    %2231 = vmatpush1.msra.mxu0 0.0
    %2232 = vmatprep.subr.mxu0 0.0
    %2233 = vmatpush1.msra.mxu0 0.0
    %2234 = vmatprep.subr.mxu0 0.0
    %2235 = vmatpush1.msra.mxu0 0.0
    %2236 = vmatprep.subr.mxu0 0.0
    %2237 = vmatpush1.msra.mxu0 0.0
    %2238 = vmatprep.subr.mxu0 0.0
    %2239 = vmatpush1.msra.mxu0 0.0
    %2240 = vmatprep.subr.mxu0 0.0
    %2241 = vmatpush1.msra.mxu0 0.0
    %2242 = vmatprep.subr.mxu0 0.0
    %2243 = vmatpush1.msra.mxu0 0.0
    %2244 = vmatprep.subr.mxu0 0.0
    %2245 = vmatpush1.msra.mxu0 0.0
    %2246 = vmatprep.subr.mxu0 0.0
    %2247 = vmatpush1.msra.mxu0 0.0
    %2248 = vmatprep.mubr.f32.mxu0 0.0
    %v2249 = vand.u32 %v1874, 4294901760
    %v2250 = vsub.f32 %v1874, %v2249
    %2251 = vmatmul.mubr.f32.gmra.mrb[0].mxu0 %v2250
    %v2252 = vpop.f32.mrb[0].mxu0
    %v2253 = vadd.f32 %v2140, %v2252
    %v2254 = vpop.f32.mrb[0].mxu0
    %v2255 = vadd.f32 %v2142, %v2254
    %2256 = vdwg.mxu0
    %v2257 = vand.u32 %v1758, 4294901760
    %2258 = vmatprep.subr.mxu0 %v2257
    %v2259 = vand.u32 %v1757, 4294901760
    %2260 = vmatpush1.msra.mxu0 %v2259
    %v2261 = vand.u32 %v1774, 4294901760
    %2262 = vmatprep.subr.mxu0 %v2261
    %v2263 = vand.u32 %v1773, 4294901760
    %2264 = vmatpush1.msra.mxu0 %v2263
    %v2265 = vand.u32 %v1790, 4294901760
    %2266 = vmatprep.subr.mxu0 %v2265
    %v2267 = vand.u32 %v1789, 4294901760
    %2268 = vmatpush1.msra.mxu0 %v2267
    %v2269 = vand.u32 %v1806, 4294901760
    %2270 = vmatprep.subr.mxu0 %v2269
    %v2271 = vand.u32 %v1805, 4294901760
    %2272 = vmatpush1.msra.mxu0 %v2271
    %v2273 = vand.u32 %v1741, 4294901760
    %2274 = vmatprep.subr.mxu0 %v2273
    %v2275 = vand.u32 %v1740, 4294901760
    %2276 = vmatpush1.msra.mxu0 %v2275
    %v2277 = vand.u32 %v1822, 4294901760
    %2278 = vmatprep.subr.mxu0 %v2277
    %v2279 = vand.u32 %v1821, 4294901760
    %2280 = vmatpush1.msra.mxu0 %v2279
    %v2281 = vand.u32 %v1838, 4294901760
    %2282 = vmatprep.subr.mxu0 %v2281
    %v2283 = vand.u32 %v1837, 4294901760
    %2284 = vmatpush1.msra.mxu0 %v2283
    %v2285 = vand.u32 %v1854, 4294901760
    %2286 = vmatprep.subr.mxu0 %v2285
    %v2287 = vand.u32 %v1853, 4294901760
    %2288 = vmatpush1.msra.mxu0 %v2287
    %v2289 = vand.u32 %v1870, 4294901760
    %2290 = vmatprep.subr.mxu0 %v2289
    %v2291 = vand.u32 %v1869, 4294901760
    %2292 = vmatpush1.msra.mxu0 %v2291
    %v2293 = vand.u32 %v340, 4294901760
    %2294 = vmatprep.subr.mxu0 %v2293
    %v2295 = vand.u32 %v340, 4294901760
    %2296 = vmatpush1.msra.mxu0 %v2295
    %2297 = vmatprep.subr.mxu0 0.0
    %2298 = vmatpush1.msra.mxu0 0.0
    %2299 = vmatprep.subr.mxu0 0.0
    %2300 = vmatpush1.msra.mxu0 0.0
    %2301 = vmatprep.subr.mxu0 0.0
    %2302 = vmatpush1.msra.mxu0 0.0
    %2303 = vmatprep.subr.mxu0 0.0
    %2304 = vmatpush1.msra.mxu0 0.0
    %2305 = vmatprep.subr.mxu0 0.0
    %2306 = vmatpush1.msra.mxu0 0.0
    %2307 = vmatprep.subr.mxu0 0.0
    %2308 = vmatpush1.msra.mxu0 0.0
    %2309 = vmatprep.subr.mxu0 0.0
    %2310 = vmatpush1.msra.mxu0 0.0
    %2311 = vmatprep.subr.mxu0 0.0
    %2312 = vmatpush1.msra.mxu0 0.0
    %2313 = vmatprep.subr.mxu0 0.0
    %2314 = vmatpush1.msra.mxu0 0.0
    %2315 = vmatprep.subr.mxu0 0.0
    %2316 = vmatpush1.msra.mxu0 0.0
    %2317 = vmatprep.subr.mxu0 0.0
    %2318 = vmatpush1.msra.mxu0 0.0
    %2319 = vmatprep.subr.mxu0 0.0
    %2320 = vmatpush1.msra.mxu0 0.0
    %2321 = vmatprep.subr.mxu0 0.0
    %2322 = vmatpush1.msra.mxu0 0.0
    %2323 = vmatprep.subr.mxu0 0.0
    %2324 = vmatpush1.msra.mxu0 0.0
    %2325 = vmatprep.subr.mxu0 0.0
    %2326 = vmatpush1.msra.mxu0 0.0
    %2327 = vmatprep.subr.mxu0 0.0
    %2328 = vmatpush1.msra.mxu0 0.0
    %2329 = vmatprep.subr.mxu0 0.0
    %2330 = vmatpush1.msra.mxu0 0.0
    %2331 = vmatprep.subr.mxu0 0.0
    %2332 = vmatpush1.msra.mxu0 0.0
    %2333 = vmatprep.subr.mxu0 0.0
    %2334 = vmatpush1.msra.mxu0 0.0
    %2335 = vmatprep.subr.mxu0 0.0
    %2336 = vmatpush1.msra.mxu0 0.0
    %2337 = vmatprep.subr.mxu0 0.0
    %2338 = vmatpush1.msra.mxu0 0.0
    %2339 = vmatprep.subr.mxu0 0.0
    %2340 = vmatpush1.msra.mxu0 0.0
    %2341 = vmatprep.mubr.f32.mxu0 0.0
    %v2342 = vand.u32 %v1874, 4294901760
    %v2343 = vsub.f32 %v1874, %v2342
    %v2344 = vand.u32 %v2343, 4294901760
    %2345 = vmatmul.mubr.f32.gmra.mrb[0].mxu0 %v2344
    %v2346 = vpop.f32.mrb[0].mxu0
    %v2347 = vadd.f32 %v2253, %v2346
    %v2348 = vpop.f32.mrb[0].mxu0
    %v2349 = vadd.f32 %v2255, %v2348
    %2350 = vdwg.mxu0
    %v2351 = vand.u32 %v1758, 4294901760
    %v2352 = vsub.f32 %v1758, %v2351
    %v2353 = vand.u32 %v2352, 4294901760
    %2354 = vmatprep.subr.mxu0 %v2353
    %v2355 = vand.u32 %v1757, 4294901760
    %v2356 = vsub.f32 %v1757, %v2355
    %v2357 = vand.u32 %v2356, 4294901760
    %2358 = vmatpush1.msra.mxu0 %v2357
    %v2359 = vand.u32 %v1774, 4294901760
    %v2360 = vsub.f32 %v1774, %v2359
    %v2361 = vand.u32 %v2360, 4294901760
    %2362 = vmatprep.subr.mxu0 %v2361
    %v2363 = vand.u32 %v1773, 4294901760
    %v2364 = vsub.f32 %v1773, %v2363
    %v2365 = vand.u32 %v2364, 4294901760
    %2366 = vmatpush1.msra.mxu0 %v2365
    %v2367 = vand.u32 %v1790, 4294901760
    %v2368 = vsub.f32 %v1790, %v2367
    %v2369 = vand.u32 %v2368, 4294901760
    %2370 = vmatprep.subr.mxu0 %v2369
    %v2371 = vand.u32 %v1789, 4294901760
    %v2372 = vsub.f32 %v1789, %v2371
    %v2373 = vand.u32 %v2372, 4294901760
    %2374 = vmatpush1.msra.mxu0 %v2373
    %v2375 = vand.u32 %v1806, 4294901760
    %v2376 = vsub.f32 %v1806, %v2375
    %v2377 = vand.u32 %v2376, 4294901760
    %2378 = vmatprep.subr.mxu0 %v2377
    %v2379 = vand.u32 %v1805, 4294901760
    %v2380 = vsub.f32 %v1805, %v2379
    %v2381 = vand.u32 %v2380, 4294901760
    %2382 = vmatpush1.msra.mxu0 %v2381
    %v2383 = vand.u32 %v1741, 4294901760
    %v2384 = vsub.f32 %v1741, %v2383
    %v2385 = vand.u32 %v2384, 4294901760
    %2386 = vmatprep.subr.mxu0 %v2385
    %v2387 = vand.u32 %v1740, 4294901760
    %v2388 = vsub.f32 %v1740, %v2387
    %v2389 = vand.u32 %v2388, 4294901760
    %2390 = vmatpush1.msra.mxu0 %v2389
    %v2391 = vand.u32 %v1822, 4294901760
    %v2392 = vsub.f32 %v1822, %v2391
    %v2393 = vand.u32 %v2392, 4294901760
    %2394 = vmatprep.subr.mxu0 %v2393
    %v2395 = vand.u32 %v1821, 4294901760
    %v2396 = vsub.f32 %v1821, %v2395
    %v2397 = vand.u32 %v2396, 4294901760
    %2398 = vmatpush1.msra.mxu0 %v2397
    %v2399 = vand.u32 %v1838, 4294901760
    %v2400 = vsub.f32 %v1838, %v2399
    %v2401 = vand.u32 %v2400, 4294901760
    %2402 = vmatprep.subr.mxu0 %v2401
    %v2403 = vand.u32 %v1837, 4294901760
    %v2404 = vsub.f32 %v1837, %v2403
    %v2405 = vand.u32 %v2404, 4294901760
    %2406 = vmatpush1.msra.mxu0 %v2405
    %v2407 = vand.u32 %v1854, 4294901760
    %v2408 = vsub.f32 %v1854, %v2407
    %v2409 = vand.u32 %v2408, 4294901760
    %2410 = vmatprep.subr.mxu0 %v2409
    %v2411 = vand.u32 %v1853, 4294901760
    %v2412 = vsub.f32 %v1853, %v2411
    %v2413 = vand.u32 %v2412, 4294901760
    %2414 = vmatpush1.msra.mxu0 %v2413
    %v2415 = vand.u32 %v1870, 4294901760
    %v2416 = vsub.f32 %v1870, %v2415
    %v2417 = vand.u32 %v2416, 4294901760
    %2418 = vmatprep.subr.mxu0 %v2417
    %v2419 = vand.u32 %v1869, 4294901760
    %v2420 = vsub.f32 %v1869, %v2419
    %v2421 = vand.u32 %v2420, 4294901760
    %2422 = vmatpush1.msra.mxu0 %v2421
    %v2423 = vand.u32 %v340, 4294901760
    %v2424 = vsub.f32 %v340, %v2423
    %v2425 = vand.u32 %v2424, 4294901760
    %2426 = vmatprep.subr.mxu0 %v2425
    %v2427 = vand.u32 %v340, 4294901760
    %v2428 = vsub.f32 %v340, %v2427
    %v2429 = vand.u32 %v2428, 4294901760
    %2430 = vmatpush1.msra.mxu0 %v2429
    %2431 = vmatprep.subr.mxu0 0.0
    %2432 = vmatpush1.msra.mxu0 0.0
    %2433 = vmatprep.subr.mxu0 0.0
    %2434 = vmatpush1.msra.mxu0 0.0
    %2435 = vmatprep.subr.mxu0 0.0
    %2436 = vmatpush1.msra.mxu0 0.0
    %2437 = vmatprep.subr.mxu0 0.0
    %2438 = vmatpush1.msra.mxu0 0.0
    %2439 = vmatprep.subr.mxu0 0.0
    %2440 = vmatpush1.msra.mxu0 0.0
    %2441 = vmatprep.subr.mxu0 0.0
    %2442 = vmatpush1.msra.mxu0 0.0
    %2443 = vmatprep.subr.mxu0 0.0
    %2444 = vmatpush1.msra.mxu0 0.0
    %2445 = vmatprep.subr.mxu0 0.0
    %2446 = vmatpush1.msra.mxu0 0.0
    %2447 = vmatprep.subr.mxu0 0.0
    %2448 = vmatpush1.msra.mxu0 0.0
    %2449 = vmatprep.subr.mxu0 0.0
    %2450 = vmatpush1.msra.mxu0 0.0
    %2451 = vmatprep.subr.mxu0 0.0
    %2452 = vmatpush1.msra.mxu0 0.0
    %2453 = vmatprep.subr.mxu0 0.0
    %2454 = vmatpush1.msra.mxu0 0.0
    %2455 = vmatprep.subr.mxu0 0.0
    %2456 = vmatpush1.msra.mxu0 0.0
    %2457 = vmatprep.subr.mxu0 0.0
    %2458 = vmatpush1.msra.mxu0 0.0
    %2459 = vmatprep.subr.mxu0 0.0
    %2460 = vmatpush1.msra.mxu0 0.0
    %2461 = vmatprep.subr.mxu0 0.0
    %2462 = vmatpush1.msra.mxu0 0.0
    %2463 = vmatprep.subr.mxu0 0.0
    %2464 = vmatpush1.msra.mxu0 0.0
    %2465 = vmatprep.subr.mxu0 0.0
    %2466 = vmatpush1.msra.mxu0 0.0
    %2467 = vmatprep.subr.mxu0 0.0
    %2468 = vmatpush1.msra.mxu0 0.0
    %2469 = vmatprep.subr.mxu0 0.0
    %2470 = vmatpush1.msra.mxu0 0.0
    %2471 = vmatprep.subr.mxu0 0.0
    %2472 = vmatpush1.msra.mxu0 0.0
    %2473 = vmatprep.subr.mxu0 0.0
    %2474 = vmatpush1.msra.mxu0 0.0
    %2475 = vmatprep.mubr.f32.mxu0 0.0
    %v2476 = vand.u32 %v1874, 4294901760
    %2477 = vmatmul.mubr.f32.gmra.mrb[0].mxu0 %v2476
    %v2478 = vpop.f32.mrb[0].mxu0
    %v2479 = vadd.f32 %v2347, %v2478
    %v2480 = vpop.f32.mrb[0].mxu0
    %v2481 = vadd.f32 %v2349, %v2480
    %2482 = vdwg.mxu0
    %v2483 = vand.u32 %v1758, 4294901760
    %2484 = vmatprep.subr.mxu0 %v2483
    %v2485 = vand.u32 %v1757, 4294901760
    %2486 = vmatpush1.msra.mxu0 %v2485
    %v2487 = vand.u32 %v1774, 4294901760
    %2488 = vmatprep.subr.mxu0 %v2487
    %v2489 = vand.u32 %v1773, 4294901760
    %2490 = vmatpush1.msra.mxu0 %v2489
    %v2491 = vand.u32 %v1790, 4294901760
    %2492 = vmatprep.subr.mxu0 %v2491
    %v2493 = vand.u32 %v1789, 4294901760
    %2494 = vmatpush1.msra.mxu0 %v2493
    %v2495 = vand.u32 %v1806, 4294901760
    %2496 = vmatprep.subr.mxu0 %v2495
    %v2497 = vand.u32 %v1805, 4294901760
    %2498 = vmatpush1.msra.mxu0 %v2497
    %v2499 = vand.u32 %v1741, 4294901760
    %2500 = vmatprep.subr.mxu0 %v2499
    %v2501 = vand.u32 %v1740, 4294901760
    %2502 = vmatpush1.msra.mxu0 %v2501
    %v2503 = vand.u32 %v1822, 4294901760
    %2504 = vmatprep.subr.mxu0 %v2503
    %v2505 = vand.u32 %v1821, 4294901760
    %2506 = vmatpush1.msra.mxu0 %v2505
    %v2507 = vand.u32 %v1838, 4294901760
    %2508 = vmatprep.subr.mxu0 %v2507
    %v2509 = vand.u32 %v1837, 4294901760
    %2510 = vmatpush1.msra.mxu0 %v2509
    %v2511 = vand.u32 %v1854, 4294901760
    %2512 = vmatprep.subr.mxu0 %v2511
    %v2513 = vand.u32 %v1853, 4294901760
    %2514 = vmatpush1.msra.mxu0 %v2513
    %v2515 = vand.u32 %v1870, 4294901760
    %2516 = vmatprep.subr.mxu0 %v2515
    %v2517 = vand.u32 %v1869, 4294901760
    %2518 = vmatpush1.msra.mxu0 %v2517
    %v2519 = vand.u32 %v340, 4294901760
    %2520 = vmatprep.subr.mxu0 %v2519
    %v2521 = vand.u32 %v340, 4294901760
    %2522 = vmatpush1.msra.mxu0 %v2521
    %2523 = vmatprep.subr.mxu0 0.0
    %2524 = vmatpush1.msra.mxu0 0.0
    %2525 = vmatprep.subr.mxu0 0.0
    %2526 = vmatpush1.msra.mxu0 0.0
    %2527 = vmatprep.subr.mxu0 0.0
    %2528 = vmatpush1.msra.mxu0 0.0
    %2529 = vmatprep.subr.mxu0 0.0
    %2530 = vmatpush1.msra.mxu0 0.0
    %2531 = vmatprep.subr.mxu0 0.0
    %2532 = vmatpush1.msra.mxu0 0.0
    %2533 = vmatprep.subr.mxu0 0.0
    %2534 = vmatpush1.msra.mxu0 0.0
    %2535 = vmatprep.subr.mxu0 0.0
    %2536 = vmatpush1.msra.mxu0 0.0
    %2537 = vmatprep.subr.mxu0 0.0
    %2538 = vmatpush1.msra.mxu0 0.0
    %2539 = vmatprep.subr.mxu0 0.0
    %2540 = vmatpush1.msra.mxu0 0.0
    %2541 = vmatprep.subr.mxu0 0.0
    %2542 = vmatpush1.msra.mxu0 0.0
    %2543 = vmatprep.subr.mxu0 0.0
    %2544 = vmatpush1.msra.mxu0 0.0
    %2545 = vmatprep.subr.mxu0 0.0
    %2546 = vmatpush1.msra.mxu0 0.0
    %2547 = vmatprep.subr.mxu0 0.0
    %2548 = vmatpush1.msra.mxu0 0.0
    %2549 = vmatprep.subr.mxu0 0.0
    %2550 = vmatpush1.msra.mxu0 0.0
    %2551 = vmatprep.subr.mxu0 0.0
    %2552 = vmatpush1.msra.mxu0 0.0
    %2553 = vmatprep.subr.mxu0 0.0
    %2554 = vmatpush1.msra.mxu0 0.0
    %2555 = vmatprep.subr.mxu0 0.0
    %2556 = vmatpush1.msra.mxu0 0.0
    %2557 = vmatprep.subr.mxu0 0.0
    %2558 = vmatpush1.msra.mxu0 0.0
    %2559 = vmatprep.subr.mxu0 0.0
    %2560 = vmatpush1.msra.mxu0 0.0
    %2561 = vmatprep.subr.mxu0 0.0
    %2562 = vmatpush1.msra.mxu0 0.0
    %2563 = vmatprep.subr.mxu0 0.0
    %2564 = vmatpush1.msra.mxu0 0.0
    %2565 = vmatprep.subr.mxu0 0.0
    %2566 = vmatpush1.msra.mxu0 0.0
    %2567 = vmatprep.mubr.f32.mxu0 0.0
    %v2568 = vand.u32 %v1874, 4294901760
    %2569 = vmatmul.mubr.f32.gmra.mrb[0].mxu0 %v2568
    %v2570 = vpop.f32.mrb[0].mxu0
    %v2571 = vadd.f32 %v2479, %v2570
    %v2572 = vpop.f32.mrb[0].mxu0
    %v2573 = vadd.f32 %v2481, %v2572
    %2574 = vdwg.mxu0
    %v2575 = vand.u32 %v1760, 4294901760
    %2576 = vmatprep.subr.mxu0 %v2575
    %v2577 = vand.u32 %v1759, 4294901760
    %2578 = vmatpush1.msra.mxu0 %v2577
    %v2579 = vand.u32 %v1776, 4294901760
    %2580 = vmatprep.subr.mxu0 %v2579
    %v2581 = vand.u32 %v1775, 4294901760
    %2582 = vmatpush1.msra.mxu0 %v2581
    %v2583 = vand.u32 %v1792, 4294901760
    %2584 = vmatprep.subr.mxu0 %v2583
    %v2585 = vand.u32 %v1791, 4294901760
    %2586 = vmatpush1.msra.mxu0 %v2585
    %v2587 = vand.u32 %v1808, 4294901760
    %2588 = vmatprep.subr.mxu0 %v2587
    %v2589 = vand.u32 %v1807, 4294901760
    %2590 = vmatpush1.msra.mxu0 %v2589
    %v2591 = vand.u32 %v1743, 4294901760
    %2592 = vmatprep.subr.mxu0 %v2591
    %v2593 = vand.u32 %v1742, 4294901760
    %2594 = vmatpush1.msra.mxu0 %v2593
    %v2595 = vand.u32 %v1824, 4294901760
    %2596 = vmatprep.subr.mxu0 %v2595
    %v2597 = vand.u32 %v1823, 4294901760
    %2598 = vmatpush1.msra.mxu0 %v2597
    %v2599 = vand.u32 %v1840, 4294901760
    %2600 = vmatprep.subr.mxu0 %v2599
    %v2601 = vand.u32 %v1839, 4294901760
    %2602 = vmatpush1.msra.mxu0 %v2601
    %v2603 = vand.u32 %v1856, 4294901760
    %2604 = vmatprep.subr.mxu0 %v2603
    %v2605 = vand.u32 %v1855, 4294901760
    %2606 = vmatpush1.msra.mxu0 %v2605
    %v2607 = vand.u32 %v1872, 4294901760
    %2608 = vmatprep.subr.mxu0 %v2607
    %v2609 = vand.u32 %v1871, 4294901760
    %2610 = vmatpush1.msra.mxu0 %v2609
    %v2611 = vand.u32 %v340, 4294901760
    %2612 = vmatprep.subr.mxu0 %v2611
    %v2613 = vand.u32 %v340, 4294901760
    %2614 = vmatpush1.msra.mxu0 %v2613
    %2615 = vmatprep.subr.mxu0 0.0
    %2616 = vmatpush1.msra.mxu0 0.0
    %2617 = vmatprep.subr.mxu0 0.0
    %2618 = vmatpush1.msra.mxu0 0.0
    %2619 = vmatprep.subr.mxu0 0.0
    %2620 = vmatpush1.msra.mxu0 0.0
    %2621 = vmatprep.subr.mxu0 0.0
    %2622 = vmatpush1.msra.mxu0 0.0
    %2623 = vmatprep.subr.mxu0 0.0
    %2624 = vmatpush1.msra.mxu0 0.0
    %2625 = vmatprep.subr.mxu0 0.0
    %2626 = vmatpush1.msra.mxu0 0.0
    %2627 = vmatprep.subr.mxu0 0.0
    %2628 = vmatpush1.msra.mxu0 0.0
    %2629 = vmatprep.subr.mxu0 0.0
    %2630 = vmatpush1.msra.mxu0 0.0
    %2631 = vmatprep.subr.mxu0 0.0
    %2632 = vmatpush1.msra.mxu0 0.0
    %2633 = vmatprep.subr.mxu0 0.0
    %2634 = vmatpush1.msra.mxu0 0.0
    %2635 = vmatprep.subr.mxu0 0.0
    %2636 = vmatpush1.msra.mxu0 0.0
    %2637 = vmatprep.subr.mxu0 0.0
    %2638 = vmatpush1.msra.mxu0 0.0
    %2639 = vmatprep.subr.mxu0 0.0
    %2640 = vmatpush1.msra.mxu0 0.0
    %2641 = vmatprep.subr.mxu0 0.0
    %2642 = vmatpush1.msra.mxu0 0.0
    %2643 = vmatprep.subr.mxu0 0.0
    %2644 = vmatpush1.msra.mxu0 0.0
    %2645 = vmatprep.subr.mxu0 0.0
    %2646 = vmatpush1.msra.mxu0 0.0
    %2647 = vmatprep.subr.mxu0 0.0
    %2648 = vmatpush1.msra.mxu0 0.0
    %2649 = vmatprep.subr.mxu0 0.0
    %2650 = vmatpush1.msra.mxu0 0.0
    %2651 = vmatprep.subr.mxu0 0.0
    %2652 = vmatpush1.msra.mxu0 0.0
    %2653 = vmatprep.subr.mxu0 0.0
    %2654 = vmatpush1.msra.mxu0 0.0
    %2655 = vmatprep.subr.mxu0 0.0
    %2656 = vmatpush1.msra.mxu0 0.0
    %2657 = vmatprep.subr.mxu0 0.0
    %2658 = vmatpush1.msra.mxu0 0.0
    %2659 = vmatprep.mubr.f32.mxu0 0.0
    %v2660 = vand.u32 %v1874, 4294901760
    %v2661 = vsub.f32 %v1874, %v2660
    %v2662 = vand.u32 %v2661, 4294901760
    %v2663 = vsub.f32 %v2661, %v2662
    %v2664 = vand.u32 %v2663, 4294901760
    %2665 = vmatmul.mubr.f32.gmra.mrb[0].mxu0 %v2664
    %v2666 = vpop.f32.mrb[0].mxu0
    %v2667 = vadd.f32 %v57, %v2666
    %v2668 = vpop.f32.mrb[0].mxu0
    %v2669 = vadd.f32 %v58, %v2668
    %2670 = vdwg.mxu0
    %v2671 = vand.u32 %v1760, 4294901760
    %v2672 = vsub.f32 %v1760, %v2671
    %v2673 = vand.u32 %v2672, 4294901760
    %v2674 = vsub.f32 %v2672, %v2673
    %v2675 = vand.u32 %v2674, 4294901760
    %2676 = vmatprep.subr.mxu0 %v2675
    %v2677 = vand.u32 %v1759, 4294901760
    %v2678 = vsub.f32 %v1759, %v2677
    %v2679 = vand.u32 %v2678, 4294901760
    %v2680 = vsub.f32 %v2678, %v2679
    %v2681 = vand.u32 %v2680, 4294901760
    %2682 = vmatpush1.msra.mxu0 %v2681
    %v2683 = vand.u32 %v1776, 4294901760
    %v2684 = vsub.f32 %v1776, %v2683
    %v2685 = vand.u32 %v2684, 4294901760
    %v2686 = vsub.f32 %v2684, %v2685
    %v2687 = vand.u32 %v2686, 4294901760
    %2688 = vmatprep.subr.mxu0 %v2687
    %v2689 = vand.u32 %v1775, 4294901760
    %v2690 = vsub.f32 %v1775, %v2689
    %v2691 = vand.u32 %v2690, 4294901760
    %v2692 = vsub.f32 %v2690, %v2691
    %v2693 = vand.u32 %v2692, 4294901760
    %2694 = vmatpush1.msra.mxu0 %v2693
    %v2695 = vand.u32 %v1792, 4294901760
    %v2696 = vsub.f32 %v1792, %v2695
    %v2697 = vand.u32 %v2696, 4294901760
    %v2698 = vsub.f32 %v2696, %v2697
    %v2699 = vand.u32 %v2698, 4294901760
    %2700 = vmatprep.subr.mxu0 %v2699
    %v2701 = vand.u32 %v1791, 4294901760
    %v2702 = vsub.f32 %v1791, %v2701
    %v2703 = vand.u32 %v2702, 4294901760
    %v2704 = vsub.f32 %v2702, %v2703
    %v2705 = vand.u32 %v2704, 4294901760
    %2706 = vmatpush1.msra.mxu0 %v2705
    %v2707 = vand.u32 %v1808, 4294901760
    %v2708 = vsub.f32 %v1808, %v2707
    %v2709 = vand.u32 %v2708, 4294901760
    %v2710 = vsub.f32 %v2708, %v2709
    %v2711 = vand.u32 %v2710, 4294901760
    %2712 = vmatprep.subr.mxu0 %v2711
    %v2713 = vand.u32 %v1807, 4294901760
    %v2714 = vsub.f32 %v1807, %v2713
    %v2715 = vand.u32 %v2714, 4294901760
    %v2716 = vsub.f32 %v2714, %v2715
    %v2717 = vand.u32 %v2716, 4294901760
    %2718 = vmatpush1.msra.mxu0 %v2717
    %v2719 = vand.u32 %v1743, 4294901760
    %v2720 = vsub.f32 %v1743, %v2719
    %v2721 = vand.u32 %v2720, 4294901760
    %v2722 = vsub.f32 %v2720, %v2721
    %v2723 = vand.u32 %v2722, 4294901760
    %2724 = vmatprep.subr.mxu0 %v2723
    %v2725 = vand.u32 %v1742, 4294901760
    %v2726 = vsub.f32 %v1742, %v2725
    %v2727 = vand.u32 %v2726, 4294901760
    %v2728 = vsub.f32 %v2726, %v2727
    %v2729 = vand.u32 %v2728, 4294901760
    %2730 = vmatpush1.msra.mxu0 %v2729
    %v2731 = vand.u32 %v1824, 4294901760
    %v2732 = vsub.f32 %v1824, %v2731
    %v2733 = vand.u32 %v2732, 4294901760
    %v2734 = vsub.f32 %v2732, %v2733
    %v2735 = vand.u32 %v2734, 4294901760
    %2736 = vmatprep.subr.mxu0 %v2735
    %v2737 = vand.u32 %v1823, 4294901760
    %v2738 = vsub.f32 %v1823, %v2737
    %v2739 = vand.u32 %v2738, 4294901760
    %v2740 = vsub.f32 %v2738, %v2739
    %v2741 = vand.u32 %v2740, 4294901760
    %2742 = vmatpush1.msra.mxu0 %v2741
    %v2743 = vand.u32 %v1840, 4294901760
    %v2744 = vsub.f32 %v1840, %v2743
    %v2745 = vand.u32 %v2744, 4294901760
    %v2746 = vsub.f32 %v2744, %v2745
    %v2747 = vand.u32 %v2746, 4294901760
    %2748 = vmatprep.subr.mxu0 %v2747
    %v2749 = vand.u32 %v1839, 4294901760
    %v2750 = vsub.f32 %v1839, %v2749
    %v2751 = vand.u32 %v2750, 4294901760
    %v2752 = vsub.f32 %v2750, %v2751
    %v2753 = vand.u32 %v2752, 4294901760
    %2754 = vmatpush1.msra.mxu0 %v2753
    %v2755 = vand.u32 %v1856, 4294901760
    %v2756 = vsub.f32 %v1856, %v2755
    %v2757 = vand.u32 %v2756, 4294901760
    %v2758 = vsub.f32 %v2756, %v2757
    %v2759 = vand.u32 %v2758, 4294901760
    %2760 = vmatprep.subr.mxu0 %v2759
    %v2761 = vand.u32 %v1855, 4294901760
    %v2762 = vsub.f32 %v1855, %v2761
    %v2763 = vand.u32 %v2762, 4294901760
    %v2764 = vsub.f32 %v2762, %v2763
    %v2765 = vand.u32 %v2764, 4294901760
    %2766 = vmatpush1.msra.mxu0 %v2765
    %v2767 = vand.u32 %v1872, 4294901760
    %v2768 = vsub.f32 %v1872, %v2767
    %v2769 = vand.u32 %v2768, 4294901760
    %v2770 = vsub.f32 %v2768, %v2769
    %v2771 = vand.u32 %v2770, 4294901760
    %2772 = vmatprep.subr.mxu0 %v2771
    %v2773 = vand.u32 %v1871, 4294901760
    %v2774 = vsub.f32 %v1871, %v2773
    %v2775 = vand.u32 %v2774, 4294901760
    %v2776 = vsub.f32 %v2774, %v2775
    %v2777 = vand.u32 %v2776, 4294901760
    %2778 = vmatpush1.msra.mxu0 %v2777
    %v2779 = vand.u32 %v340, 4294901760
    %v2780 = vsub.f32 %v340, %v2779
    %v2781 = vand.u32 %v2780, 4294901760
    %v2782 = vsub.f32 %v2780, %v2781
    %v2783 = vand.u32 %v2782, 4294901760
    %2784 = vmatprep.subr.mxu0 %v2783
    %v2785 = vand.u32 %v340, 4294901760
    %v2786 = vsub.f32 %v340, %v2785
    %v2787 = vand.u32 %v2786, 4294901760
    %v2788 = vsub.f32 %v2786, %v2787
    %v2789 = vand.u32 %v2788, 4294901760
    %2790 = vmatpush1.msra.mxu0 %v2789
    %2791 = vmatprep.subr.mxu0 0.0
    %2792 = vmatpush1.msra.mxu0 0.0
    %2793 = vmatprep.subr.mxu0 0.0
    %2794 = vmatpush1.msra.mxu0 0.0
    %2795 = vmatprep.subr.mxu0 0.0
    %2796 = vmatpush1.msra.mxu0 0.0
    %2797 = vmatprep.subr.mxu0 0.0
    %2798 = vmatpush1.msra.mxu0 0.0
    %2799 = vmatprep.subr.mxu0 0.0
    %2800 = vmatpush1.msra.mxu0 0.0
    %2801 = vmatprep.subr.mxu0 0.0
    %2802 = vmatpush1.msra.mxu0 0.0
    %2803 = vmatprep.subr.mxu0 0.0
    %2804 = vmatpush1.msra.mxu0 0.0
    %2805 = vmatprep.subr.mxu0 0.0
    %2806 = vmatpush1.msra.mxu0 0.0
    %2807 = vmatprep.subr.mxu0 0.0
    %2808 = vmatpush1.msra.mxu0 0.0
    %2809 = vmatprep.subr.mxu0 0.0
    %2810 = vmatpush1.msra.mxu0 0.0
    %2811 = vmatprep.subr.mxu0 0.0
    %2812 = vmatpush1.msra.mxu0 0.0
    %2813 = vmatprep.subr.mxu0 0.0
    %2814 = vmatpush1.msra.mxu0 0.0
    %2815 = vmatprep.subr.mxu0 0.0
    %2816 = vmatpush1.msra.mxu0 0.0
    %2817 = vmatprep.subr.mxu0 0.0
    %2818 = vmatpush1.msra.mxu0 0.0
    %2819 = vmatprep.subr.mxu0 0.0
    %2820 = vmatpush1.msra.mxu0 0.0
    %2821 = vmatprep.subr.mxu0 0.0
    %2822 = vmatpush1.msra.mxu0 0.0
    %2823 = vmatprep.subr.mxu0 0.0
    %2824 = vmatpush1.msra.mxu0 0.0
    %2825 = vmatprep.subr.mxu0 0.0
    %2826 = vmatpush1.msra.mxu0 0.0
    %2827 = vmatprep.subr.mxu0 0.0
    %2828 = vmatpush1.msra.mxu0 0.0
    %2829 = vmatprep.subr.mxu0 0.0
    %2830 = vmatpush1.msra.mxu0 0.0
    %2831 = vmatprep.subr.mxu0 0.0
    %2832 = vmatpush1.msra.mxu0 0.0
    %2833 = vmatprep.subr.mxu0 0.0
    %2834 = vmatpush1.msra.mxu0 0.0
    %2835 = vmatprep.mubr.f32.mxu0 0.0
    %v2836 = vand.u32 %v1874, 4294901760
    %2837 = vmatmul.mubr.f32.gmra.mrb[0].mxu0 %v2836
    %v2838 = vpop.f32.mrb[0].mxu0
    %v2839 = vadd.f32 %v2667, %v2838
    %v2840 = vpop.f32.mrb[0].mxu0
    %v2841 = vadd.f32 %v2669, %v2840
    %2842 = vdwg.mxu0
    %v2843 = vand.u32 %v1760, 4294901760
    %v2844 = vsub.f32 %v1760, %v2843
    %2845 = vmatprep.subr.mxu0 %v2844
    %v2846 = vand.u32 %v1759, 4294901760
    %v2847 = vsub.f32 %v1759, %v2846
    %2848 = vmatpush1.msra.mxu0 %v2847
    %v2849 = vand.u32 %v1776, 4294901760
    %v2850 = vsub.f32 %v1776, %v2849
    %2851 = vmatprep.subr.mxu0 %v2850
    %v2852 = vand.u32 %v1775, 4294901760
    %v2853 = vsub.f32 %v1775, %v2852
    %2854 = vmatpush1.msra.mxu0 %v2853
    %v2855 = vand.u32 %v1792, 4294901760
    %v2856 = vsub.f32 %v1792, %v2855
    %2857 = vmatprep.subr.mxu0 %v2856
    %v2858 = vand.u32 %v1791, 4294901760
    %v2859 = vsub.f32 %v1791, %v2858
    %2860 = vmatpush1.msra.mxu0 %v2859
    %v2861 = vand.u32 %v1808, 4294901760
    %v2862 = vsub.f32 %v1808, %v2861
    %2863 = vmatprep.subr.mxu0 %v2862
    %v2864 = vand.u32 %v1807, 4294901760
    %v2865 = vsub.f32 %v1807, %v2864
    %2866 = vmatpush1.msra.mxu0 %v2865
    %v2867 = vand.u32 %v1743, 4294901760
    %v2868 = vsub.f32 %v1743, %v2867
    %2869 = vmatprep.subr.mxu0 %v2868
    %v2870 = vand.u32 %v1742, 4294901760
    %v2871 = vsub.f32 %v1742, %v2870
    %2872 = vmatpush1.msra.mxu0 %v2871
    %v2873 = vand.u32 %v1824, 4294901760
    %v2874 = vsub.f32 %v1824, %v2873
    %2875 = vmatprep.subr.mxu0 %v2874
    %v2876 = vand.u32 %v1823, 4294901760
    %v2877 = vsub.f32 %v1823, %v2876
    %2878 = vmatpush1.msra.mxu0 %v2877
    %v2879 = vand.u32 %v1840, 4294901760
    %v2880 = vsub.f32 %v1840, %v2879
    %2881 = vmatprep.subr.mxu0 %v2880
    %v2882 = vand.u32 %v1839, 4294901760
    %v2883 = vsub.f32 %v1839, %v2882
    %2884 = vmatpush1.msra.mxu0 %v2883
    %v2885 = vand.u32 %v1856, 4294901760
    %v2886 = vsub.f32 %v1856, %v2885
    %2887 = vmatprep.subr.mxu0 %v2886
    %v2888 = vand.u32 %v1855, 4294901760
    %v2889 = vsub.f32 %v1855, %v2888
    %2890 = vmatpush1.msra.mxu0 %v2889
    %v2891 = vand.u32 %v1872, 4294901760
    %v2892 = vsub.f32 %v1872, %v2891
    %2893 = vmatprep.subr.mxu0 %v2892
    %v2894 = vand.u32 %v1871, 4294901760
    %v2895 = vsub.f32 %v1871, %v2894
    %2896 = vmatpush1.msra.mxu0 %v2895
    %v2897 = vand.u32 %v340, 4294901760
    %v2898 = vsub.f32 %v340, %v2897
    %2899 = vmatprep.subr.mxu0 %v2898
    %v2900 = vand.u32 %v340, 4294901760
    %v2901 = vsub.f32 %v340, %v2900
    %2902 = vmatpush1.msra.mxu0 %v2901
    %2903 = vmatprep.subr.mxu0 0.0
    %2904 = vmatpush1.msra.mxu0 0.0
    %2905 = vmatprep.subr.mxu0 0.0
    %2906 = vmatpush1.msra.mxu0 0.0
    %2907 = vmatprep.subr.mxu0 0.0
    %2908 = vmatpush1.msra.mxu0 0.0
    %2909 = vmatprep.subr.mxu0 0.0
    %2910 = vmatpush1.msra.mxu0 0.0
    %2911 = vmatprep.subr.mxu0 0.0
    %2912 = vmatpush1.msra.mxu0 0.0
    %2913 = vmatprep.subr.mxu0 0.0
    %2914 = vmatpush1.msra.mxu0 0.0
    %2915 = vmatprep.subr.mxu0 0.0
    %2916 = vmatpush1.msra.mxu0 0.0
    %2917 = vmatprep.subr.mxu0 0.0
    %2918 = vmatpush1.msra.mxu0 0.0
    %2919 = vmatprep.subr.mxu0 0.0
    %2920 = vmatpush1.msra.mxu0 0.0
    %2921 = vmatprep.subr.mxu0 0.0
    %2922 = vmatpush1.msra.mxu0 0.0
    %2923 = vmatprep.subr.mxu0 0.0
    %2924 = vmatpush1.msra.mxu0 0.0
    %2925 = vmatprep.subr.mxu0 0.0
    %2926 = vmatpush1.msra.mxu0 0.0
    %2927 = vmatprep.subr.mxu0 0.0
    %2928 = vmatpush1.msra.mxu0 0.0
    %2929 = vmatprep.subr.mxu0 0.0
    %2930 = vmatpush1.msra.mxu0 0.0
    %2931 = vmatprep.subr.mxu0 0.0
    %2932 = vmatpush1.msra.mxu0 0.0
    %2933 = vmatprep.subr.mxu0 0.0
    %2934 = vmatpush1.msra.mxu0 0.0
    %2935 = vmatprep.subr.mxu0 0.0
    %2936 = vmatpush1.msra.mxu0 0.0
    %2937 = vmatprep.subr.mxu0 0.0
    %2938 = vmatpush1.msra.mxu0 0.0
    %2939 = vmatprep.subr.mxu0 0.0
    %2940 = vmatpush1.msra.mxu0 0.0
    %2941 = vmatprep.subr.mxu0 0.0
    %2942 = vmatpush1.msra.mxu0 0.0
    %2943 = vmatprep.subr.mxu0 0.0
    %2944 = vmatpush1.msra.mxu0 0.0
    %2945 = vmatprep.subr.mxu0 0.0
    %2946 = vmatpush1.msra.mxu0 0.0
    %2947 = vmatprep.mubr.f32.mxu0 0.0
    %v2948 = vand.u32 %v1874, 4294901760
    %v2949 = vsub.f32 %v1874, %v2948
    %2950 = vmatmul.mubr.f32.gmra.mrb[0].mxu0 %v2949
    %v2951 = vpop.f32.mrb[0].mxu0
    %v2952 = vadd.f32 %v2839, %v2951
    %v2953 = vpop.f32.mrb[0].mxu0
    %v2954 = vadd.f32 %v2841, %v2953
    %2955 = vdwg.mxu0
    %v2956 = vand.u32 %v1760, 4294901760
    %2957 = vmatprep.subr.mxu0 %v2956
    %v2958 = vand.u32 %v1759, 4294901760
    %2959 = vmatpush1.msra.mxu0 %v2958
    %v2960 = vand.u32 %v1776, 4294901760
    %2961 = vmatprep.subr.mxu0 %v2960
    %v2962 = vand.u32 %v1775, 4294901760
    %2963 = vmatpush1.msra.mxu0 %v2962
    %v2964 = vand.u32 %v1792, 4294901760
    %2965 = vmatprep.subr.mxu0 %v2964
    %v2966 = vand.u32 %v1791, 4294901760
    %2967 = vmatpush1.msra.mxu0 %v2966
    %v2968 = vand.u32 %v1808, 4294901760
    %2969 = vmatprep.subr.mxu0 %v2968
    %v2970 = vand.u32 %v1807, 4294901760
    %2971 = vmatpush1.msra.mxu0 %v2970
    %v2972 = vand.u32 %v1743, 4294901760
    %2973 = vmatprep.subr.mxu0 %v2972
    %v2974 = vand.u32 %v1742, 4294901760
    %2975 = vmatpush1.msra.mxu0 %v2974
    %v2976 = vand.u32 %v1824, 4294901760
    %2977 = vmatprep.subr.mxu0 %v2976
    %v2978 = vand.u32 %v1823, 4294901760
    %2979 = vmatpush1.msra.mxu0 %v2978
    %v2980 = vand.u32 %v1840, 4294901760
    %2981 = vmatprep.subr.mxu0 %v2980
    %v2982 = vand.u32 %v1839, 4294901760
    %2983 = vmatpush1.msra.mxu0 %v2982
    %v2984 = vand.u32 %v1856, 4294901760
    %2985 = vmatprep.subr.mxu0 %v2984
    %v2986 = vand.u32 %v1855, 4294901760
    %2987 = vmatpush1.msra.mxu0 %v2986
    %v2988 = vand.u32 %v1872, 4294901760
    %2989 = vmatprep.subr.mxu0 %v2988
    %v2990 = vand.u32 %v1871, 4294901760
    %2991 = vmatpush1.msra.mxu0 %v2990
    %v2992 = vand.u32 %v340, 4294901760
    %2993 = vmatprep.subr.mxu0 %v2992
    %v2994 = vand.u32 %v340, 4294901760
    %2995 = vmatpush1.msra.mxu0 %v2994
    %2996 = vmatprep.subr.mxu0 0.0
    %2997 = vmatpush1.msra.mxu0 0.0
    %2998 = vmatprep.subr.mxu0 0.0
    %2999 = vmatpush1.msra.mxu0 0.0
    %3000 = vmatprep.subr.mxu0 0.0
    %3001 = vmatpush1.msra.mxu0 0.0
    %3002 = vmatprep.subr.mxu0 0.0
    %3003 = vmatpush1.msra.mxu0 0.0
    %3004 = vmatprep.subr.mxu0 0.0
    %3005 = vmatpush1.msra.mxu0 0.0
    %3006 = vmatprep.subr.mxu0 0.0
    %3007 = vmatpush1.msra.mxu0 0.0
    %3008 = vmatprep.subr.mxu0 0.0
    %3009 = vmatpush1.msra.mxu0 0.0
    %3010 = vmatprep.subr.mxu0 0.0
    %3011 = vmatpush1.msra.mxu0 0.0
    %3012 = vmatprep.subr.mxu0 0.0
    %3013 = vmatpush1.msra.mxu0 0.0
    %3014 = vmatprep.subr.mxu0 0.0
    %3015 = vmatpush1.msra.mxu0 0.0
    %3016 = vmatprep.subr.mxu0 0.0
    %3017 = vmatpush1.msra.mxu0 0.0
    %3018 = vmatprep.subr.mxu0 0.0
    %3019 = vmatpush1.msra.mxu0 0.0
    %3020 = vmatprep.subr.mxu0 0.0
    %3021 = vmatpush1.msra.mxu0 0.0
    %3022 = vmatprep.subr.mxu0 0.0
    %3023 = vmatpush1.msra.mxu0 0.0
    %3024 = vmatprep.subr.mxu0 0.0
    %3025 = vmatpush1.msra.mxu0 0.0
    %3026 = vmatprep.subr.mxu0 0.0
    %3027 = vmatpush1.msra.mxu0 0.0
    %3028 = vmatprep.subr.mxu0 0.0
    %3029 = vmatpush1.msra.mxu0 0.0
    %3030 = vmatprep.subr.mxu0 0.0
    %3031 = vmatpush1.msra.mxu0 0.0
    %3032 = vmatprep.subr.mxu0 0.0
    %3033 = vmatpush1.msra.mxu0 0.0
    %3034 = vmatprep.subr.mxu0 0.0
    %3035 = vmatpush1.msra.mxu0 0.0
    %3036 = vmatprep.subr.mxu0 0.0
    %3037 = vmatpush1.msra.mxu0 0.0
    %3038 = vmatprep.subr.mxu0 0.0
    %3039 = vmatpush1.msra.mxu0 0.0
    %3040 = vmatprep.mubr.f32.mxu0 0.0
    %v3041 = vand.u32 %v1874, 4294901760
    %v3042 = vsub.f32 %v1874, %v3041
    %v3043 = vand.u32 %v3042, 4294901760
    %3044 = vmatmul.mubr.f32.gmra.mrb[0].mxu0 %v3043
    %v3045 = vpop.f32.mrb[0].mxu0
    %v3046 = vadd.f32 %v2952, %v3045
    %v3047 = vpop.f32.mrb[0].mxu0
    %v3048 = vadd.f32 %v2954, %v3047
    %3049 = vdwg.mxu0
    %v3050 = vand.u32 %v1760, 4294901760
    %v3051 = vsub.f32 %v1760, %v3050
    %v3052 = vand.u32 %v3051, 4294901760
    %3053 = vmatprep.subr.mxu0 %v3052
    %v3054 = vand.u32 %v1759, 4294901760
    %v3055 = vsub.f32 %v1759, %v3054
    %v3056 = vand.u32 %v3055, 4294901760
    %3057 = vmatpush1.msra.mxu0 %v3056
    %v3058 = vand.u32 %v1776, 4294901760
    %v3059 = vsub.f32 %v1776, %v3058
    %v3060 = vand.u32 %v3059, 4294901760
    %3061 = vmatprep.subr.mxu0 %v3060
    %v3062 = vand.u32 %v1775, 4294901760
    %v3063 = vsub.f32 %v1775, %v3062
    %v3064 = vand.u32 %v3063, 4294901760
    %3065 = vmatpush1.msra.mxu0 %v3064
    %v3066 = vand.u32 %v1792, 4294901760
    %v3067 = vsub.f32 %v1792, %v3066
    %v3068 = vand.u32 %v3067, 4294901760
    %3069 = vmatprep.subr.mxu0 %v3068
    %v3070 = vand.u32 %v1791, 4294901760
    %v3071 = vsub.f32 %v1791, %v3070
    %v3072 = vand.u32 %v3071, 4294901760
    %3073 = vmatpush1.msra.mxu0 %v3072
    %v3074 = vand.u32 %v1808, 4294901760
    %v3075 = vsub.f32 %v1808, %v3074
    %v3076 = vand.u32 %v3075, 4294901760
    %3077 = vmatprep.subr.mxu0 %v3076
    %v3078 = vand.u32 %v1807, 4294901760
    %v3079 = vsub.f32 %v1807, %v3078
    %v3080 = vand.u32 %v3079, 4294901760
    %3081 = vmatpush1.msra.mxu0 %v3080
    %v3082 = vand.u32 %v1743, 4294901760
    %v3083 = vsub.f32 %v1743, %v3082
    %v3084 = vand.u32 %v3083, 4294901760
    %3085 = vmatprep.subr.mxu0 %v3084
    %v3086 = vand.u32 %v1742, 4294901760
    %v3087 = vsub.f32 %v1742, %v3086
    %v3088 = vand.u32 %v3087, 4294901760
    %3089 = vmatpush1.msra.mxu0 %v3088
    %v3090 = vand.u32 %v1824, 4294901760
    %v3091 = vsub.f32 %v1824, %v3090
    %v3092 = vand.u32 %v3091, 4294901760
    %3093 = vmatprep.subr.mxu0 %v3092
    %v3094 = vand.u32 %v1823, 4294901760
    %v3095 = vsub.f32 %v1823, %v3094
    %v3096 = vand.u32 %v3095, 4294901760
    %3097 = vmatpush1.msra.mxu0 %v3096
    %v3098 = vand.u32 %v1840, 4294901760
    %v3099 = vsub.f32 %v1840, %v3098
    %v3100 = vand.u32 %v3099, 4294901760
    %3101 = vmatprep.subr.mxu0 %v3100
    %v3102 = vand.u32 %v1839, 4294901760
    %v3103 = vsub.f32 %v1839, %v3102
    %v3104 = vand.u32 %v3103, 4294901760
    %3105 = vmatpush1.msra.mxu0 %v3104
    %v3106 = vand.u32 %v1856, 4294901760
    %v3107 = vsub.f32 %v1856, %v3106
    %v3108 = vand.u32 %v3107, 4294901760
    %3109 = vmatprep.subr.mxu0 %v3108
    %v3110 = vand.u32 %v1855, 4294901760
    %v3111 = vsub.f32 %v1855, %v3110
    %v3112 = vand.u32 %v3111, 4294901760
    %3113 = vmatpush1.msra.mxu0 %v3112
    %v3114 = vand.u32 %v1872, 4294901760
    %v3115 = vsub.f32 %v1872, %v3114
    %v3116 = vand.u32 %v3115, 4294901760
    %3117 = vmatprep.subr.mxu0 %v3116
    %v3118 = vand.u32 %v1871, 4294901760
    %v3119 = vsub.f32 %v1871, %v3118
    %v3120 = vand.u32 %v3119, 4294901760
    %3121 = vmatpush1.msra.mxu0 %v3120
    %v3122 = vand.u32 %v340, 4294901760
    %v3123 = vsub.f32 %v340, %v3122
    %v3124 = vand.u32 %v3123, 4294901760
    %3125 = vmatprep.subr.mxu0 %v3124
    %v3126 = vand.u32 %v340, 4294901760
    %v3127 = vsub.f32 %v340, %v3126
    %v3128 = vand.u32 %v3127, 4294901760
    %3129 = vmatpush1.msra.mxu0 %v3128
    %3130 = vmatprep.subr.mxu0 0.0
    %3131 = vmatpush1.msra.mxu0 0.0
    %3132 = vmatprep.subr.mxu0 0.0
    %3133 = vmatpush1.msra.mxu0 0.0
    %3134 = vmatprep.subr.mxu0 0.0
    %3135 = vmatpush1.msra.mxu0 0.0
    %3136 = vmatprep.subr.mxu0 0.0
    %3137 = vmatpush1.msra.mxu0 0.0
    %3138 = vmatprep.subr.mxu0 0.0
    %3139 = vmatpush1.msra.mxu0 0.0
    %3140 = vmatprep.subr.mxu0 0.0
    %3141 = vmatpush1.msra.mxu0 0.0
    %3142 = vmatprep.subr.mxu0 0.0
    %3143 = vmatpush1.msra.mxu0 0.0
    %3144 = vmatprep.subr.mxu0 0.0
    %3145 = vmatpush1.msra.mxu0 0.0
    %3146 = vmatprep.subr.mxu0 0.0
    %3147 = vmatpush1.msra.mxu0 0.0
    %3148 = vmatprep.subr.mxu0 0.0
    %3149 = vmatpush1.msra.mxu0 0.0
    %3150 = vmatprep.subr.mxu0 0.0
    %3151 = vmatpush1.msra.mxu0 0.0
    %3152 = vmatprep.subr.mxu0 0.0
    %3153 = vmatpush1.msra.mxu0 0.0
    %3154 = vmatprep.subr.mxu0 0.0
    %3155 = vmatpush1.msra.mxu0 0.0
    %3156 = vmatprep.subr.mxu0 0.0
    %3157 = vmatpush1.msra.mxu0 0.0
    %3158 = vmatprep.subr.mxu0 0.0
    %3159 = vmatpush1.msra.mxu0 0.0
    %3160 = vmatprep.subr.mxu0 0.0
    %3161 = vmatpush1.msra.mxu0 0.0
    %3162 = vmatprep.subr.mxu0 0.0
    %3163 = vmatpush1.msra.mxu0 0.0
    %3164 = vmatprep.subr.mxu0 0.0
    %3165 = vmatpush1.msra.mxu0 0.0
    %3166 = vmatprep.subr.mxu0 0.0
    %3167 = vmatpush1.msra.mxu0 0.0
    %3168 = vmatprep.subr.mxu0 0.0
    %3169 = vmatpush1.msra.mxu0 0.0
    %3170 = vmatprep.subr.mxu0 0.0
    %3171 = vmatpush1.msra.mxu0 0.0
    %3172 = vmatprep.subr.mxu0 0.0
    %3173 = vmatpush1.msra.mxu0 0.0
    %3174 = vmatprep.mubr.f32.mxu0 0.0
    %v3175 = vand.u32 %v1874, 4294901760
    %3176 = vmatmul.mubr.f32.gmra.mrb[0].mxu0 %v3175
    %v3177 = vpop.f32.mrb[0].mxu0
    %v3178 = vadd.f32 %v3046, %v3177
    %v3179 = vpop.f32.mrb[0].mxu0
    %v3180 = vadd.f32 %v3048, %v3179
    %3181 = vdwg.mxu0
    %v3182 = vand.u32 %v1760, 4294901760
    %3183 = vmatprep.subr.mxu0 %v3182
    %v3184 = vand.u32 %v1759, 4294901760
    %3185 = vmatpush1.msra.mxu0 %v3184
    %v3186 = vand.u32 %v1776, 4294901760
    %3187 = vmatprep.subr.mxu0 %v3186
    %v3188 = vand.u32 %v1775, 4294901760
    %3189 = vmatpush1.msra.mxu0 %v3188
    %v3190 = vand.u32 %v1792, 4294901760
    %3191 = vmatprep.subr.mxu0 %v3190
    %v3192 = vand.u32 %v1791, 4294901760
    %3193 = vmatpush1.msra.mxu0 %v3192
    %v3194 = vand.u32 %v1808, 4294901760
    %3195 = vmatprep.subr.mxu0 %v3194
    %v3196 = vand.u32 %v1807, 4294901760
    %3197 = vmatpush1.msra.mxu0 %v3196
    %v3198 = vand.u32 %v1743, 4294901760
    %3199 = vmatprep.subr.mxu0 %v3198
    %v3200 = vand.u32 %v1742, 4294901760
    %3201 = vmatpush1.msra.mxu0 %v3200
    %v3202 = vand.u32 %v1824, 4294901760
    %3203 = vmatprep.subr.mxu0 %v3202
    %v3204 = vand.u32 %v1823, 4294901760
    %3205 = vmatpush1.msra.mxu0 %v3204
    %v3206 = vand.u32 %v1840, 4294901760
    %3207 = vmatprep.subr.mxu0 %v3206
    %v3208 = vand.u32 %v1839, 4294901760
    %3209 = vmatpush1.msra.mxu0 %v3208
    %v3210 = vand.u32 %v1856, 4294901760
    %3211 = vmatprep.subr.mxu0 %v3210
    %v3212 = vand.u32 %v1855, 4294901760
    %3213 = vmatpush1.msra.mxu0 %v3212
    %v3214 = vand.u32 %v1872, 4294901760
    %3215 = vmatprep.subr.mxu0 %v3214
    %v3216 = vand.u32 %v1871, 4294901760
    %3217 = vmatpush1.msra.mxu0 %v3216
    %v3218 = vand.u32 %v340, 4294901760
    %3219 = vmatprep.subr.mxu0 %v3218
    %v3220 = vand.u32 %v340, 4294901760
    %3221 = vmatpush1.msra.mxu0 %v3220
    %3222 = vmatprep.subr.mxu0 0.0
    %3223 = vmatpush1.msra.mxu0 0.0
    %3224 = vmatprep.subr.mxu0 0.0
    %3225 = vmatpush1.msra.mxu0 0.0
    %3226 = vmatprep.subr.mxu0 0.0
    %3227 = vmatpush1.msra.mxu0 0.0
    %3228 = vmatprep.subr.mxu0 0.0
    %3229 = vmatpush1.msra.mxu0 0.0
    %3230 = vmatprep.subr.mxu0 0.0
    %3231 = vmatpush1.msra.mxu0 0.0
    %3232 = vmatprep.subr.mxu0 0.0
    %3233 = vmatpush1.msra.mxu0 0.0
    %3234 = vmatprep.subr.mxu0 0.0
    %3235 = vmatpush1.msra.mxu0 0.0
    %3236 = vmatprep.subr.mxu0 0.0
    %3237 = vmatpush1.msra.mxu0 0.0
    %3238 = vmatprep.subr.mxu0 0.0
    %3239 = vmatpush1.msra.mxu0 0.0
    %3240 = vmatprep.subr.mxu0 0.0
    %3241 = vmatpush1.msra.mxu0 0.0
    %3242 = vmatprep.subr.mxu0 0.0
    %3243 = vmatpush1.msra.mxu0 0.0
    %3244 = vmatprep.subr.mxu0 0.0
    %3245 = vmatpush1.msra.mxu0 0.0
    %3246 = vmatprep.subr.mxu0 0.0
    %3247 = vmatpush1.msra.mxu0 0.0
    %3248 = vmatprep.subr.mxu0 0.0
    %3249 = vmatpush1.msra.mxu0 0.0
    %3250 = vmatprep.subr.mxu0 0.0
    %3251 = vmatpush1.msra.mxu0 0.0
    %3252 = vmatprep.subr.mxu0 0.0
    %3253 = vmatpush1.msra.mxu0 0.0
    %3254 = vmatprep.subr.mxu0 0.0
    %3255 = vmatpush1.msra.mxu0 0.0
    %3256 = vmatprep.subr.mxu0 0.0
    %3257 = vmatpush1.msra.mxu0 0.0
    %3258 = vmatprep.subr.mxu0 0.0
    %3259 = vmatpush1.msra.mxu0 0.0
    %3260 = vmatprep.subr.mxu0 0.0
    %3261 = vmatpush1.msra.mxu0 0.0
    %3262 = vmatprep.subr.mxu0 0.0
    %3263 = vmatpush1.msra.mxu0 0.0
    %3264 = vmatprep.subr.mxu0 0.0
    %3265 = vmatpush1.msra.mxu0 0.0
    %3266 = vmatprep.mubr.f32.mxu0 0.0
    %v3267 = vand.u32 %v1874, 4294901760
    %3268 = vmatmul.mubr.f32.gmra.mrb[0].mxu0 %v3267
    %v3269 = vpop.f32.mrb[0].mxu0
    %v3270 = vadd.f32 %v3178, %v3269
    %v3271 = vpop.f32.mrb[0].mxu0
    %v3272 = vadd.f32 %v3180, %v3271
    %3273 = vdwg.mxu0
    %v3274 = vmax.f32 %v2571, 0.0
    %v3275 = vmax.f32 %v2573, 0.0
    %v3276 = vmax.f32 %v3270, 0.0
    %v3277 = vmax.f32 %v3272, 0.0
    %3278 = vst [vmem:[#allocation8] sm:$0xff] %v3274
    %3279 = vst [vmem:[#allocation8 + $0x8] sm:$0xff] %v3275
    %3280 = vst [vmem:[#allocation8 + $0x10] sm:$0xff] %v3276
    %3281 = vst [vmem:[#allocation8 + $0x18] sm:$0xff] %v3277
    // Predicated region
    $region30: #{tpu_custom_call.1} parent=1 // pred_check
      _
    $region31: #{tpu_custom_call.1} parent=1 // pred_check_branch
      %3283 = sbr.rel (0) target = $region33
    $region32: #{tpu_custom_call.1} parent=1 // pred_region
      %s3285 = ssub.s32 512, 512
      %3286 = vsyncadd [#allocation4], %s3285
      %s3288 = sshll.u32 [#allocation8], 4
      %s3289 = int_to_ptr.vmem [resolvable:$true] %s3288
      %3291 = dma.vmem_to_hbm [thread:$0]  %s3289, 512, %s4, [#allocation4]
    $region33: #{tpu_custom_call.1} parent=1 // pred_fallthru
      _
    // Predicated region
    $region34: #{tpu_custom_call.1} parent=1 // pred_check
      _
    $region35: #{tpu_custom_call.1} parent=1 // pred_check_branch
      %3293 = sbr.rel (0) target = $region37
    $region36: #{tpu_custom_call.1} parent=1 // pred_region
      %3294 = dma.done [#allocation4], 512
    $region37: #{tpu_custom_call.1} parent=1 // pred_fallthru
      _
    %3295 = vsyncpa [#allocation3], 1
    %3296 = vsyncpa [#allocation6], 1
    %3297 = vsyncpa [#allocation4], 1

</llo_original>
